<compile_context>
chip_gen: v7x
topology: tpu7x:2x2x1
jax: 0.10.0
libtpu: 0.0.40
codegen_flags: <defaults>
</compile_context>

<pallas_src>
import math

import jax
import jax.numpy as jnp
import numpy as np
from jax.experimental import pallas as pl
from jax.experimental.pallas import tpu as pltpu


# ----------------------------------------------------------------------------
# Fused Pallas kernel: LSTM (unrolled over time) + decoder MLP
# ----------------------------------------------------------------------------
def shred_kernel(x_ref, wih0_ref, whh0_ref, b0_ref, wl1_ref, b1_ref,
                 db1_ref, db2_ref, db3_ref,
                 w1_hbm, w2_hbm, w3_hbm,
                 out_ref,
                 w1_v, w2_v, w3_v, sem):
    # Kick off the decoder-weight DMAs immediately so they overlap the
    # (latency-bound) LSTM recurrence.  We wait on each one only right before
    # its matmul in the decoder epilogue.
    cp1 = pltpu.make_async_copy(w1_hbm, w1_v, sem.at[0])
    cp2 = pltpu.make_async_copy(w2_hbm, w2_v, sem.at[1])
    cp3 = pltpu.make_async_copy(w3_hbm, w3_v, sem.at[2])
    cp1.start()
    cp2.start()
    cp3.start()

    TB = x_ref.shape[0]
    Bp = out_ref.shape[0]                       # padded (sublane-aligned) batch
    T = TB // Bp
    H, fourH = whh0_ref.shape

    # Hoist the non-recurrent layer-0 input projection out of the time loop:
    # one MXU matmul over all T*Bp rows (fused LSTM bias included).
    xg = (jnp.dot(x_ref[...], wih0_ref[...],
                  preferred_element_type=jnp.float32)
          + b0_ref[...])                        # (T*Bp, 4H)

    whh0 = whh0_ref[...]                        # (H, 4H)
    wl1 = wl1_ref[...]                          # (2H, 4H)  fused [wih1; whh1]
    b1 = b1_ref[...]                            # (Bp, 4H)  pre-broadcast

    # Static lane mask selecting the "g" (cell candidate) gate block.
    lane = jax.lax.broadcasted_iota(jnp.int32, (Bp, fourH), 1)
    is_g = jnp.logical_and(lane >= 2 * H, lane < 3 * H)

    def activate(gates):
        # Two whole-vreg EUP pushes + one VPU select instead of four
        # sub-vreg transcendentals.
        return jnp.where(is_g, jnp.tanh(gates), jax.nn.sigmoid(gates))

    def combine(act, c_prev):
        i_g = act[:, 0 * H:1 * H]
        f_g = act[:, 1 * H:2 * H]
        g_g = act[:, 2 * H:3 * H]
        o_g = act[:, 3 * H:4 * H]
        c_new = f_g * c_prev + i_g * g_g
        h_new = o_g * jnp.tanh(c_new)
        return h_new, c_new

    zeros_bh = jnp.zeros((Bp, H), jnp.float32)
    h0, c0, h1, c1 = zeros_bh, zeros_bh, zeros_bh, zeros_bh

    # T is tiny and static -> fully unrolled recurrence in one invocation.
    for t in range(T):
        g0 = (xg[t * Bp:(t + 1) * Bp, :]
              + jnp.dot(h0, whh0, preferred_element_type=jnp.float32))
        h0, c0 = combine(activate(g0), c0)

        # Layer 1: single fused matmul over concat([h0, h1]).
        hcat = jnp.concatenate([h0, h1], axis=1)              # (Bp, 2H)
        g1 = jnp.dot(hcat, wl1, preferred_element_type=jnp.float32) + b1
        h1, c1 = combine(activate(g1), c1)

    # Decoder MLP (Dropout p=0 is an identity).  Wait for each weight only
    # right before it is consumed.
    cp1.wait()
    y = jnp.maximum(
        jnp.dot(h1, w1_v[...], preferred_element_type=jnp.float32)
        + db1_ref[...], 0.0)
    cp2.wait()
    y = jnp.maximum(
        jnp.dot(y, w2_v[...], preferred_element_type=jnp.float32)
        + db2_ref[...], 0.0)
    cp3.wait()
    out_ref[...] = (jnp.dot(y, w3_v[...], preferred_element_type=jnp.float32)
                    + db3_ref[...])


# ----------------------------------------------------------------------------
# One-time parameter preparation (hoisted out of the per-call hot path)
# ----------------------------------------------------------------------------
_BATCH_PAD = 8          # f32 sublane count


def _round_up(n, m=128):
    return ((n + m - 1) // m) * m


def _pad2d(a, rows, cols):
    r, c = a.shape
    return jnp.pad(a, ((0, rows - r), (0, cols - c)))


def prepare_params(params, batch_pad=_BATCH_PAD):
    """Transpose / fuse / pad the PyTorch-layout params ONCE.

    Padding is mathematically exact: padded activations stay 0 through ReLU
    and padded output lanes / batch rows are sliced off in the wrapper.
    """
    H = params["w_hh_l0"].shape[1]
    fourH = 4 * H

    prepped = {}
    # LSTM layer 0: pre-transposed to (in, out); the two biases are fused.
    prepped["wih0_t"] = params["w_ih_l0"].T                       # (D, 4H)
    prepped["whh0_t"] = params["w_hh_l0"].T                       # (H, 4H)
    prepped["b0"] = (params["b_ih_l0"]
                     + params["b_hh_l0"]).reshape(1, fourH)       # (1, 4H)
    # LSTM layer 1: the input and recurrent weights are fused vertically so the
    # per-step update is a single matmul of concat([h0, h1]).
    prepped["wl1"] = jnp.concatenate(
        [params["w_ih_l1"].T, params["w_hh_l1"].T], axis=0)       # (2H, 4H)
    prepped["b1"] = jnp.broadcast_to(
        (params["b_ih_l1"] + params["b_hh_l1"]).reshape(1, fourH),
        (batch_pad, fourH))                                       # (Bp, 4H)

    # Decoder weights: transposed to (in, out), zero-padded to lane-dense
    # (multiples of 128) widths.
    w1 = params["dec_w1"].T                                       # (H, 350)
    w2 = params["dec_w2"].T                                       # (350, 400)
    w3 = params["dec_w3"].T                                       # (400, O)
    D1, D2, O = w1.shape[1], w2.shape[1], w3.shape[1]
    D1p, D2p, Op = _round_up(D1), _round_up(D2), _round_up(O)
    prepped["w1p"] = _pad2d(w1, H, D1p)
    prepped["w2p"] = _pad2d(w2, D1p, D2p)
    prepped["w3p"] = _pad2d(w3, D2p, Op)
    prepped["db1"] = _pad2d(params["dec_b1"].reshape(1, D1), 1, D1p)
    prepped["db2"] = _pad2d(params["dec_b2"].reshape(1, D2), 1, D2p)
    prepped["db3"] = _pad2d(params["dec_b3"].reshape(1, O), 1, Op)
    prepped["output_size"] = O                                    # python int
    prepped["batch_pad"] = batch_pad                              # python int
    return prepped


# ----------------------------------------------------------------------------
# Wrapper: pad/reshape the (tiny) activation + pallas_call plumbing
# ----------------------------------------------------------------------------
def shred_forward(x, prepped):
    """x: (B, T, input_size) float32  ->  (B, output_size) float32."""
    B, T, D = x.shape
    Bp = prepped["batch_pad"]
    O = prepped["output_size"]
    H = prepped["whh0_t"].shape[0]
    D1p = prepped["w1p"].shape[1]
    D2p = prepped["w2p"].shape[1]
    Op = prepped["w3p"].shape[1]

    # Pad batch to the sublane count and flatten time-major to (T*Bp, D) so
    # the layer-0 input projection is a single matmul inside the kernel and
    # every per-timestep slice is (8,128)-tile aligned.
    xp = jnp.pad(x, ((0, Bp - B), (0, 0), (0, 0)))
    x2d = jnp.transpose(xp, (1, 0, 2)).reshape(T * Bp, D)

    vmem = pl.BlockSpec(memory_space=pltpu.MemorySpace.VMEM)
    hbm = pl.BlockSpec(memory_space=pl.ANY)     # decoder weights: manual DMA

    out_p = pl.pallas_call(
        shred_kernel,
        out_shape=jax.ShapeDtypeStruct((Bp, Op), jnp.float32),
        in_specs=[vmem] * 9 + [hbm] * 3,
        out_specs=vmem,
        scratch_shapes=[
            pltpu.VMEM((H, D1p), jnp.float32),
            pltpu.VMEM((D1p, D2p), jnp.float32),
            pltpu.VMEM((D2p, Op), jnp.float32),
            pltpu.SemaphoreType.DMA((3,)),
        ],
    )(x2d,
      prepped["wih0_t"], prepped["whh0_t"], prepped["b0"],
      prepped["wl1"], prepped["b1"],
      prepped["db1"], prepped["db2"], prepped["db3"],
      prepped["w1p"], prepped["w2p"], prepped["w3p"])

    return out_p[:B, :O]


# ----------------------------------------------------------------------------
# Pure-JAX reference (mirrors torch.nn.LSTM + decoder) for a correctness check
# ----------------------------------------------------------------------------
def shred_ref(x, p):
    B, T, D = x.shape
    H = p["w_hh_l0"].shape[1]
    h = [jnp.zeros((B, H)), jnp.zeros((B, H))]
    c = [jnp.zeros((B, H)), jnp.zeros((B, H))]
    for t in range(T):
        inp = x[:, t, :]
        for l in range(2):
            wih, whh = p[f"w_ih_l{l}"], p[f"w_hh_l{l}"]
            b = p[f"b_ih_l{l}"] + p[f"b_hh_l{l}"]
            gates = inp @ wih.T + h[l] @ whh.T + b
            i_g, f_g, g_g, o_g = jnp.split(gates, 4, axis=-1)
            i_g, f_g, o_g = map(jax.nn.sigmoid, (i_g, f_g, o_g))
            g_g = jnp.tanh(g_g)
            c[l] = f_g * c[l] + i_g * g_g
            h[l] = o_g * jnp.tanh(c[l])
            inp = h[l]
    y = jnp.maximum(h[1] @ p["dec_w1"].T + p["dec_b1"], 0.0)
    y = jnp.maximum(y @ p["dec_w2"].T + p["dec_b2"], 0.0)
    return y @ p["dec_w3"].T + p["dec_b3"]


# ----------------------------------------------------------------------------
# Deterministic parameter init (PyTorch-like uniform(-1/sqrt(fan), 1/sqrt(fan)))
# ----------------------------------------------------------------------------
def init_params(key, input_size, hidden_size, decoder_sizes, output_size):
    H = hidden_size
    sizes = [hidden_size] + list(decoder_sizes) + [output_size]
    p = {}
    k_lstm = 1.0 / math.sqrt(H)
    names = [("w_ih_l0", (4 * H, input_size)), ("w_hh_l0", (4 * H, H)),
             ("b_ih_l0", (4 * H,)), ("b_hh_l0", (4 * H,)),
             ("w_ih_l1", (4 * H, H)), ("w_hh_l1", (4 * H, H)),
             ("b_ih_l1", (4 * H,)), ("b_hh_l1", (4 * H,))]
    for name, shape in names:
        key, sub = jax.random.split(key)
        p[name] = jax.random.uniform(sub, shape, jnp.float32, -k_lstm, k_lstm)
    for i in range(3):
        fan_in, fan_out = sizes[i], sizes[i + 1]
        k = 1.0 / math.sqrt(fan_in)
        key, sub = jax.random.split(key)
        p[f"dec_w{i+1}"] = jax.random.uniform(sub, (fan_out, fan_in),
                                              jnp.float32, -k, k)
        key, sub = jax.random.split(key)
        p[f"dec_b{i+1}"] = jax.random.uniform(sub, (fan_out,),
                                              jnp.float32, -k, k)
    return p


if __name__ == "__main__":
    B, T = 2, 8              # batch, sequence length (lags)
    input_size = 4           # number of sensors
    hidden_size = 32
    decoder_sizes = [350, 400]
    output_size = 64         # full-order variable dimension

    key = jax.random.PRNGKey(0)
    key, kx = jax.random.split(key)
    x = jax.random.normal(kx, (B, T, input_size), dtype=jnp.float32)
    params = init_params(key, input_size, hidden_size, decoder_sizes,
                         output_size)

    # One-time weight preparation (hoisted out of the per-call hot path).
    prepped = prepare_params(params)
    prepped = {k: (jax.block_until_ready(v) if isinstance(v, jax.Array) else v)
               for k, v in prepped.items()}

    out = shred_forward(x, prepped)
    out = jax.block_until_ready(out)

    ref = shred_ref(x, params)
    np.testing.assert_allclose(np.asarray(out), np.asarray(ref),
                               rtol=1e-3, atol=1e-3)
    assert out.shape == (B, output_size)

    print("KERNEL_OK")
</pallas_src>

<mosaic_0001>
module attributes {stable_mosaic.version = 11 : i64} {
  func.func @shred_kernel(%arg0: memref<64x4xf32, #tpu.memory_space<vmem>>, %arg1: memref<4x128xf32, #tpu.memory_space<vmem>>, %arg2: memref<32x128xf32, #tpu.memory_space<vmem>>, %arg3: memref<1x128xf32, #tpu.memory_space<vmem>>, %arg4: memref<64x128xf32, #tpu.memory_space<vmem>>, %arg5: memref<8x128xf32, #tpu.memory_space<vmem>>, %arg6: memref<1x384xf32, #tpu.memory_space<vmem>>, %arg7: memref<1x512xf32, #tpu.memory_space<vmem>>, %arg8: memref<1x128xf32, #tpu.memory_space<vmem>>, %arg9: memref<32x384xf32, #tpu.memory_space<any>>, %arg10: memref<384x512xf32, #tpu.memory_space<any>>, %arg11: memref<512x128xf32, #tpu.memory_space<any>>, %arg12: memref<8x128xf32, #tpu.memory_space<vmem>>, %arg13: memref<32x384xf32, #tpu.memory_space<vmem>>, %arg14: memref<384x512xf32, #tpu.memory_space<vmem>>, %arg15: memref<512x128xf32, #tpu.memory_space<vmem>>, %arg16: memref<3x!tpu.dma_semaphore, #tpu.memory_space<semaphore_mem>>) attributes {dimension_semantics = [], scalar_prefetch = 0 : i64, scratch_operands = 4 : i64, tpu.core_type = #tpu.core_type<tc>} {
    %c0_i32 = arith.constant 0 : i32
    %0 = tpu.memref_slice %arg16[%c0_i32] : memref<3x!tpu.dma_semaphore, #tpu.memory_space<semaphore_mem>> -> memref<1x!tpu.dma_semaphore, #tpu.memory_space<semaphore_mem>>
    %1 = tpu.memref_squeeze %0 : memref<1x!tpu.dma_semaphore, #tpu.memory_space<semaphore_mem>> -> memref<!tpu.dma_semaphore, #tpu.memory_space<semaphore_mem>>
    tpu.enqueue_dma source(%arg9 : memref<32x384xf32, #tpu.memory_space<any>>) target(%arg13 : memref<32x384xf32, #tpu.memory_space<vmem>>) target_semaphore(%1 : memref<!tpu.dma_semaphore, #tpu.memory_space<semaphore_mem>>)
    %c1_i32 = arith.constant 1 : i32
    %2 = tpu.memref_slice %arg16[%c1_i32] : memref<3x!tpu.dma_semaphore, #tpu.memory_space<semaphore_mem>> -> memref<1x!tpu.dma_semaphore, #tpu.memory_space<semaphore_mem>>
    %3 = tpu.memref_squeeze %2 : memref<1x!tpu.dma_semaphore, #tpu.memory_space<semaphore_mem>> -> memref<!tpu.dma_semaphore, #tpu.memory_space<semaphore_mem>>
    tpu.enqueue_dma source(%arg10 : memref<384x512xf32, #tpu.memory_space<any>>) target(%arg14 : memref<384x512xf32, #tpu.memory_space<vmem>>) target_semaphore(%3 : memref<!tpu.dma_semaphore, #tpu.memory_space<semaphore_mem>>)
    %c2_i32 = arith.constant 2 : i32
    %4 = tpu.memref_slice %arg16[%c2_i32] : memref<3x!tpu.dma_semaphore, #tpu.memory_space<semaphore_mem>> -> memref<1x!tpu.dma_semaphore, #tpu.memory_space<semaphore_mem>>
    %5 = tpu.memref_squeeze %4 : memref<1x!tpu.dma_semaphore, #tpu.memory_space<semaphore_mem>> -> memref<!tpu.dma_semaphore, #tpu.memory_space<semaphore_mem>>
    tpu.enqueue_dma source(%arg11 : memref<512x128xf32, #tpu.memory_space<any>>) target(%arg15 : memref<512x128xf32, #tpu.memory_space<vmem>>) target_semaphore(%5 : memref<!tpu.dma_semaphore, #tpu.memory_space<semaphore_mem>>)
    %c0 = arith.constant 0 : index
    %c0_0 = arith.constant 0 : index
    %6 = vector.load %arg0[%c0, %c0_0] : memref<64x4xf32, #tpu.memory_space<vmem>>, vector<64x4xf32>
    %c0_1 = arith.constant 0 : index
    %c0_2 = arith.constant 0 : index
    %7 = vector.load %arg1[%c0_1, %c0_2] : memref<4x128xf32, #tpu.memory_space<vmem>>, vector<4x128xf32>
    %cst = arith.constant dense<0.000000e+00> : vector<64x128xf32>
    %8 = tpu.matmul %6, %7, %cst {dimension_numbers = #tpu.dot_dimension_numbers<[1], [0], [0], [1], [0, 0, 1, 1], [], []>} : vector<64x4xf32>, vector<4x128xf32>, vector<64x128xf32> -> vector<64x128xf32>
    %c0_3 = arith.constant 0 : index
    %c0_4 = arith.constant 0 : index
    %9 = vector.load %arg3[%c0_3, %c0_4] : memref<1x128xf32, #tpu.memory_space<vmem>>, vector<1x128xf32>
    %10 = vector.broadcast %9 : vector<1x128xf32> to vector<64x128xf32>
    %11 = arith.addf %8, %10 : vector<64x128xf32>
    %c0_5 = arith.constant 0 : index
    %c0_6 = arith.constant 0 : index
    %12 = vector.load %arg2[%c0_5, %c0_6] : memref<32x128xf32, #tpu.memory_space<vmem>>, vector<32x128xf32>
    %c0_7 = arith.constant 0 : index
    %c0_8 = arith.constant 0 : index
    %13 = vector.load %arg4[%c0_7, %c0_8] : memref<64x128xf32, #tpu.memory_space<vmem>>, vector<64x128xf32>
    %c0_9 = arith.constant 0 : index
    %c0_10 = arith.constant 0 : index
    %14 = vector.load %arg5[%c0_9, %c0_10] : memref<8x128xf32, #tpu.memory_space<vmem>>, vector<8x128xf32>
    %15 = tpu.iota {dimensions = array<i32: 1>} : vector<8x128xi32>
    %c64_i32 = arith.constant 64 : i32
    %16 = vector.broadcast %c64_i32 : i32 to vector<8x128xi32>
    %17 = arith.cmpi sge, %15, %16 : vector<8x128xi32>
    %c96_i32 = arith.constant 96 : i32
    %18 = vector.broadcast %c96_i32 : i32 to vector<8x128xi32>
    %19 = arith.cmpi slt, %15, %18 : vector<8x128xi32>
    %20 = arith.andi %17, %19 : vector<8x128xi1>
    %cst_11 = arith.constant 0.000000e+00 : f32
    %21 = vector.broadcast %cst_11 : f32 to vector<8x32xf32>
    %22 = vector.extract_strided_slice %11 {offsets = [0, 0], sizes = [8, 128], strides = [1, 1]} : vector<64x128xf32> to vector<8x128xf32>
    %cst_12 = arith.constant dense<0.000000e+00> : vector<8x128xf32>
    %23 = tpu.matmul %21, %12, %cst_12 {dimension_numbers = #tpu.dot_dimension_numbers<[1], [0], [0], [1], [0, 0, 1, 1], [], []>} : vector<8x32xf32>, vector<32x128xf32>, vector<8x128xf32> -> vector<8x128xf32>
    %24 = arith.addf %22, %23 : vector<8x128xf32>
    %25 = math.tanh %24 : vector<8x128xf32>
    %26 = arith.negf %24 : vector<8x128xf32>
    %27 = math.exp %26 : vector<8x128xf32>
    %cst_13 = arith.constant 1.000000e+00 : f32
    %28 = vector.broadcast %cst_13 : f32 to vector<8x128xf32>
    %29 = arith.addf %28, %27 : vector<8x128xf32>
    %30 = arith.divf %28, %29 : vector<8x128xf32>
    %31 = arith.select %20, %25, %30 : vector<8x128xi1>, vector<8x128xf32>
    %32 = vector.extract_strided_slice %31 {offsets = [0, 0], sizes = [8, 32], strides = [1, 1]} : vector<8x128xf32> to vector<8x32xf32>
    %33 = vector.extract_strided_slice %31 {offsets = [0, 32], sizes = [8, 32], strides = [1, 1]} : vector<8x128xf32> to vector<8x32xf32>
    %34 = vector.extract_strided_slice %31 {offsets = [0, 64], sizes = [8, 32], strides = [1, 1]} : vector<8x128xf32> to vector<8x32xf32>
    %35 = vector.extract_strided_slice %31 {offsets = [0, 96], sizes = [8, 32], strides = [1, 1]} : vector<8x128xf32> to vector<8x32xf32>
    %36 = arith.mulf %33, %21 : vector<8x32xf32>
    %37 = arith.mulf %32, %34 : vector<8x32xf32>
    %38 = arith.addf %36, %37 : vector<8x32xf32>
    %39 = math.tanh %38 : vector<8x32xf32>
    %40 = arith.mulf %35, %39 : vector<8x32xf32>
    %41 = tpu.concatenate %40, %21 in 1 : vector<8x32xf32>, vector<8x32xf32> -> vector<8x64xf32>
    %cst_14 = arith.constant dense<0.000000e+00> : vector<8x128xf32>
    %42 = tpu.matmul %41, %13, %cst_14 {dimension_numbers = #tpu.dot_dimension_numbers<[1], [0], [0], [1], [0, 0, 1, 1], [], []>} : vector<8x64xf32>, vector<64x128xf32>, vector<8x128xf32> -> vector<8x128xf32>
    %43 = arith.addf %42, %14 : vector<8x128xf32>
    %44 = math.tanh %43 : vector<8x128xf32>
    %45 = arith.negf %43 : vector<8x128xf32>
    %46 = math.exp %45 : vector<8x128xf32>
    %cst_15 = arith.constant 1.000000e+00 : f32
    %47 = vector.broadcast %cst_15 : f32 to vector<8x128xf32>
    %48 = arith.addf %47, %46 : vector<8x128xf32>
    %49 = arith.divf %47, %48 : vector<8x128xf32>
    %50 = arith.select %20, %44, %49 : vector<8x128xi1>, vector<8x128xf32>
    %51 = vector.extract_strided_slice %50 {offsets = [0, 0], sizes = [8, 32], strides = [1, 1]} : vector<8x128xf32> to vector<8x32xf32>
    %52 = vector.extract_strided_slice %50 {offsets = [0, 32], sizes = [8, 32], strides = [1, 1]} : vector<8x128xf32> to vector<8x32xf32>
    %53 = vector.extract_strided_slice %50 {offsets = [0, 64], sizes = [8, 32], strides = [1, 1]} : vector<8x128xf32> to vector<8x32xf32>
    %54 = vector.extract_strided_slice %50 {offsets = [0, 96], sizes = [8, 32], strides = [1, 1]} : vector<8x128xf32> to vector<8x32xf32>
    %55 = arith.mulf %52, %21 : vector<8x32xf32>
    %56 = arith.mulf %51, %53 : vector<8x32xf32>
    %57 = arith.addf %55, %56 : vector<8x32xf32>
    %58 = math.tanh %57 : vector<8x32xf32>
    %59 = arith.mulf %54, %58 : vector<8x32xf32>
    %60 = vector.extract_strided_slice %11 {offsets = [8, 0], sizes = [8, 128], strides = [1, 1]} : vector<64x128xf32> to vector<8x128xf32>
    %cst_16 = arith.constant dense<0.000000e+00> : vector<8x128xf32>
    %61 = tpu.matmul %40, %12, %cst_16 {dimension_numbers = #tpu.dot_dimension_numbers<[1], [0], [0], [1], [0, 0, 1, 1], [], []>} : vector<8x32xf32>, vector<32x128xf32>, vector<8x128xf32> -> vector<8x128xf32>
    %62 = arith.addf %60, %61 : vector<8x128xf32>
    %63 = math.tanh %62 : vector<8x128xf32>
    %64 = arith.negf %62 : vector<8x128xf32>
    %65 = math.exp %64 : vector<8x128xf32>
    %cst_17 = arith.constant 1.000000e+00 : f32
    %66 = vector.broadcast %cst_17 : f32 to vector<8x128xf32>
    %67 = arith.addf %66, %65 : vector<8x128xf32>
    %68 = arith.divf %66, %67 : vector<8x128xf32>
    %69 = arith.select %20, %63, %68 : vector<8x128xi1>, vector<8x128xf32>
    %70 = vector.extract_strided_slice %69 {offsets = [0, 0], sizes = [8, 32], strides = [1, 1]} : vector<8x128xf32> to vector<8x32xf32>
    %71 = vector.extract_strided_slice %69 {offsets = [0, 32], sizes = [8, 32], strides = [1, 1]} : vector<8x128xf32> to vector<8x32xf32>
    %72 = vector.extract_strided_slice %69 {offsets = [0, 64], sizes = [8, 32], strides = [1, 1]} : vector<8x128xf32> to vector<8x32xf32>
    %73 = vector.extract_strided_slice %69 {offsets = [0, 96], sizes = [8, 32], strides = [1, 1]} : vector<8x128xf32> to vector<8x32xf32>
    %74 = arith.mulf %71, %38 : vector<8x32xf32>
    %75 = arith.mulf %70, %72 : vector<8x32xf32>
    %76 = arith.addf %74, %75 : vector<8x32xf32>
    %77 = math.tanh %76 : vector<8x32xf32>
    %78 = arith.mulf %73, %77 : vector<8x32xf32>
    %79 = tpu.concatenate %78, %59 in 1 : vector<8x32xf32>, vector<8x32xf32> -> vector<8x64xf32>
    %cst_18 = arith.constant dense<0.000000e+00> : vector<8x128xf32>
    %80 = tpu.matmul %79, %13, %cst_18 {dimension_numbers = #tpu.dot_dimension_numbers<[1], [0], [0], [1], [0, 0, 1, 1], [], []>} : vector<8x64xf32>, vector<64x128xf32>, vector<8x128xf32> -> vector<8x128xf32>
    %81 = arith.addf %80, %14 : vector<8x128xf32>
    %82 = math.tanh %81 : vector<8x128xf32>
    %83 = arith.negf %81 : vector<8x128xf32>
    %84 = math.exp %83 : vector<8x128xf32>
    %cst_19 = arith.constant 1.000000e+00 : f32
    %85 = vector.broadcast %cst_19 : f32 to vector<8x128xf32>
    %86 = arith.addf %85, %84 : vector<8x128xf32>
    %87 = arith.divf %85, %86 : vector<8x128xf32>
    %88 = arith.select %20, %82, %87 : vector<8x128xi1>, vector<8x128xf32>
    %89 = vector.extract_strided_slice %88 {offsets = [0, 0], sizes = [8, 32], strides = [1, 1]} : vector<8x128xf32> to vector<8x32xf32>
    %90 = vector.extract_strided_slice %88 {offsets = [0, 32], sizes = [8, 32], strides = [1, 1]} : vector<8x128xf32> to vector<8x32xf32>
    %91 = vector.extract_strided_slice %88 {offsets = [0, 64], sizes = [8, 32], strides = [1, 1]} : vector<8x128xf32> to vector<8x32xf32>
    %92 = vector.extract_strided_slice %88 {offsets = [0, 96], sizes = [8, 32], strides = [1, 1]} : vector<8x128xf32> to vector<8x32xf32>
    %93 = arith.mulf %90, %57 : vector<8x32xf32>
    %94 = arith.mulf %89, %91 : vector<8x32xf32>
    %95 = arith.addf %93, %94 : vector<8x32xf32>
    %96 = math.tanh %95 : vector<8x32xf32>
    %97 = arith.mulf %92, %96 : vector<8x32xf32>
    %98 = vector.extract_strided_slice %11 {offsets = [16, 0], sizes = [8, 128], strides = [1, 1]} : vector<64x128xf32> to vector<8x128xf32>
    %cst_20 = arith.constant dense<0.000000e+00> : vector<8x128xf32>
    %99 = tpu.matmul %78, %12, %cst_20 {dimension_numbers = #tpu.dot_dimension_numbers<[1], [0], [0], [1], [0, 0, 1, 1], [], []>} : vector<8x32xf32>, vector<32x128xf32>, vector<8x128xf32> -> vector<8x128xf32>
    %100 = arith.addf %98, %99 : vector<8x128xf32>
    %101 = math.tanh %100 : vector<8x128xf32>
    %102 = arith.negf %100 : vector<8x128xf32>
    %103 = math.exp %102 : vector<8x128xf32>
    %cst_21 = arith.constant 1.000000e+00 : f32
    %104 = vector.broadcast %cst_21 : f32 to vector<8x128xf32>
    %105 = arith.addf %104, %103 : vector<8x128xf32>
    %106 = arith.divf %104, %105 : vector<8x128xf32>
    %107 = arith.select %20, %101, %106 : vector<8x128xi1>, vector<8x128xf32>
    %108 = vector.extract_strided_slice %107 {offsets = [0, 0], sizes = [8, 32], strides = [1, 1]} : vector<8x128xf32> to vector<8x32xf32>
    %109 = vector.extract_strided_slice %107 {offsets = [0, 32], sizes = [8, 32], strides = [1, 1]} : vector<8x128xf32> to vector<8x32xf32>
    %110 = vector.extract_strided_slice %107 {offsets = [0, 64], sizes = [8, 32], strides = [1, 1]} : vector<8x128xf32> to vector<8x32xf32>
    %111 = vector.extract_strided_slice %107 {offsets = [0, 96], sizes = [8, 32], strides = [1, 1]} : vector<8x128xf32> to vector<8x32xf32>
    %112 = arith.mulf %109, %76 : vector<8x32xf32>
    %113 = arith.mulf %108, %110 : vector<8x32xf32>
    %114 = arith.addf %112, %113 : vector<8x32xf32>
    %115 = math.tanh %114 : vector<8x32xf32>
    %116 = arith.mulf %111, %115 : vector<8x32xf32>
    %117 = tpu.concatenate %116, %97 in 1 : vector<8x32xf32>, vector<8x32xf32> -> vector<8x64xf32>
    %cst_22 = arith.constant dense<0.000000e+00> : vector<8x128xf32>
    %118 = tpu.matmul %117, %13, %cst_22 {dimension_numbers = #tpu.dot_dimension_numbers<[1], [0], [0], [1], [0, 0, 1, 1], [], []>} : vector<8x64xf32>, vector<64x128xf32>, vector<8x128xf32> -> vector<8x128xf32>
    %119 = arith.addf %118, %14 : vector<8x128xf32>
    %120 = math.tanh %119 : vector<8x128xf32>
    %121 = arith.negf %119 : vector<8x128xf32>
    %122 = math.exp %121 : vector<8x128xf32>
    %cst_23 = arith.constant 1.000000e+00 : f32
    %123 = vector.broadcast %cst_23 : f32 to vector<8x128xf32>
    %124 = arith.addf %123, %122 : vector<8x128xf32>
    %125 = arith.divf %123, %124 : vector<8x128xf32>
    %126 = arith.select %20, %120, %125 : vector<8x128xi1>, vector<8x128xf32>
    %127 = vector.extract_strided_slice %126 {offsets = [0, 0], sizes = [8, 32], strides = [1, 1]} : vector<8x128xf32> to vector<8x32xf32>
    %128 = vector.extract_strided_slice %126 {offsets = [0, 32], sizes = [8, 32], strides = [1, 1]} : vector<8x128xf32> to vector<8x32xf32>
    %129 = vector.extract_strided_slice %126 {offsets = [0, 64], sizes = [8, 32], strides = [1, 1]} : vector<8x128xf32> to vector<8x32xf32>
    %130 = vector.extract_strided_slice %126 {offsets = [0, 96], sizes = [8, 32], strides = [1, 1]} : vector<8x128xf32> to vector<8x32xf32>
    %131 = arith.mulf %128, %95 : vector<8x32xf32>
    %132 = arith.mulf %127, %129 : vector<8x32xf32>
    %133 = arith.addf %131, %132 : vector<8x32xf32>
    %134 = math.tanh %133 : vector<8x32xf32>
    %135 = arith.mulf %130, %134 : vector<8x32xf32>
    %136 = vector.extract_strided_slice %11 {offsets = [24, 0], sizes = [8, 128], strides = [1, 1]} : vector<64x128xf32> to vector<8x128xf32>
    %cst_24 = arith.constant dense<0.000000e+00> : vector<8x128xf32>
    %137 = tpu.matmul %116, %12, %cst_24 {dimension_numbers = #tpu.dot_dimension_numbers<[1], [0], [0], [1], [0, 0, 1, 1], [], []>} : vector<8x32xf32>, vector<32x128xf32>, vector<8x128xf32> -> vector<8x128xf32>
    %138 = arith.addf %136, %137 : vector<8x128xf32>
    %139 = math.tanh %138 : vector<8x128xf32>
    %140 = arith.negf %138 : vector<8x128xf32>
    %141 = math.exp %140 : vector<8x128xf32>
    %cst_25 = arith.constant 1.000000e+00 : f32
    %142 = vector.broadcast %cst_25 : f32 to vector<8x128xf32>
    %143 = arith.addf %142, %141 : vector<8x128xf32>
    %144 = arith.divf %142, %143 : vector<8x128xf32>
    %145 = arith.select %20, %139, %144 : vector<8x128xi1>, vector<8x128xf32>
    %146 = vector.extract_strided_slice %145 {offsets = [0, 0], sizes = [8, 32], strides = [1, 1]} : vector<8x128xf32> to vector<8x32xf32>
    %147 = vector.extract_strided_slice %145 {offsets = [0, 32], sizes = [8, 32], strides = [1, 1]} : vector<8x128xf32> to vector<8x32xf32>
    %148 = vector.extract_strided_slice %145 {offsets = [0, 64], sizes = [8, 32], strides = [1, 1]} : vector<8x128xf32> to vector<8x32xf32>
    %149 = vector.extract_strided_slice %145 {offsets = [0, 96], sizes = [8, 32], strides = [1, 1]} : vector<8x128xf32> to vector<8x32xf32>
    %150 = arith.mulf %147, %114 : vector<8x32xf32>
    %151 = arith.mulf %146, %148 : vector<8x32xf32>
    %152 = arith.addf %150, %151 : vector<8x32xf32>
    %153 = math.tanh %152 : vector<8x32xf32>
    %154 = arith.mulf %149, %153 : vector<8x32xf32>
    %155 = tpu.concatenate %154, %135 in 1 : vector<8x32xf32>, vector<8x32xf32> -> vector<8x64xf32>
    %cst_26 = arith.constant dense<0.000000e+00> : vector<8x128xf32>
    %156 = tpu.matmul %155, %13, %cst_26 {dimension_numbers = #tpu.dot_dimension_numbers<[1], [0], [0], [1], [0, 0, 1, 1], [], []>} : vector<8x64xf32>, vector<64x128xf32>, vector<8x128xf32> -> vector<8x128xf32>
    %157 = arith.addf %156, %14 : vector<8x128xf32>
    %158 = math.tanh %157 : vector<8x128xf32>
    %159 = arith.negf %157 : vector<8x128xf32>
    %160 = math.exp %159 : vector<8x128xf32>
    %cst_27 = arith.constant 1.000000e+00 : f32
    %161 = vector.broadcast %cst_27 : f32 to vector<8x128xf32>
    %162 = arith.addf %161, %160 : vector<8x128xf32>
    %163 = arith.divf %161, %162 : vector<8x128xf32>
    %164 = arith.select %20, %158, %163 : vector<8x128xi1>, vector<8x128xf32>
    %165 = vector.extract_strided_slice %164 {offsets = [0, 0], sizes = [8, 32], strides = [1, 1]} : vector<8x128xf32> to vector<8x32xf32>
    %166 = vector.extract_strided_slice %164 {offsets = [0, 32], sizes = [8, 32], strides = [1, 1]} : vector<8x128xf32> to vector<8x32xf32>
    %167 = vector.extract_strided_slice %164 {offsets = [0, 64], sizes = [8, 32], strides = [1, 1]} : vector<8x128xf32> to vector<8x32xf32>
    %168 = vector.extract_strided_slice %164 {offsets = [0, 96], sizes = [8, 32], strides = [1, 1]} : vector<8x128xf32> to vector<8x32xf32>
    %169 = arith.mulf %166, %133 : vector<8x32xf32>
    %170 = arith.mulf %165, %167 : vector<8x32xf32>
    %171 = arith.addf %169, %170 : vector<8x32xf32>
    %172 = math.tanh %171 : vector<8x32xf32>
    %173 = arith.mulf %168, %172 : vector<8x32xf32>
    %174 = vector.extract_strided_slice %11 {offsets = [32, 0], sizes = [8, 128], strides = [1, 1]} : vector<64x128xf32> to vector<8x128xf32>
    %cst_28 = arith.constant dense<0.000000e+00> : vector<8x128xf32>
    %175 = tpu.matmul %154, %12, %cst_28 {dimension_numbers = #tpu.dot_dimension_numbers<[1], [0], [0], [1], [0, 0, 1, 1], [], []>} : vector<8x32xf32>, vector<32x128xf32>, vector<8x128xf32> -> vector<8x128xf32>
    %176 = arith.addf %174, %175 : vector<8x128xf32>
    %177 = math.tanh %176 : vector<8x128xf32>
    %178 = arith.negf %176 : vector<8x128xf32>
    %179 = math.exp %178 : vector<8x128xf32>
    %cst_29 = arith.constant 1.000000e+00 : f32
    %180 = vector.broadcast %cst_29 : f32 to vector<8x128xf32>
    %181 = arith.addf %180, %179 : vector<8x128xf32>
    %182 = arith.divf %180, %181 : vector<8x128xf32>
    %183 = arith.select %20, %177, %182 : vector<8x128xi1>, vector<8x128xf32>
    %184 = vector.extract_strided_slice %183 {offsets = [0, 0], sizes = [8, 32], strides = [1, 1]} : vector<8x128xf32> to vector<8x32xf32>
    %185 = vector.extract_strided_slice %183 {offsets = [0, 32], sizes = [8, 32], strides = [1, 1]} : vector<8x128xf32> to vector<8x32xf32>
    %186 = vector.extract_strided_slice %183 {offsets = [0, 64], sizes = [8, 32], strides = [1, 1]} : vector<8x128xf32> to vector<8x32xf32>
    %187 = vector.extract_strided_slice %183 {offsets = [0, 96], sizes = [8, 32], strides = [1, 1]} : vector<8x128xf32> to vector<8x32xf32>
    %188 = arith.mulf %185, %152 : vector<8x32xf32>
    %189 = arith.mulf %184, %186 : vector<8x32xf32>
    %190 = arith.addf %188, %189 : vector<8x32xf32>
    %191 = math.tanh %190 : vector<8x32xf32>
    %192 = arith.mulf %187, %191 : vector<8x32xf32>
    %193 = tpu.concatenate %192, %173 in 1 : vector<8x32xf32>, vector<8x32xf32> -> vector<8x64xf32>
    %cst_30 = arith.constant dense<0.000000e+00> : vector<8x128xf32>
    %194 = tpu.matmul %193, %13, %cst_30 {dimension_numbers = #tpu.dot_dimension_numbers<[1], [0], [0], [1], [0, 0, 1, 1], [], []>} : vector<8x64xf32>, vector<64x128xf32>, vector<8x128xf32> -> vector<8x128xf32>
    %195 = arith.addf %194, %14 : vector<8x128xf32>
    %196 = math.tanh %195 : vector<8x128xf32>
    %197 = arith.negf %195 : vector<8x128xf32>
    %198 = math.exp %197 : vector<8x128xf32>
    %cst_31 = arith.constant 1.000000e+00 : f32
    %199 = vector.broadcast %cst_31 : f32 to vector<8x128xf32>
    %200 = arith.addf %199, %198 : vector<8x128xf32>
    %201 = arith.divf %199, %200 : vector<8x128xf32>
    %202 = arith.select %20, %196, %201 : vector<8x128xi1>, vector<8x128xf32>
    %203 = vector.extract_strided_slice %202 {offsets = [0, 0], sizes = [8, 32], strides = [1, 1]} : vector<8x128xf32> to vector<8x32xf32>
    %204 = vector.extract_strided_slice %202 {offsets = [0, 32], sizes = [8, 32], strides = [1, 1]} : vector<8x128xf32> to vector<8x32xf32>
    %205 = vector.extract_strided_slice %202 {offsets = [0, 64], sizes = [8, 32], strides = [1, 1]} : vector<8x128xf32> to vector<8x32xf32>
    %206 = vector.extract_strided_slice %202 {offsets = [0, 96], sizes = [8, 32], strides = [1, 1]} : vector<8x128xf32> to vector<8x32xf32>
    %207 = arith.mulf %204, %171 : vector<8x32xf32>
    %208 = arith.mulf %203, %205 : vector<8x32xf32>
    %209 = arith.addf %207, %208 : vector<8x32xf32>
    %210 = math.tanh %209 : vector<8x32xf32>
    %211 = arith.mulf %206, %210 : vector<8x32xf32>
    %212 = vector.extract_strided_slice %11 {offsets = [40, 0], sizes = [8, 128], strides = [1, 1]} : vector<64x128xf32> to vector<8x128xf32>
    %cst_32 = arith.constant dense<0.000000e+00> : vector<8x128xf32>
    %213 = tpu.matmul %192, %12, %cst_32 {dimension_numbers = #tpu.dot_dimension_numbers<[1], [0], [0], [1], [0, 0, 1, 1], [], []>} : vector<8x32xf32>, vector<32x128xf32>, vector<8x128xf32> -> vector<8x128xf32>
    %214 = arith.addf %212, %213 : vector<8x128xf32>
    %215 = math.tanh %214 : vector<8x128xf32>
    %216 = arith.negf %214 : vector<8x128xf32>
    %217 = math.exp %216 : vector<8x128xf32>
    %cst_33 = arith.constant 1.000000e+00 : f32
    %218 = vector.broadcast %cst_33 : f32 to vector<8x128xf32>
    %219 = arith.addf %218, %217 : vector<8x128xf32>
    %220 = arith.divf %218, %219 : vector<8x128xf32>
    %221 = arith.select %20, %215, %220 : vector<8x128xi1>, vector<8x128xf32>
    %222 = vector.extract_strided_slice %221 {offsets = [0, 0], sizes = [8, 32], strides = [1, 1]} : vector<8x128xf32> to vector<8x32xf32>
    %223 = vector.extract_strided_slice %221 {offsets = [0, 32], sizes = [8, 32], strides = [1, 1]} : vector<8x128xf32> to vector<8x32xf32>
    %224 = vector.extract_strided_slice %221 {offsets = [0, 64], sizes = [8, 32], strides = [1, 1]} : vector<8x128xf32> to vector<8x32xf32>
    %225 = vector.extract_strided_slice %221 {offsets = [0, 96], sizes = [8, 32], strides = [1, 1]} : vector<8x128xf32> to vector<8x32xf32>
    %226 = arith.mulf %223, %190 : vector<8x32xf32>
    %227 = arith.mulf %222, %224 : vector<8x32xf32>
    %228 = arith.addf %226, %227 : vector<8x32xf32>
    %229 = math.tanh %228 : vector<8x32xf32>
    %230 = arith.mulf %225, %229 : vector<8x32xf32>
    %231 = tpu.concatenate %230, %211 in 1 : vector<8x32xf32>, vector<8x32xf32> -> vector<8x64xf32>
    %cst_34 = arith.constant dense<0.000000e+00> : vector<8x128xf32>
    %232 = tpu.matmul %231, %13, %cst_34 {dimension_numbers = #tpu.dot_dimension_numbers<[1], [0], [0], [1], [0, 0, 1, 1], [], []>} : vector<8x64xf32>, vector<64x128xf32>, vector<8x128xf32> -> vector<8x128xf32>
    %233 = arith.addf %232, %14 : vector<8x128xf32>
    %234 = math.tanh %233 : vector<8x128xf32>
    %235 = arith.negf %233 : vector<8x128xf32>
    %236 = math.exp %235 : vector<8x128xf32>
    %cst_35 = arith.constant 1.000000e+00 : f32
    %237 = vector.broadcast %cst_35 : f32 to vector<8x128xf32>
    %238 = arith.addf %237, %236 : vector<8x128xf32>
    %239 = arith.divf %237, %238 : vector<8x128xf32>
    %240 = arith.select %20, %234, %239 : vector<8x128xi1>, vector<8x128xf32>
    %241 = vector.extract_strided_slice %240 {offsets = [0, 0], sizes = [8, 32], strides = [1, 1]} : vector<8x128xf32> to vector<8x32xf32>
    %242 = vector.extract_strided_slice %240 {offsets = [0, 32], sizes = [8, 32], strides = [1, 1]} : vector<8x128xf32> to vector<8x32xf32>
    %243 = vector.extract_strided_slice %240 {offsets = [0, 64], sizes = [8, 32], strides = [1, 1]} : vector<8x128xf32> to vector<8x32xf32>
    %244 = vector.extract_strided_slice %240 {offsets = [0, 96], sizes = [8, 32], strides = [1, 1]} : vector<8x128xf32> to vector<8x32xf32>
    %245 = arith.mulf %242, %209 : vector<8x32xf32>
    %246 = arith.mulf %241, %243 : vector<8x32xf32>
    %247 = arith.addf %245, %246 : vector<8x32xf32>
    %248 = math.tanh %247 : vector<8x32xf32>
    %249 = arith.mulf %244, %248 : vector<8x32xf32>
    %250 = vector.extract_strided_slice %11 {offsets = [48, 0], sizes = [8, 128], strides = [1, 1]} : vector<64x128xf32> to vector<8x128xf32>
    %cst_36 = arith.constant dense<0.000000e+00> : vector<8x128xf32>
    %251 = tpu.matmul %230, %12, %cst_36 {dimension_numbers = #tpu.dot_dimension_numbers<[1], [0], [0], [1], [0, 0, 1, 1], [], []>} : vector<8x32xf32>, vector<32x128xf32>, vector<8x128xf32> -> vector<8x128xf32>
    %252 = arith.addf %250, %251 : vector<8x128xf32>
    %253 = math.tanh %252 : vector<8x128xf32>
    %254 = arith.negf %252 : vector<8x128xf32>
    %255 = math.exp %254 : vector<8x128xf32>
    %cst_37 = arith.constant 1.000000e+00 : f32
    %256 = vector.broadcast %cst_37 : f32 to vector<8x128xf32>
    %257 = arith.addf %256, %255 : vector<8x128xf32>
    %258 = arith.divf %256, %257 : vector<8x128xf32>
    %259 = arith.select %20, %253, %258 : vector<8x128xi1>, vector<8x128xf32>
    %260 = vector.extract_strided_slice %259 {offsets = [0, 0], sizes = [8, 32], strides = [1, 1]} : vector<8x128xf32> to vector<8x32xf32>
    %261 = vector.extract_strided_slice %259 {offsets = [0, 32], sizes = [8, 32], strides = [1, 1]} : vector<8x128xf32> to vector<8x32xf32>
    %262 = vector.extract_strided_slice %259 {offsets = [0, 64], sizes = [8, 32], strides = [1, 1]} : vector<8x128xf32> to vector<8x32xf32>
    %263 = vector.extract_strided_slice %259 {offsets = [0, 96], sizes = [8, 32], strides = [1, 1]} : vector<8x128xf32> to vector<8x32xf32>
    %264 = arith.mulf %261, %228 : vector<8x32xf32>
    %265 = arith.mulf %260, %262 : vector<8x32xf32>
    %266 = arith.addf %264, %265 : vector<8x32xf32>
    %267 = math.tanh %266 : vector<8x32xf32>
    %268 = arith.mulf %263, %267 : vector<8x32xf32>
    %269 = tpu.concatenate %268, %249 in 1 : vector<8x32xf32>, vector<8x32xf32> -> vector<8x64xf32>
    %cst_38 = arith.constant dense<0.000000e+00> : vector<8x128xf32>
    %270 = tpu.matmul %269, %13, %cst_38 {dimension_numbers = #tpu.dot_dimension_numbers<[1], [0], [0], [1], [0, 0, 1, 1], [], []>} : vector<8x64xf32>, vector<64x128xf32>, vector<8x128xf32> -> vector<8x128xf32>
    %271 = arith.addf %270, %14 : vector<8x128xf32>
    %272 = math.tanh %271 : vector<8x128xf32>
    %273 = arith.negf %271 : vector<8x128xf32>
    %274 = math.exp %273 : vector<8x128xf32>
    %cst_39 = arith.constant 1.000000e+00 : f32
    %275 = vector.broadcast %cst_39 : f32 to vector<8x128xf32>
    %276 = arith.addf %275, %274 : vector<8x128xf32>
    %277 = arith.divf %275, %276 : vector<8x128xf32>
    %278 = arith.select %20, %272, %277 : vector<8x128xi1>, vector<8x128xf32>
    %279 = vector.extract_strided_slice %278 {offsets = [0, 0], sizes = [8, 32], strides = [1, 1]} : vector<8x128xf32> to vector<8x32xf32>
    %280 = vector.extract_strided_slice %278 {offsets = [0, 32], sizes = [8, 32], strides = [1, 1]} : vector<8x128xf32> to vector<8x32xf32>
    %281 = vector.extract_strided_slice %278 {offsets = [0, 64], sizes = [8, 32], strides = [1, 1]} : vector<8x128xf32> to vector<8x32xf32>
    %282 = vector.extract_strided_slice %278 {offsets = [0, 96], sizes = [8, 32], strides = [1, 1]} : vector<8x128xf32> to vector<8x32xf32>
    %283 = arith.mulf %280, %247 : vector<8x32xf32>
    %284 = arith.mulf %279, %281 : vector<8x32xf32>
    %285 = arith.addf %283, %284 : vector<8x32xf32>
    %286 = math.tanh %285 : vector<8x32xf32>
    %287 = arith.mulf %282, %286 : vector<8x32xf32>
    %288 = vector.extract_strided_slice %11 {offsets = [56, 0], sizes = [8, 128], strides = [1, 1]} : vector<64x128xf32> to vector<8x128xf32>
    %cst_40 = arith.constant dense<0.000000e+00> : vector<8x128xf32>
    %289 = tpu.matmul %268, %12, %cst_40 {dimension_numbers = #tpu.dot_dimension_numbers<[1], [0], [0], [1], [0, 0, 1, 1], [], []>} : vector<8x32xf32>, vector<32x128xf32>, vector<8x128xf32> -> vector<8x128xf32>
    %290 = arith.addf %288, %289 : vector<8x128xf32>
    %291 = math.tanh %290 : vector<8x128xf32>
    %292 = arith.negf %290 : vector<8x128xf32>
    %293 = math.exp %292 : vector<8x128xf32>
    %cst_41 = arith.constant 1.000000e+00 : f32
    %294 = vector.broadcast %cst_41 : f32 to vector<8x128xf32>
    %295 = arith.addf %294, %293 : vector<8x128xf32>
    %296 = arith.divf %294, %295 : vector<8x128xf32>
    %297 = arith.select %20, %291, %296 : vector<8x128xi1>, vector<8x128xf32>
    %298 = vector.extract_strided_slice %297 {offsets = [0, 0], sizes = [8, 32], strides = [1, 1]} : vector<8x128xf32> to vector<8x32xf32>
    %299 = vector.extract_strided_slice %297 {offsets = [0, 32], sizes = [8, 32], strides = [1, 1]} : vector<8x128xf32> to vector<8x32xf32>
    %300 = vector.extract_strided_slice %297 {offsets = [0, 64], sizes = [8, 32], strides = [1, 1]} : vector<8x128xf32> to vector<8x32xf32>
    %301 = vector.extract_strided_slice %297 {offsets = [0, 96], sizes = [8, 32], strides = [1, 1]} : vector<8x128xf32> to vector<8x32xf32>
    %302 = arith.mulf %299, %266 : vector<8x32xf32>
    %303 = arith.mulf %298, %300 : vector<8x32xf32>
    %304 = arith.addf %302, %303 : vector<8x32xf32>
    %305 = math.tanh %304 : vector<8x32xf32>
    %306 = arith.mulf %301, %305 : vector<8x32xf32>
    %307 = tpu.concatenate %306, %287 in 1 : vector<8x32xf32>, vector<8x32xf32> -> vector<8x64xf32>
    %cst_42 = arith.constant dense<0.000000e+00> : vector<8x128xf32>
    %308 = tpu.matmul %307, %13, %cst_42 {dimension_numbers = #tpu.dot_dimension_numbers<[1], [0], [0], [1], [0, 0, 1, 1], [], []>} : vector<8x64xf32>, vector<64x128xf32>, vector<8x128xf32> -> vector<8x128xf32>
    %309 = arith.addf %308, %14 : vector<8x128xf32>
    %310 = math.tanh %309 : vector<8x128xf32>
    %311 = arith.negf %309 : vector<8x128xf32>
    %312 = math.exp %311 : vector<8x128xf32>
    %cst_43 = arith.constant 1.000000e+00 : f32
    %313 = vector.broadcast %cst_43 : f32 to vector<8x128xf32>
    %314 = arith.addf %313, %312 : vector<8x128xf32>
    %315 = arith.divf %313, %314 : vector<8x128xf32>
    %316 = arith.select %20, %310, %315 : vector<8x128xi1>, vector<8x128xf32>
    %317 = vector.extract_strided_slice %316 {offsets = [0, 0], sizes = [8, 32], strides = [1, 1]} : vector<8x128xf32> to vector<8x32xf32>
    %318 = vector.extract_strided_slice %316 {offsets = [0, 32], sizes = [8, 32], strides = [1, 1]} : vector<8x128xf32> to vector<8x32xf32>
    %319 = vector.extract_strided_slice %316 {offsets = [0, 64], sizes = [8, 32], strides = [1, 1]} : vector<8x128xf32> to vector<8x32xf32>
    %320 = vector.extract_strided_slice %316 {offsets = [0, 96], sizes = [8, 32], strides = [1, 1]} : vector<8x128xf32> to vector<8x32xf32>
    %321 = arith.mulf %318, %285 : vector<8x32xf32>
    %322 = arith.mulf %317, %319 : vector<8x32xf32>
    %323 = arith.addf %321, %322 : vector<8x32xf32>
    %324 = math.tanh %323 : vector<8x32xf32>
    %325 = arith.mulf %320, %324 : vector<8x32xf32>
    %c0_i32_44 = arith.constant 0 : i32
    %326 = tpu.memref_slice %arg16[%c0_i32_44] : memref<3x!tpu.dma_semaphore, #tpu.memory_space<semaphore_mem>> -> memref<1x!tpu.dma_semaphore, #tpu.memory_space<semaphore_mem>>
    %327 = tpu.memref_squeeze %326 : memref<1x!tpu.dma_semaphore, #tpu.memory_space<semaphore_mem>> -> memref<!tpu.dma_semaphore, #tpu.memory_space<semaphore_mem>>
    tpu.wait_dma2 semaphore(%327 : memref<!tpu.dma_semaphore, #tpu.memory_space<semaphore_mem>>) src(%arg9 : memref<32x384xf32, #tpu.memory_space<any>>) dst(%arg13 : memref<32x384xf32, #tpu.memory_space<vmem>>)
    %c0_45 = arith.constant 0 : index
    %c0_46 = arith.constant 0 : index
    %328 = vector.load %arg13[%c0_45, %c0_46] : memref<32x384xf32, #tpu.memory_space<vmem>>, vector<32x384xf32>
    %cst_47 = arith.constant dense<0.000000e+00> : vector<8x384xf32>
    %329 = tpu.matmul %325, %328, %cst_47 {dimension_numbers = #tpu.dot_dimension_numbers<[1], [0], [0], [1], [0, 0, 1, 1], [], []>} : vector<8x32xf32>, vector<32x384xf32>, vector<8x384xf32> -> vector<8x384xf32>
    %c0_48 = arith.constant 0 : index
    %c0_49 = arith.constant 0 : index
    %330 = vector.load %arg6[%c0_48, %c0_49] : memref<1x384xf32, #tpu.memory_space<vmem>>, vector<1x384xf32>
    %331 = vector.broadcast %330 : vector<1x384xf32> to vector<8x384xf32>
    %332 = arith.addf %329, %331 : vector<8x384xf32>
    %cst_50 = arith.constant 0.000000e+00 : f32
    %333 = vector.broadcast %cst_50 : f32 to vector<8x384xf32>
    %334 = arith.maximumf %332, %333 : vector<8x384xf32>
    %c1_i32_51 = arith.constant 1 : i32
    %335 = tpu.memref_slice %arg16[%c1_i32_51] : memref<3x!tpu.dma_semaphore, #tpu.memory_space<semaphore_mem>> -> memref<1x!tpu.dma_semaphore, #tpu.memory_space<semaphore_mem>>
    %336 = tpu.memref_squeeze %335 : memref<1x!tpu.dma_semaphore, #tpu.memory_space<semaphore_mem>> -> memref<!tpu.dma_semaphore, #tpu.memory_space<semaphore_mem>>
    tpu.wait_dma2 semaphore(%336 : memref<!tpu.dma_semaphore, #tpu.memory_space<semaphore_mem>>) src(%arg10 : memref<384x512xf32, #tpu.memory_space<any>>) dst(%arg14 : memref<384x512xf32, #tpu.memory_space<vmem>>)
    %c0_52 = arith.constant 0 : index
    %c0_53 = arith.constant 0 : index
    %337 = vector.load %arg14[%c0_52, %c0_53] : memref<384x512xf32, #tpu.memory_space<vmem>>, vector<384x512xf32>
    %cst_54 = arith.constant dense<0.000000e+00> : vector<8x512xf32>
    %338 = tpu.matmul %334, %337, %cst_54 {dimension_numbers = #tpu.dot_dimension_numbers<[1], [0], [0], [1], [0, 0, 1, 1], [], []>} : vector<8x384xf32>, vector<384x512xf32>, vector<8x512xf32> -> vector<8x512xf32>
    %c0_55 = arith.constant 0 : index
    %c0_56 = arith.constant 0 : index
    %339 = vector.load %arg7[%c0_55, %c0_56] : memref<1x512xf32, #tpu.memory_space<vmem>>, vector<1x512xf32>
    %340 = vector.broadcast %339 : vector<1x512xf32> to vector<8x512xf32>
    %341 = arith.addf %338, %340 : vector<8x512xf32>
    %cst_57 = arith.constant 0.000000e+00 : f32
    %342 = vector.broadcast %cst_57 : f32 to vector<8x512xf32>
    %343 = arith.maximumf %341, %342 : vector<8x512xf32>
    %c2_i32_58 = arith.constant 2 : i32
    %344 = tpu.memref_slice %arg16[%c2_i32_58] : memref<3x!tpu.dma_semaphore, #tpu.memory_space<semaphore_mem>> -> memref<1x!tpu.dma_semaphore, #tpu.memory_space<semaphore_mem>>
    %345 = tpu.memref_squeeze %344 : memref<1x!tpu.dma_semaphore, #tpu.memory_space<semaphore_mem>> -> memref<!tpu.dma_semaphore, #tpu.memory_space<semaphore_mem>>
    tpu.wait_dma2 semaphore(%345 : memref<!tpu.dma_semaphore, #tpu.memory_space<semaphore_mem>>) src(%arg11 : memref<512x128xf32, #tpu.memory_space<any>>) dst(%arg15 : memref<512x128xf32, #tpu.memory_space<vmem>>)
    %c0_59 = arith.constant 0 : index
    %c0_60 = arith.constant 0 : index
    %346 = vector.load %arg15[%c0_59, %c0_60] : memref<512x128xf32, #tpu.memory_space<vmem>>, vector<512x128xf32>
    %cst_61 = arith.constant dense<0.000000e+00> : vector<8x128xf32>
    %347 = tpu.matmul %343, %346, %cst_61 {dimension_numbers = #tpu.dot_dimension_numbers<[1], [0], [0], [1], [0, 0, 1, 1], [], []>} : vector<8x512xf32>, vector<512x128xf32>, vector<8x128xf32> -> vector<8x128xf32>
    %c0_62 = arith.constant 0 : index
    %c0_63 = arith.constant 0 : index
    %348 = vector.load %arg8[%c0_62, %c0_63] : memref<1x128xf32, #tpu.memory_space<vmem>>, vector<1x128xf32>
    %349 = vector.broadcast %348 : vector<1x128xf32> to vector<8x128xf32>
    %350 = arith.addf %347, %349 : vector<8x128xf32>
    %c0_64 = arith.constant 0 : index
    %c0_65 = arith.constant 0 : index
    %351 = vector.load %arg12[%c0_64, %c0_65] : memref<8x128xf32, #tpu.memory_space<vmem>>, vector<8x128xf32>
    tpu.vector_store %arg12[%c0_64, %c0_65], %350 {strides = array<i32>} : memref<8x128xf32, #tpu.memory_space<vmem>>, vector<8x128xf32>,
    return
  }
}

</mosaic_0001>

<llo_original>
// kernel: tpu_custom_call.1
$region0: #{tpu_custom_call.1}
  #allocation0 [shape = 'u32[]', space=smem, size = 0x4, offset = 0x4, fixed_abs, tag = 'smem constant byte address 0x4 - core index']
  #allocation1 [shape = 'u32[144,128]{1,0:T(1,128)}', space=vmem, size = 0x12000, scoped, tag = 'internal scratch']
  #allocation2 [shape = 'f32[32,384]{1,0:T(8,128)}', space=vmem, size = 0xc000, scoped, tag = 'scratch operand']
  #allocation3 [shape = 'f32[384,512]{1,0:T(8,128)}', space=vmem, size = 0xc0000, scoped, tag = 'scratch operand']
  #allocation4 [shape = 'f32[512,128]{1,0:T(8,128)}', space=vmem, size = 0x40000, scoped, tag = 'scratch operand']
  #allocation5 [shape = 's32[3]{0}', space=sflag, size = 0xc, scoped, tag = 'scratch operand']
  #allocation16 [shape = 's32[]', space=sflag, size = 0x4, offset = 0, fixed_abs, tag = 'sflag constant byte address 0x0 - dummy sync flag']
  #allocation17 [shape = 's32[]', space=sflag, size = 0x4, offset = 0, fixed_abs, tag = 'sflag constant byte address 0x0 - dummy sync flag']
  #allocation18 [shape = 's32[]', space=sflag, size = 0x4, offset = 0, fixed_abs, tag = 'sflag constant byte address 0x0 - dummy sync flag']
  #allocation19 [shape = 'u32[]', space=smem, size = 0x4, offset = 0x44, fixed_abs, tag = 'smem constant byte address 0x44 - assertion arg 0']
  #allocation20 [shape = 'u32[]', space=smem, size = 0x4, offset = 0x48, fixed_abs, tag = 'smem constant byte address 0x48 - assertion arg 1']
  #allocation21 [shape = 's32[]', space=sflag, size = 0x4, offset = 0, fixed_abs, tag = 'sflag constant byte address 0x0 - dummy sync flag']
  #allocation22 [shape = 's32[]', space=sflag, size = 0x4, offset = 0, fixed_abs, tag = 'sflag constant byte address 0x0 - dummy sync flag']
  %s0 = inlined_call_operand.vmem [shape: f32[64,4], index: 0, kind: input, shape index: {}]
  %s1 = inlined_call_operand.vmem [shape: f32[4,128], index: 1, kind: input, shape index: {}]
  %s2 = inlined_call_operand.hbm [shape: f32[32,128], index: 2, kind: input, shape index: {}]
  %s3 = inlined_call_operand.vmem [shape: f32[1,128], index: 3, kind: input, shape index: {}]
  %s4 = inlined_call_operand.hbm [shape: f32[64,128], index: 4, kind: input, shape index: {}]
  %s5 = inlined_call_operand.hbm [shape: f32[8,128], index: 5, kind: input, shape index: {}]
  %s6 = inlined_call_operand.hbm [shape: f32[1,384], index: 6, kind: input, shape index: {}]
  %s7 = inlined_call_operand.hbm [shape: f32[1,512], index: 7, kind: input, shape index: {}]
  %s8 = inlined_call_operand.vmem [shape: f32[1,128], index: 8, kind: input, shape index: {}]
  %s9 = inlined_call_operand.vmem [shape: f32[32,384], index: 9, kind: input, shape index: {}]
  %s10 = inlined_call_operand.hbm [shape: f32[384,512], index: 10, kind: input, shape index: {}]
  %s11 = inlined_call_operand.hbm [shape: f32[512,128], index: 11, kind: input, shape index: {}]
  %s12 = inlined_call_operand.hbm [shape: f32[8,128], index: 12, kind: output, shape index: {}]
  %s13 = sld [smem:[#allocation0]]
  $region108: #{tpu_custom_call.1} parent=0
    _
  %s15 = ssub.s32 1, %s13
  %s16 = scalar_select 0, %s15, %s13
  $region1: #{tpu_custom_call.1} parent=0
    #allocation6 [shape = 'u8[16384]{0}', space=vmem, size = 0x4000, scoped, tag = 'input window, operand 2, single buffered']
    #allocation7 [shape = 's32[1]{0}', space=sflag, size = 0x4, scoped, tag = 'scoped memory for tpu_custom_call.1']
    #allocation8 [shape = 's32[1]{0}', space=sflag, size = 0x4, scoped, tag = 'scoped memory for tpu_custom_call.1']
    #allocation9 [shape = 'u8[32768]{0}', space=vmem, size = 0x8000, scoped, tag = 'input window, operand 4, single buffered']
    #allocation10 [shape = 's32[1]{0}', space=sflag, size = 0x4, scoped, tag = 'scoped memory for tpu_custom_call.1']
    #allocation11 [shape = 'u8[4096]{0}', space=vmem, size = 0x1000, scoped, tag = 'input window, operand 5, single buffered']
    #allocation12 [shape = 'u8[1536]{0}', space=vmem, size = 0x800, scoped, tag = 'input window, operand 6, single buffered']
    #allocation13 [shape = 's32[1]{0}', space=sflag, size = 0x4, scoped, tag = 'scoped memory for tpu_custom_call.1']
    #allocation14 [shape = 'u8[2048]{0}', space=vmem, size = 0x800, scoped, tag = 'input window, operand 7, single buffered']
    #allocation15 [shape = 'u8[4096]{0}', space=vmem, size = 0x1000, scoped, tag = 'output window, operand 0, single buffered']
    %17 = vsyncpa [#allocation7], 0
    %18 = vsyncpa [#allocation10], 0
    %19 = vsyncpa [#allocation13], 0
    %20 = vsyncpa [#allocation8], 0
    // Predicated region
    $region2: #{tpu_custom_call.1} parent=1 // pred_check
      _
    $region3: #{tpu_custom_call.1} parent=1 // pred_check_branch
      %22 = sbr.rel (0) target = $region5
    $region4: #{tpu_custom_call.1} parent=1 // pred_region
      _
    $region5: #{tpu_custom_call.1} parent=1 // pred_fallthru
      _
    // Predicated region
    $region6: #{tpu_custom_call.1} parent=1 // pred_check
      _
    $region7: #{tpu_custom_call.1} parent=1 // pred_check_branch
      %24 = sbr.rel (0) target = $region9
    $region8: #{tpu_custom_call.1} parent=1 // pred_region
      _
    $region9: #{tpu_custom_call.1} parent=1 // pred_fallthru
      _
    // Predicated region
    $region10: #{tpu_custom_call.1} parent=1 // pred_check
      _
    $region11: #{tpu_custom_call.1} parent=1 // pred_check_branch
      %26 = sbr.rel (0) target = $region13
    $region12: #{tpu_custom_call.1} parent=1 // pred_region
      %s28 = ssub.s32 512, 512
      %29 = vsyncadd [#allocation7], %s28
      %s30 = sshll.u32 [#allocation6], 4
      %s31 = int_to_ptr.vmem [resolvable:$true] %s30
      %36 = dma.hbm_to_vmem [thread:$0]  %s2, 512, %s31, [#allocation7], 128, 128, 8
    $region13: #{tpu_custom_call.1} parent=1 // pred_fallthru
      _
    // Predicated region
    $region14: #{tpu_custom_call.1} parent=1 // pred_check
      _
    $region15: #{tpu_custom_call.1} parent=1 // pred_check_branch
      %38 = sbr.rel (0) target = $region17
    $region16: #{tpu_custom_call.1} parent=1 // pred_region
      _
    $region17: #{tpu_custom_call.1} parent=1 // pred_fallthru
      _
    // Predicated region
    $region18: #{tpu_custom_call.1} parent=1 // pred_check
      _
    $region19: #{tpu_custom_call.1} parent=1 // pred_check_branch
      %40 = sbr.rel (0) target = $region21
    $region20: #{tpu_custom_call.1} parent=1 // pred_region
      %s42 = ssub.s32 1024, 1024
      %43 = vsyncadd [#allocation10], %s42
      %s44 = sshll.u32 [#allocation9], 4
      %s45 = int_to_ptr.vmem [resolvable:$true] %s44
      %50 = dma.hbm_to_vmem [thread:$0]  %s4, 1024, %s45, [#allocation10], 128, 128, 8
    $region21: #{tpu_custom_call.1} parent=1 // pred_fallthru
      _
    // Predicated region
    $region22: #{tpu_custom_call.1} parent=1 // pred_check
      _
    $region23: #{tpu_custom_call.1} parent=1 // pred_check_branch
      %52 = sbr.rel (0) target = $region25
    $region24: #{tpu_custom_call.1} parent=1 // pred_region
      %s54 = ssub.s32 128, 128
      %55 = vsyncadd [#allocation10], %s54
      %s57 = sshll.u32 [#allocation11], 4
      %s58 = int_to_ptr.vmem [resolvable:$true] %s57
      %60 = dma.hbm_to_vmem [thread:$0]  %s5, 128, %s58, [#allocation10]
    $region25: #{tpu_custom_call.1} parent=1 // pred_fallthru
      _
    // Predicated region
    $region26: #{tpu_custom_call.1} parent=1 // pred_check
      _
    $region27: #{tpu_custom_call.1} parent=1 // pred_check_branch
      %62 = sbr.rel (0) target = $region29
    $region28: #{tpu_custom_call.1} parent=1 // pred_region
      %s64 = ssub.s32 48, 48
      %65 = vsyncadd [#allocation13], %s64
      %s67 = sshll.u32 [#allocation12], 4
      %s68 = int_to_ptr.vmem [resolvable:$true] %s67
      %70 = dma.hbm_to_vmem [thread:$0]  %s6, 48, %s68, [#allocation13]
    $region29: #{tpu_custom_call.1} parent=1 // pred_fallthru
      _
    // Predicated region
    $region30: #{tpu_custom_call.1} parent=1 // pred_check
      _
    $region31: #{tpu_custom_call.1} parent=1 // pred_check_branch
      %72 = sbr.rel (0) target = $region33
    $region32: #{tpu_custom_call.1} parent=1 // pred_region
      %s74 = ssub.s32 64, 64
      %75 = vsyncadd [#allocation13], %s74
      %s77 = sshll.u32 [#allocation14], 4
      %s78 = int_to_ptr.vmem [resolvable:$true] %s77
      %80 = dma.hbm_to_vmem [thread:$0]  %s7, 64, %s78, [#allocation13]
    $region33: #{tpu_custom_call.1} parent=1 // pred_fallthru
      _
    // Predicated region
    $region34: #{tpu_custom_call.1} parent=1 // pred_check
      _
    $region35: #{tpu_custom_call.1} parent=1 // pred_check_branch
      %82 = sbr.rel (0) target = $region37
    $region36: #{tpu_custom_call.1} parent=1 // pred_region
      _
    $region37: #{tpu_custom_call.1} parent=1 // pred_fallthru
      _
    // Predicated region
    $region38: #{tpu_custom_call.1} parent=1 // pred_check
      _
    $region39: #{tpu_custom_call.1} parent=1 // pred_check_branch
      %84 = sbr.rel (0) target = $region41
    $region40: #{tpu_custom_call.1} parent=1 // pred_region
      %85 = dma.done [#allocation7], 512
    $region41: #{tpu_custom_call.1} parent=1 // pred_fallthru
      _
    // Predicated region
    $region42: #{tpu_custom_call.1} parent=1 // pred_check
      _
    $region43: #{tpu_custom_call.1} parent=1 // pred_check_branch
      %87 = sbr.rel (0) target = $region45
    $region44: #{tpu_custom_call.1} parent=1 // pred_region
      %88 = dma.done [#allocation10], 1024
    $region45: #{tpu_custom_call.1} parent=1 // pred_fallthru
      _
    // Predicated region
    $region46: #{tpu_custom_call.1} parent=1 // pred_check
      _
    $region47: #{tpu_custom_call.1} parent=1 // pred_check_branch
      %90 = sbr.rel (0) target = $region49
    $region48: #{tpu_custom_call.1} parent=1 // pred_region
      %91 = dma.done [#allocation10], 128
    $region49: #{tpu_custom_call.1} parent=1 // pred_fallthru
      _
    // Predicated region
    $region50: #{tpu_custom_call.1} parent=1 // pred_check
      _
    $region51: #{tpu_custom_call.1} parent=1 // pred_check_branch
      %93 = sbr.rel (0) target = $region53
    $region52: #{tpu_custom_call.1} parent=1 // pred_region
      %94 = dma.done [#allocation13], 48
    $region53: #{tpu_custom_call.1} parent=1 // pred_fallthru
      _
    // Predicated region
    $region54: #{tpu_custom_call.1} parent=1 // pred_check
      _
    $region55: #{tpu_custom_call.1} parent=1 // pred_check_branch
      %96 = sbr.rel (0) target = $region57
    $region56: #{tpu_custom_call.1} parent=1 // pred_region
      %97 = dma.done [#allocation13], 64
    $region57: #{tpu_custom_call.1} parent=1 // pred_fallthru
      _
    %p99 = scmp.lt.u32.totalorder 96, 8
    %p100 = pneg %p99
    // Predicated region
    $region58: #{tpu_custom_call.1} parent=1 // pred_check
      _
    $region59: #{tpu_custom_call.1} parent=1 // pred_check_branch
      %102 = sbr.rel (%p99) target = $region61
    $region60: #{tpu_custom_call.1} parent=1 // pred_region
      %s117 = sand.u32 96, 7
      %p118 = scmp.eq.s32.totalorder %s117, 0
      // Predicated region
      $region73: #{tpu_custom_call.1} parent=60 // pred_check
        %p119 = pneg %p118
      $region74: #{tpu_custom_call.1} parent=60 // pred_check_branch
        %121 = sbr.rel (%p119) target = $region76
      $region75: #{tpu_custom_call.1} parent=60 // pred_region
        loop: start=0, step=1, limit=1
        $region77: #{tpu_custom_call.1} parent=75 // loop_pre_header
          _
        $region78: #{tpu_custom_call.1} parent=75 // loop_header
          %s123 = sphi 0, %s127
          %p124 = scmp.ge.s32.totalorder %s123, 1
          %s128 = sphi %s9, %s9
          %s129 = sphi [#allocation2], [#allocation2]
        $region79: #{tpu_custom_call.1} parent=75 // loop_header_branch
          %126 = sbr.rel (%p124) target = $region83
        $region80: #{tpu_custom_call.1} parent=75 // loop_body
          %v130 = vld [vmem:[%s128] sm:$0xff]
          %131 = vst [vmem:[%s129] sm:$0xff] %v130
          %v132 = vld [vmem:[%s128 + $0x8] sm:$0xff]
          %133 = vst [vmem:[%s129 + $0x8] sm:$0xff] %v132
          %v134 = vld [vmem:[%s128 + $0x10] sm:$0xff]
          %135 = vst [vmem:[%s129 + $0x10] sm:$0xff] %v134
          %v136 = vld [vmem:[%s128 + $0x18] sm:$0xff]
          %137 = vst [vmem:[%s129 + $0x18] sm:$0xff] %v136
          %v138 = vld [vmem:[%s128 + $0x20] sm:$0xff]
          %139 = vst [vmem:[%s129 + $0x20] sm:$0xff] %v138
          %v140 = vld [vmem:[%s128 + $0x28] sm:$0xff]
          %141 = vst [vmem:[%s129 + $0x28] sm:$0xff] %v140
          %v142 = vld [vmem:[%s128 + $0x30] sm:$0xff]
          %143 = vst [vmem:[%s129 + $0x30] sm:$0xff] %v142
          %v144 = vld [vmem:[%s128 + $0x38] sm:$0xff]
          %145 = vst [vmem:[%s129 + $0x38] sm:$0xff] %v144
          %v146 = vld [vmem:[%s128 + $0x40] sm:$0xff]
          %147 = vst [vmem:[%s129 + $0x40] sm:$0xff] %v146
          %v148 = vld [vmem:[%s128 + $0x48] sm:$0xff]
          %149 = vst [vmem:[%s129 + $0x48] sm:$0xff] %v148
          %v150 = vld [vmem:[%s128 + $0x50] sm:$0xff]
          %151 = vst [vmem:[%s129 + $0x50] sm:$0xff] %v150
          %v152 = vld [vmem:[%s128 + $0x58] sm:$0xff]
          %153 = vst [vmem:[%s129 + $0x58] sm:$0xff] %v152
        $region81: #{tpu_custom_call.1} parent=75 // loop_footer
          %s127 = sadd.s32 1, %s123
        $region82: #{tpu_custom_call.1} parent=75 // loop_footer_branch
          %122 = sbr.rel target = $region78
        $region83: #{tpu_custom_call.1} parent=75 // loop_exit
          _
      $region76: #{tpu_custom_call.1} parent=60 // pred_fallthru
        _
      %p154 = pneg %p118
      // Predicated region
      $region84: #{tpu_custom_call.1} parent=60 // pred_check
        _
      $region85: #{tpu_custom_call.1} parent=60 // pred_check_branch
        %156 = sbr.rel (%p118) target = $region87
      $region86: #{tpu_custom_call.1} parent=60 // pred_region
        %s157 = sand.u32 96, 7
      $region87: #{tpu_custom_call.1} parent=60 // pred_fallthru
        _
    $region61: #{tpu_custom_call.1} parent=1 // pred_fallthru
      _
    // Predicated region
    $region62: #{tpu_custom_call.1} parent=1 // pred_check
      %p103 = pneg %p99
    $region63: #{tpu_custom_call.1} parent=1 // pred_check_branch
      %105 = sbr.rel (%p103) target = $region65
    $region64: #{tpu_custom_call.1} parent=1 // pred_region
      %s106 = sshllo.u32 0, 96
      loop: start=0, step=1, limit=1
      $region66: #{tpu_custom_call.1} parent=64 // loop_pre_header
        _
      $region67: #{tpu_custom_call.1} parent=64 // loop_header
        %s108 = sphi 0, %s112
        %p109 = scmp.ge.s32.totalorder %s108, 1
        %s113 = sphi %s9, %s9
        %s114 = sphi [#allocation2], [#allocation2]
      $region68: #{tpu_custom_call.1} parent=64 // loop_header_branch
        %111 = sbr.rel (%p109) target = $region72
      $region69: #{tpu_custom_call.1} parent=64 // loop_body
        %v115 = vld [vmem:[%s113] sm:%s106]
        %116 = vst [vmem:[%s114] sm:%s106] %v115
      $region70: #{tpu_custom_call.1} parent=64 // loop_footer
        %s112 = sadd.s32 1, %s108
      $region71: #{tpu_custom_call.1} parent=64 // loop_footer_branch
        %107 = sbr.rel target = $region67
      $region72: #{tpu_custom_call.1} parent=64 // loop_exit
        _
    $region65: #{tpu_custom_call.1} parent=1 // pred_fallthru
      _
    // Predicated region
    $region88: #{tpu_custom_call.1} parent=1 // pred_check
      _
    $region89: #{tpu_custom_call.1} parent=1 // pred_check_branch
      %160 = sbr.rel (0) target = $region91
    $region90: #{tpu_custom_call.1} parent=1 // pred_region
      %161 = vsyncadd [#allocation5], 1536
    $region91: #{tpu_custom_call.1} parent=1 // pred_fallthru
      _
    %s162 = scalar_lea.sflag [#allocation5], 1
    // Predicated region
    $region92: #{tpu_custom_call.1} parent=1 // pred_check
      _
    $region93: #{tpu_custom_call.1} parent=1 // pred_check_branch
      %164 = sbr.rel target = $region95
    $region94: #{tpu_custom_call.1} parent=1 // pred_region
      %165 = sst [smem:[#allocation19]] [#allocation18]
      %166 = sst [smem:[#allocation20]] [#allocation17]
    $region95: #{tpu_custom_call.1} parent=1 // pred_fallthru
      _
    %168 = shalt.err (0)
    %s170 = sshll.u32 [#allocation3], 4
    %s171 = int_to_ptr.vmem [resolvable:$true] %s170
    %173 = dma.hbm_to_vmem [thread:$0]  %s10, 24576, %s171, %s162
    %s174 = scalar_lea.sflag [#allocation5], 2
    // Predicated region
    $region96: #{tpu_custom_call.1} parent=1 // pred_check
      _
    $region97: #{tpu_custom_call.1} parent=1 // pred_check_branch
      %176 = sbr.rel target = $region99
    $region98: #{tpu_custom_call.1} parent=1 // pred_region
      %177 = sst [smem:[#allocation19]] [#allocation22]
      %178 = sst [smem:[#allocation20]] [#allocation21]
    $region99: #{tpu_custom_call.1} parent=1 // pred_fallthru
      _
    %180 = shalt.err (0)
    %s182 = sshll.u32 [#allocation4], 4
    %s183 = int_to_ptr.vmem [resolvable:$true] %s182
    %185 = dma.hbm_to_vmem [thread:$0]  %s11, 8192, %s183, %s174
    %v186 = vld [vmem:[%s0] sm:$0xff]
    %v187 = vld [vmem:[%s0 + $0x8] sm:$0xff]
    %v188 = vld [vmem:[%s0 + $0x10] sm:$0xff]
    %v189 = vld [vmem:[%s0 + $0x18] sm:$0xff]
    %v190 = vld [vmem:[%s0 + $0x20] sm:$0xff]
    %v191 = vld [vmem:[%s0 + $0x28] sm:$0xff]
    %v192 = vld [vmem:[%s0 + $0x30] sm:$0xff]
    %v193 = vld [vmem:[%s0 + $0x38] sm:$0xff]
    %v194 = vld [vmem:[%s1] sm:$0xf]
    %v195 = vld [vmem:[%s3] sm:$0x1]
    %v197 = vlaneseq
    %v198 = vshrl.u32 %v197, 7
    %v199 = vsub.s32 0, %v198
    %v200 = vrot.slane %v195, %v199
    %vm202 = vcmask 31744
    %v204 = vsel %vm202, %v186, 0
    %v207 = vsel %vm202, %v187, 0
    %v210 = vsel %vm202, %v188, 0
    %v213 = vsel %vm202, %v189, 0
    %v216 = vsel %vm202, %v190, 0
    %v219 = vsel %vm202, %v191, 0
    %v222 = vsel %vm202, %v192, 0
    %v225 = vsel %vm202, %v193, 0
    %vm227 = vcmask 1043456
    %v229 = vsel %vm227, %v194, 0
    %231 = vmatprep.subr.mxu0 0.0
    %232 = vmatpush1.msra.mxu0 %v229
    %233 = vmatprep.subr.mxu0 0.0
    %234 = vmatpush1.msra.mxu0 0.0
    %235 = vmatprep.subr.mxu0 0.0
    %236 = vmatpush1.msra.mxu0 0.0
    %237 = vmatprep.subr.mxu0 0.0
    %238 = vmatpush1.msra.mxu0 0.0
    %239 = vmatprep.subr.mxu0 0.0
    %240 = vmatpush1.msra.mxu0 0.0
    %241 = vmatprep.subr.mxu0 0.0
    %242 = vmatpush1.msra.mxu0 0.0
    %243 = vmatprep.subr.mxu0 0.0
    %244 = vmatpush1.msra.mxu0 0.0
    %245 = vmatprep.subr.mxu0 0.0
    %246 = vmatpush1.msra.mxu0 0.0
    %247 = vmatprep.subr.mxu0 0.0
    %248 = vmatpush1.msra.mxu0 0.0
    %249 = vmatprep.subr.mxu0 0.0
    %250 = vmatpush1.msra.mxu0 0.0
    %251 = vmatprep.subr.mxu0 0.0
    %252 = vmatpush1.msra.mxu0 0.0
    %253 = vmatprep.subr.mxu0 0.0
    %254 = vmatpush1.msra.mxu0 0.0
    %255 = vmatprep.subr.mxu0 0.0
    %256 = vmatpush1.msra.mxu0 0.0
    %257 = vmatprep.subr.mxu0 0.0
    %258 = vmatpush1.msra.mxu0 0.0
    %259 = vmatprep.subr.mxu0 0.0
    %260 = vmatpush1.msra.mxu0 0.0
    %261 = vmatprep.subr.mxu0 0.0
    %262 = vmatpush1.msra.mxu0 0.0
    %263 = vmatprep.subr.mxu0 0.0
    %264 = vmatpush1.msra.mxu0 0.0
    %265 = vmatprep.subr.mxu0 0.0
    %266 = vmatpush1.msra.mxu0 0.0
    %267 = vmatprep.subr.mxu0 0.0
    %268 = vmatpush1.msra.mxu0 0.0
    %269 = vmatprep.subr.mxu0 0.0
    %270 = vmatpush1.msra.mxu0 0.0
    %271 = vmatprep.subr.mxu0 0.0
    %272 = vmatpush1.msra.mxu0 0.0
    %273 = vmatprep.subr.mxu0 0.0
    %274 = vmatpush1.msra.mxu0 0.0
    %275 = vmatprep.subr.mxu0 0.0
    %276 = vmatpush1.msra.mxu0 0.0
    %277 = vmatprep.subr.mxu0 0.0
    %278 = vmatpush1.msra.mxu0 0.0
    %279 = vmatprep.subr.mxu0 0.0
    %280 = vmatpush1.msra.mxu0 0.0
    %281 = vmatprep.subr.mxu0 0.0
    %282 = vmatpush1.msra.mxu0 0.0
    %283 = vmatprep.subr.mxu0 0.0
    %284 = vmatpush1.msra.mxu0 0.0
    %285 = vmatprep.subr.mxu0 0.0
    %286 = vmatpush1.msra.mxu0 0.0
    %287 = vmatprep.subr.mxu0 0.0
    %288 = vmatpush1.msra.mxu0 0.0
    %289 = vmatprep.subr.mxu0 0.0
    %290 = vmatpush1.msra.mxu0 0.0
    %291 = vmatprep.subr.mxu0 0.0
    %292 = vmatpush1.msra.mxu0 0.0
    %293 = vmatprep.subr.mxu0 0.0
    %294 = vmatpush1.msra.mxu0 0.0
    %295 = vmatprep.mubr.f32.mxu0 0.0
    %296 = vmatmul.mubr.f32.gmra.mrb[0].mxu0 %v204
    %v297 = vpop.f32.mrb[0].mxu0
    %v298 = vadd.f32 %v200, %v297
    %v299 = vpop.f32.mrb[0].mxu0
    %300 = vmatprep.mubr.f32.mxu0 0.0
    %301 = vmatmul.mubr.f32.gmra.mrb[0].mxu0 %v207
    %v302 = vpop.f32.mrb[0].mxu0
    %v303 = vadd.f32 %v200, %v302
    %v304 = vpop.f32.mrb[0].mxu0
    %305 = vmatprep.mubr.f32.mxu0 0.0
    %306 = vmatmul.mubr.f32.gmra.mrb[0].mxu0 %v210
    %v307 = vpop.f32.mrb[0].mxu0
    %v308 = vadd.f32 %v200, %v307
    %v309 = vpop.f32.mrb[0].mxu0
    %310 = vmatprep.mubr.f32.mxu0 0.0
    %311 = vmatmul.mubr.f32.gmra.mrb[0].mxu0 %v213
    %v312 = vpop.f32.mrb[0].mxu0
    %v313 = vadd.f32 %v200, %v312
    %v314 = vpop.f32.mrb[0].mxu0
    %315 = vmatprep.mubr.f32.mxu0 0.0
    %316 = vmatmul.mubr.f32.gmra.mrb[0].mxu0 %v216
    %v317 = vpop.f32.mrb[0].mxu0
    %v318 = vadd.f32 %v200, %v317
    %v319 = vpop.f32.mrb[0].mxu0
    %320 = vmatprep.mubr.f32.mxu0 0.0
    %321 = vmatmul.mubr.f32.gmra.mrb[0].mxu0 %v219
    %v322 = vpop.f32.mrb[0].mxu0
    %v323 = vadd.f32 %v200, %v322
    %v324 = vpop.f32.mrb[0].mxu0
    %325 = vmatprep.mubr.f32.mxu0 0.0
    %326 = vmatmul.mubr.f32.gmra.mrb[0].mxu0 %v222
    %v327 = vpop.f32.mrb[0].mxu0
    %v328 = vadd.f32 %v200, %v327
    %v329 = vpop.f32.mrb[0].mxu0
    %330 = vmatprep.mubr.f32.mxu0 0.0
    %331 = vmatmul.mubr.f32.gmra.mrb[0].mxu0 %v225
    %v332 = vpop.f32.mrb[0].mxu0
    %v333 = vadd.f32 %v200, %v332
    %v334 = vpop.f32.mrb[0].mxu0
    %335 = vdwg.mxu0
    %v336 = vld [vmem:[#allocation6] sm:$0xff]
    %v337 = vld [vmem:[#allocation6 + $0x8] sm:$0xff]
    %v338 = vld [vmem:[#allocation6 + $0x10] sm:$0xff]
    %v339 = vld [vmem:[#allocation6 + $0x18] sm:$0xff]
    %v340 = vld [vmem:[#allocation9] sm:$0xff]
    %v341 = vld [vmem:[#allocation9 + $0x8] sm:$0xff]
    %v342 = vld [vmem:[#allocation9 + $0x10] sm:$0xff]
    %v343 = vld [vmem:[#allocation9 + $0x18] sm:$0xff]
    %v344 = vld [vmem:[#allocation9 + $0x20] sm:$0xff]
    %v345 = vld [vmem:[#allocation9 + $0x28] sm:$0xff]
    %v346 = vld [vmem:[#allocation9 + $0x30] sm:$0xff]
    %v347 = vld [vmem:[#allocation9 + $0x38] sm:$0xff]
    %v348 = vld [vmem:[#allocation11] sm:$0xff]
    %v349 = vlaneseq
    %v350 = vand.u32 %v349, 127
    %vm351 = vcmp.ge.s32.totalorder %v350, 64
    %vm352 = vcmp.lt.s32.totalorder %v350, 96
    %vm353 = vmand %vm351, %vm352
    %vm354 = vcmask 261120
    %v356 = vsel %vm354, 0.0, 0
    %358 = vmatprep.subr.mxu0 0.0
    %359 = vmatpush1.msra.mxu0 %v336
    %360 = vmatprep.subr.mxu0 0.0
    %361 = vmatpush1.msra.mxu0 %v337
    %362 = vmatprep.subr.mxu0 0.0
    %363 = vmatpush1.msra.mxu0 %v338
    %364 = vmatprep.subr.mxu0 0.0
    %365 = vmatpush1.msra.mxu0 %v339
    %366 = vmatprep.subr.mxu0 0.0
    %367 = vmatpush1.msra.mxu0 0.0
    %368 = vmatprep.subr.mxu0 0.0
    %369 = vmatpush1.msra.mxu0 0.0
    %370 = vmatprep.subr.mxu0 0.0
    %371 = vmatpush1.msra.mxu0 0.0
    %372 = vmatprep.subr.mxu0 0.0
    %373 = vmatpush1.msra.mxu0 0.0
    %374 = vmatprep.subr.mxu0 0.0
    %375 = vmatpush1.msra.mxu0 0.0
    %376 = vmatprep.subr.mxu0 0.0
    %377 = vmatpush1.msra.mxu0 0.0
    %378 = vmatprep.subr.mxu0 0.0
    %379 = vmatpush1.msra.mxu0 0.0
    %380 = vmatprep.subr.mxu0 0.0
    %381 = vmatpush1.msra.mxu0 0.0
    %382 = vmatprep.subr.mxu0 0.0
    %383 = vmatpush1.msra.mxu0 0.0
    %384 = vmatprep.subr.mxu0 0.0
    %385 = vmatpush1.msra.mxu0 0.0
    %386 = vmatprep.subr.mxu0 0.0
    %387 = vmatpush1.msra.mxu0 0.0
    %388 = vmatprep.subr.mxu0 0.0
    %389 = vmatpush1.msra.mxu0 0.0
    %390 = vmatprep.subr.mxu0 0.0
    %391 = vmatpush1.msra.mxu0 0.0
    %392 = vmatprep.subr.mxu0 0.0
    %393 = vmatpush1.msra.mxu0 0.0
    %394 = vmatprep.subr.mxu0 0.0
    %395 = vmatpush1.msra.mxu0 0.0
    %396 = vmatprep.subr.mxu0 0.0
    %397 = vmatpush1.msra.mxu0 0.0
    %398 = vmatprep.subr.mxu0 0.0
    %399 = vmatpush1.msra.mxu0 0.0
    %400 = vmatprep.subr.mxu0 0.0
    %401 = vmatpush1.msra.mxu0 0.0
    %402 = vmatprep.subr.mxu0 0.0
    %403 = vmatpush1.msra.mxu0 0.0
    %404 = vmatprep.subr.mxu0 0.0
    %405 = vmatpush1.msra.mxu0 0.0
    %406 = vmatprep.subr.mxu0 0.0
    %407 = vmatpush1.msra.mxu0 0.0
    %408 = vmatprep.subr.mxu0 0.0
    %409 = vmatpush1.msra.mxu0 0.0
    %410 = vmatprep.subr.mxu0 0.0
    %411 = vmatpush1.msra.mxu0 0.0
    %412 = vmatprep.subr.mxu0 0.0
    %413 = vmatpush1.msra.mxu0 0.0
    %414 = vmatprep.subr.mxu0 0.0
    %415 = vmatpush1.msra.mxu0 0.0
    %416 = vmatprep.subr.mxu0 0.0
    %417 = vmatpush1.msra.mxu0 0.0
    %418 = vmatprep.subr.mxu0 0.0
    %419 = vmatpush1.msra.mxu0 0.0
    %420 = vmatprep.subr.mxu0 0.0
    %421 = vmatpush1.msra.mxu0 0.0
    %422 = vmatprep.mubr.f32.mxu0 0.0
    %423 = vmatmul.mubr.f32.gmra.mrb[0].mxu0 %v356
    %v424 = vpop.f32.mrb[0].mxu0
    %v425 = vadd.f32 0.0, %v424
    %v426 = vpop.f32.mrb[0].mxu0
    %427 = vdwg.mxu0
    %v428 = vadd.f32 %v298, %v425
    %v429 = vtanh.pop %v428
    %v430 = vxor.u32 %v428, 2147483648
    %v431 = vmul.f32 %v430, 1.442695
    %v432 = vpow.pop %v431
    %v433 = vadd.f32 %v432, 1.0
    %v434 = vrcp.pop %v433
    %v435 = vmul.f32 1.0, %v434
    %v436 = vsel %vm353, %v429, %v435
    %v437 = vmul.f32 %v436, 0.0
    %439 = vrot.lane.b32.xlu0 %v436, 64
    %v440 = vpop.permute.xlu0 %439
    %v442 = vmul.f32 %v436, %v440
    %444 = vrot.lane.b32.xlu0 %v442, 32
    %v445 = vpop.permute.xlu0 %444
    %v447 = vadd.f32 %v437, %v445
    %v448 = vtanh.pop %v447
    %450 = vrot.lane.b32.xlu0 %v448, 64
    %v451 = vpop.permute.xlu0 %450
    %v453 = vmul.f32 %v436, %v451
    %455 = vrot.lane.b32.xlu0 %v453, 32
    %v456 = vpop.permute.xlu0 %455
    %v458 = vsel %vm354, %v456, 0.0
    %vm459 = vcmask 523264
    %v461 = vsel %vm459, %v458, 0
    %463 = vmatprep.subr.mxu0 0.0
    %464 = vmatpush1.msra.mxu0 %v340
    %465 = vmatprep.subr.mxu0 0.0
    %466 = vmatpush1.msra.mxu0 %v341
    %467 = vmatprep.subr.mxu0 0.0
    %468 = vmatpush1.msra.mxu0 %v342
    %469 = vmatprep.subr.mxu0 0.0
    %470 = vmatpush1.msra.mxu0 %v343
    %471 = vmatprep.subr.mxu0 0.0
    %472 = vmatpush1.msra.mxu0 %v344
    %473 = vmatprep.subr.mxu0 0.0
    %474 = vmatpush1.msra.mxu0 %v345
    %475 = vmatprep.subr.mxu0 0.0
    %476 = vmatpush1.msra.mxu0 %v346
    %477 = vmatprep.subr.mxu0 0.0
    %478 = vmatpush1.msra.mxu0 %v347
    %479 = vmatprep.subr.mxu0 0.0
    %480 = vmatpush1.msra.mxu0 0.0
    %481 = vmatprep.subr.mxu0 0.0
    %482 = vmatpush1.msra.mxu0 0.0
    %483 = vmatprep.subr.mxu0 0.0
    %484 = vmatpush1.msra.mxu0 0.0
    %485 = vmatprep.subr.mxu0 0.0
    %486 = vmatpush1.msra.mxu0 0.0
    %487 = vmatprep.subr.mxu0 0.0
    %488 = vmatpush1.msra.mxu0 0.0
    %489 = vmatprep.subr.mxu0 0.0
    %490 = vmatpush1.msra.mxu0 0.0
    %491 = vmatprep.subr.mxu0 0.0
    %492 = vmatpush1.msra.mxu0 0.0
    %493 = vmatprep.subr.mxu0 0.0
    %494 = vmatpush1.msra.mxu0 0.0
    %495 = vmatprep.subr.mxu0 0.0
    %496 = vmatpush1.msra.mxu0 0.0
    %497 = vmatprep.subr.mxu0 0.0
    %498 = vmatpush1.msra.mxu0 0.0
    %499 = vmatprep.subr.mxu0 0.0
    %500 = vmatpush1.msra.mxu0 0.0
    %501 = vmatprep.subr.mxu0 0.0
    %502 = vmatpush1.msra.mxu0 0.0
    %503 = vmatprep.subr.mxu0 0.0
    %504 = vmatpush1.msra.mxu0 0.0
    %505 = vmatprep.subr.mxu0 0.0
    %506 = vmatpush1.msra.mxu0 0.0
    %507 = vmatprep.subr.mxu0 0.0
    %508 = vmatpush1.msra.mxu0 0.0
    %509 = vmatprep.subr.mxu0 0.0
    %510 = vmatpush1.msra.mxu0 0.0
    %511 = vmatprep.subr.mxu0 0.0
    %512 = vmatpush1.msra.mxu0 0.0
    %513 = vmatprep.subr.mxu0 0.0
    %514 = vmatpush1.msra.mxu0 0.0
    %515 = vmatprep.subr.mxu0 0.0
    %516 = vmatpush1.msra.mxu0 0.0
    %517 = vmatprep.subr.mxu0 0.0
    %518 = vmatpush1.msra.mxu0 0.0
    %519 = vmatprep.subr.mxu0 0.0
    %520 = vmatpush1.msra.mxu0 0.0
    %521 = vmatprep.subr.mxu0 0.0
    %522 = vmatpush1.msra.mxu0 0.0
    %523 = vmatprep.subr.mxu0 0.0
    %524 = vmatpush1.msra.mxu0 0.0
    %525 = vmatprep.subr.mxu0 0.0
    %526 = vmatpush1.msra.mxu0 0.0
    %527 = vmatprep.mubr.f32.mxu0 0.0
    %528 = vmatmul.mubr.f32.gmra.mrb[0].mxu0 %v461
    %v529 = vpop.f32.mrb[0].mxu0
    %v530 = vadd.f32 %v348, %v529
    %v531 = vpop.f32.mrb[0].mxu0
    %532 = vdwg.mxu0
    %v533 = vtanh.pop %v530
    %v534 = vxor.u32 %v530, 2147483648
    %v535 = vmul.f32 %v534, 1.442695
    %v536 = vpow.pop %v535
    %v537 = vadd.f32 %v536, 1.0
    %v538 = vrcp.pop %v537
    %v539 = vmul.f32 1.0, %v538
    %v540 = vsel %vm353, %v533, %v539
    %v541 = vmul.f32 %v540, 0.0
    %543 = vrot.lane.b32.xlu0 %v540, 64
    %v544 = vpop.permute.xlu0 %543
    %v546 = vmul.f32 %v540, %v544
    %548 = vrot.lane.b32.xlu0 %v546, 32
    %v549 = vpop.permute.xlu0 %548
    %v551 = vadd.f32 %v541, %v549
    %v552 = vtanh.pop %v551
    %554 = vrot.lane.b32.xlu0 %v552, 64
    %v555 = vpop.permute.xlu0 %554
    %v557 = vmul.f32 %v540, %v555
    %v558 = vsel %vm354, %v456, 0
    %560 = vmatprep.subr.mxu0 0.0
    %561 = vmatpush1.msra.mxu0 %v336
    %562 = vmatprep.subr.mxu0 0.0
    %563 = vmatpush1.msra.mxu0 %v337
    %564 = vmatprep.subr.mxu0 0.0
    %565 = vmatpush1.msra.mxu0 %v338
    %566 = vmatprep.subr.mxu0 0.0
    %567 = vmatpush1.msra.mxu0 %v339
    %568 = vmatprep.subr.mxu0 0.0
    %569 = vmatpush1.msra.mxu0 0.0
    %570 = vmatprep.subr.mxu0 0.0
    %571 = vmatpush1.msra.mxu0 0.0
    %572 = vmatprep.subr.mxu0 0.0
    %573 = vmatpush1.msra.mxu0 0.0
    %574 = vmatprep.subr.mxu0 0.0
    %575 = vmatpush1.msra.mxu0 0.0
    %576 = vmatprep.subr.mxu0 0.0
    %577 = vmatpush1.msra.mxu0 0.0
    %578 = vmatprep.subr.mxu0 0.0
    %579 = vmatpush1.msra.mxu0 0.0
    %580 = vmatprep.subr.mxu0 0.0
    %581 = vmatpush1.msra.mxu0 0.0
    %582 = vmatprep.subr.mxu0 0.0
    %583 = vmatpush1.msra.mxu0 0.0
    %584 = vmatprep.subr.mxu0 0.0
    %585 = vmatpush1.msra.mxu0 0.0
    %586 = vmatprep.subr.mxu0 0.0
    %587 = vmatpush1.msra.mxu0 0.0
    %588 = vmatprep.subr.mxu0 0.0
    %589 = vmatpush1.msra.mxu0 0.0
    %590 = vmatprep.subr.mxu0 0.0
    %591 = vmatpush1.msra.mxu0 0.0
    %592 = vmatprep.subr.mxu0 0.0
    %593 = vmatpush1.msra.mxu0 0.0
    %594 = vmatprep.subr.mxu0 0.0
    %595 = vmatpush1.msra.mxu0 0.0
    %596 = vmatprep.subr.mxu0 0.0
    %597 = vmatpush1.msra.mxu0 0.0
    %598 = vmatprep.subr.mxu0 0.0
    %599 = vmatpush1.msra.mxu0 0.0
    %600 = vmatprep.subr.mxu0 0.0
    %601 = vmatpush1.msra.mxu0 0.0
    %602 = vmatprep.subr.mxu0 0.0
    %603 = vmatpush1.msra.mxu0 0.0
    %604 = vmatprep.subr.mxu0 0.0
    %605 = vmatpush1.msra.mxu0 0.0
    %606 = vmatprep.subr.mxu0 0.0
    %607 = vmatpush1.msra.mxu0 0.0
    %608 = vmatprep.subr.mxu0 0.0
    %609 = vmatpush1.msra.mxu0 0.0
    %610 = vmatprep.subr.mxu0 0.0
    %611 = vmatpush1.msra.mxu0 0.0
    %612 = vmatprep.subr.mxu0 0.0
    %613 = vmatpush1.msra.mxu0 0.0
    %614 = vmatprep.subr.mxu0 0.0
    %615 = vmatpush1.msra.mxu0 0.0
    %616 = vmatprep.subr.mxu0 0.0
    %617 = vmatpush1.msra.mxu0 0.0
    %618 = vmatprep.subr.mxu0 0.0
    %619 = vmatpush1.msra.mxu0 0.0
    %620 = vmatprep.subr.mxu0 0.0
    %621 = vmatpush1.msra.mxu0 0.0
    %622 = vmatprep.subr.mxu0 0.0
    %623 = vmatpush1.msra.mxu0 0.0
    %624 = vmatprep.mubr.f32.mxu0 0.0
    %625 = vmatmul.mubr.f32.gmra.mrb[0].mxu0 %v558
    %v626 = vpop.f32.mrb[0].mxu0
    %v627 = vadd.f32 0.0, %v626
    %v628 = vpop.f32.mrb[0].mxu0
    %629 = vdwg.mxu0
    %v630 = vadd.f32 %v303, %v627
    %v631 = vtanh.pop %v630
    %v632 = vxor.u32 %v630, 2147483648
    %v633 = vmul.f32 %v632, 1.442695
    %v634 = vpow.pop %v633
    %v635 = vadd.f32 %v634, 1.0
    %v636 = vrcp.pop %v635
    %v637 = vmul.f32 1.0, %v636
    %v638 = vsel %vm353, %v631, %v637
    %v639 = vmul.f32 %v638, %v447
    %641 = vrot.lane.b32.xlu0 %v638, 64
    %v642 = vpop.permute.xlu0 %641
    %v644 = vmul.f32 %v638, %v642
    %646 = vrot.lane.b32.xlu0 %v644, 32
    %v647 = vpop.permute.xlu0 %646
    %v649 = vadd.f32 %v639, %v647
    %v650 = vtanh.pop %v649
    %652 = vrot.lane.b32.xlu0 %v650, 64
    %v653 = vpop.permute.xlu0 %652
    %v655 = vmul.f32 %v638, %v653
    %657 = vrot.lane.b32.xlu0 %v655, 32
    %v658 = vpop.permute.xlu0 %657
    %661 = vrot.lane.b32.xlu0 %v557, 64
    %v662 = vpop.permute.xlu0 %661
    %v664 = vsel %vm354, %v658, %v662
    %v666 = vsel %vm459, %v664, 0
    %668 = vmatprep.subr.mxu0 0.0
    %669 = vmatpush1.msra.mxu0 %v340
    %670 = vmatprep.subr.mxu0 0.0
    %671 = vmatpush1.msra.mxu0 %v341
    %672 = vmatprep.subr.mxu0 0.0
    %673 = vmatpush1.msra.mxu0 %v342
    %674 = vmatprep.subr.mxu0 0.0
    %675 = vmatpush1.msra.mxu0 %v343
    %676 = vmatprep.subr.mxu0 0.0
    %677 = vmatpush1.msra.mxu0 %v344
    %678 = vmatprep.subr.mxu0 0.0
    %679 = vmatpush1.msra.mxu0 %v345
    %680 = vmatprep.subr.mxu0 0.0
    %681 = vmatpush1.msra.mxu0 %v346
    %682 = vmatprep.subr.mxu0 0.0
    %683 = vmatpush1.msra.mxu0 %v347
    %684 = vmatprep.subr.mxu0 0.0
    %685 = vmatpush1.msra.mxu0 0.0
    %686 = vmatprep.subr.mxu0 0.0
    %687 = vmatpush1.msra.mxu0 0.0
    %688 = vmatprep.subr.mxu0 0.0
    %689 = vmatpush1.msra.mxu0 0.0
    %690 = vmatprep.subr.mxu0 0.0
    %691 = vmatpush1.msra.mxu0 0.0
    %692 = vmatprep.subr.mxu0 0.0
    %693 = vmatpush1.msra.mxu0 0.0
    %694 = vmatprep.subr.mxu0 0.0
    %695 = vmatpush1.msra.mxu0 0.0
    %696 = vmatprep.subr.mxu0 0.0
    %697 = vmatpush1.msra.mxu0 0.0
    %698 = vmatprep.subr.mxu0 0.0
    %699 = vmatpush1.msra.mxu0 0.0
    %700 = vmatprep.subr.mxu0 0.0
    %701 = vmatpush1.msra.mxu0 0.0
    %702 = vmatprep.subr.mxu0 0.0
    %703 = vmatpush1.msra.mxu0 0.0
    %704 = vmatprep.subr.mxu0 0.0
    %705 = vmatpush1.msra.mxu0 0.0
    %706 = vmatprep.subr.mxu0 0.0
    %707 = vmatpush1.msra.mxu0 0.0
    %708 = vmatprep.subr.mxu0 0.0
    %709 = vmatpush1.msra.mxu0 0.0
    %710 = vmatprep.subr.mxu0 0.0
    %711 = vmatpush1.msra.mxu0 0.0
    %712 = vmatprep.subr.mxu0 0.0
    %713 = vmatpush1.msra.mxu0 0.0
    %714 = vmatprep.subr.mxu0 0.0
    %715 = vmatpush1.msra.mxu0 0.0
    %716 = vmatprep.subr.mxu0 0.0
    %717 = vmatpush1.msra.mxu0 0.0
    %718 = vmatprep.subr.mxu0 0.0
    %719 = vmatpush1.msra.mxu0 0.0
    %720 = vmatprep.subr.mxu0 0.0
    %721 = vmatpush1.msra.mxu0 0.0
    %722 = vmatprep.subr.mxu0 0.0
    %723 = vmatpush1.msra.mxu0 0.0
    %724 = vmatprep.subr.mxu0 0.0
    %725 = vmatpush1.msra.mxu0 0.0
    %726 = vmatprep.subr.mxu0 0.0
    %727 = vmatpush1.msra.mxu0 0.0
    %728 = vmatprep.subr.mxu0 0.0
    %729 = vmatpush1.msra.mxu0 0.0
    %730 = vmatprep.subr.mxu0 0.0
    %731 = vmatpush1.msra.mxu0 0.0
    %732 = vmatprep.mubr.f32.mxu0 0.0
    %733 = vmatmul.mubr.f32.gmra.mrb[0].mxu0 %v666
    %v734 = vpop.f32.mrb[0].mxu0
    %v735 = vadd.f32 %v348, %v734
    %v736 = vpop.f32.mrb[0].mxu0
    %737 = vdwg.mxu0
    %v738 = vtanh.pop %v735
    %v739 = vxor.u32 %v735, 2147483648
    %v740 = vmul.f32 %v739, 1.442695
    %v741 = vpow.pop %v740
    %v742 = vadd.f32 %v741, 1.0
    %v743 = vrcp.pop %v742
    %v744 = vmul.f32 1.0, %v743
    %v745 = vsel %vm353, %v738, %v744
    %v746 = vmul.f32 %v745, %v551
    %748 = vrot.lane.b32.xlu0 %v745, 64
    %v749 = vpop.permute.xlu0 %748
    %v751 = vmul.f32 %v745, %v749
    %753 = vrot.lane.b32.xlu0 %v751, 32
    %v754 = vpop.permute.xlu0 %753
    %v756 = vadd.f32 %v746, %v754
    %v757 = vtanh.pop %v756
    %759 = vrot.lane.b32.xlu0 %v757, 64
    %v760 = vpop.permute.xlu0 %759
    %v762 = vmul.f32 %v745, %v760
    %v763 = vsel %vm354, %v658, 0
    %765 = vmatprep.subr.mxu0 0.0
    %766 = vmatpush1.msra.mxu0 %v336
    %767 = vmatprep.subr.mxu0 0.0
    %768 = vmatpush1.msra.mxu0 %v337
    %769 = vmatprep.subr.mxu0 0.0
    %770 = vmatpush1.msra.mxu0 %v338
    %771 = vmatprep.subr.mxu0 0.0
    %772 = vmatpush1.msra.mxu0 %v339
    %773 = vmatprep.subr.mxu0 0.0
    %774 = vmatpush1.msra.mxu0 0.0
    %775 = vmatprep.subr.mxu0 0.0
    %776 = vmatpush1.msra.mxu0 0.0
    %777 = vmatprep.subr.mxu0 0.0
    %778 = vmatpush1.msra.mxu0 0.0
    %779 = vmatprep.subr.mxu0 0.0
    %780 = vmatpush1.msra.mxu0 0.0
    %781 = vmatprep.subr.mxu0 0.0
    %782 = vmatpush1.msra.mxu0 0.0
    %783 = vmatprep.subr.mxu0 0.0
    %784 = vmatpush1.msra.mxu0 0.0
    %785 = vmatprep.subr.mxu0 0.0
    %786 = vmatpush1.msra.mxu0 0.0
    %787 = vmatprep.subr.mxu0 0.0
    %788 = vmatpush1.msra.mxu0 0.0
    %789 = vmatprep.subr.mxu0 0.0
    %790 = vmatpush1.msra.mxu0 0.0
    %791 = vmatprep.subr.mxu0 0.0
    %792 = vmatpush1.msra.mxu0 0.0
    %793 = vmatprep.subr.mxu0 0.0
    %794 = vmatpush1.msra.mxu0 0.0
    %795 = vmatprep.subr.mxu0 0.0
    %796 = vmatpush1.msra.mxu0 0.0
    %797 = vmatprep.subr.mxu0 0.0
    %798 = vmatpush1.msra.mxu0 0.0
    %799 = vmatprep.subr.mxu0 0.0
    %800 = vmatpush1.msra.mxu0 0.0
    %801 = vmatprep.subr.mxu0 0.0
    %802 = vmatpush1.msra.mxu0 0.0
    %803 = vmatprep.subr.mxu0 0.0
    %804 = vmatpush1.msra.mxu0 0.0
    %805 = vmatprep.subr.mxu0 0.0
    %806 = vmatpush1.msra.mxu0 0.0
    %807 = vmatprep.subr.mxu0 0.0
    %808 = vmatpush1.msra.mxu0 0.0
    %809 = vmatprep.subr.mxu0 0.0
    %810 = vmatpush1.msra.mxu0 0.0
    %811 = vmatprep.subr.mxu0 0.0
    %812 = vmatpush1.msra.mxu0 0.0
    %813 = vmatprep.subr.mxu0 0.0
    %814 = vmatpush1.msra.mxu0 0.0
    %815 = vmatprep.subr.mxu0 0.0
    %816 = vmatpush1.msra.mxu0 0.0
    %817 = vmatprep.subr.mxu0 0.0
    %818 = vmatpush1.msra.mxu0 0.0
    %819 = vmatprep.subr.mxu0 0.0
    %820 = vmatpush1.msra.mxu0 0.0
    %821 = vmatprep.subr.mxu0 0.0
    %822 = vmatpush1.msra.mxu0 0.0
    %823 = vmatprep.subr.mxu0 0.0
    %824 = vmatpush1.msra.mxu0 0.0
    %825 = vmatprep.subr.mxu0 0.0
    %826 = vmatpush1.msra.mxu0 0.0
    %827 = vmatprep.subr.mxu0 0.0
    %828 = vmatpush1.msra.mxu0 0.0
    %829 = vmatprep.mubr.f32.mxu0 0.0
    %830 = vmatmul.mubr.f32.gmra.mrb[0].mxu0 %v763
    %v831 = vpop.f32.mrb[0].mxu0
    %v832 = vadd.f32 0.0, %v831
    %v833 = vpop.f32.mrb[0].mxu0
    %834 = vdwg.mxu0
    %v835 = vadd.f32 %v308, %v832
    %v836 = vtanh.pop %v835
    %v837 = vxor.u32 %v835, 2147483648
    %v838 = vmul.f32 %v837, 1.442695
    %v839 = vpow.pop %v838
    %v840 = vadd.f32 %v839, 1.0
    %v841 = vrcp.pop %v840
    %v842 = vmul.f32 1.0, %v841
    %v843 = vsel %vm353, %v836, %v842
    %v844 = vmul.f32 %v843, %v649
    %846 = vrot.lane.b32.xlu0 %v843, 64
    %v847 = vpop.permute.xlu0 %846
    %v849 = vmul.f32 %v843, %v847
    %851 = vrot.lane.b32.xlu0 %v849, 32
    %v852 = vpop.permute.xlu0 %851
    %v854 = vadd.f32 %v844, %v852
    %v855 = vtanh.pop %v854
    %857 = vrot.lane.b32.xlu0 %v855, 64
    %v858 = vpop.permute.xlu0 %857
    %v860 = vmul.f32 %v843, %v858
    %862 = vrot.lane.b32.xlu0 %v860, 32
    %v863 = vpop.permute.xlu0 %862
    %866 = vrot.lane.b32.xlu0 %v762, 64
    %v867 = vpop.permute.xlu0 %866
    %v869 = vsel %vm354, %v863, %v867
    %v871 = vsel %vm459, %v869, 0
    %873 = vmatprep.subr.mxu0 0.0
    %874 = vmatpush1.msra.mxu0 %v340
    %875 = vmatprep.subr.mxu0 0.0
    %876 = vmatpush1.msra.mxu0 %v341
    %877 = vmatprep.subr.mxu0 0.0
    %878 = vmatpush1.msra.mxu0 %v342
    %879 = vmatprep.subr.mxu0 0.0
    %880 = vmatpush1.msra.mxu0 %v343
    %881 = vmatprep.subr.mxu0 0.0
    %882 = vmatpush1.msra.mxu0 %v344
    %883 = vmatprep.subr.mxu0 0.0
    %884 = vmatpush1.msra.mxu0 %v345
    %885 = vmatprep.subr.mxu0 0.0
    %886 = vmatpush1.msra.mxu0 %v346
    %887 = vmatprep.subr.mxu0 0.0
    %888 = vmatpush1.msra.mxu0 %v347
    %889 = vmatprep.subr.mxu0 0.0
    %890 = vmatpush1.msra.mxu0 0.0
    %891 = vmatprep.subr.mxu0 0.0
    %892 = vmatpush1.msra.mxu0 0.0
    %893 = vmatprep.subr.mxu0 0.0
    %894 = vmatpush1.msra.mxu0 0.0
    %895 = vmatprep.subr.mxu0 0.0
    %896 = vmatpush1.msra.mxu0 0.0
    %897 = vmatprep.subr.mxu0 0.0
    %898 = vmatpush1.msra.mxu0 0.0
    %899 = vmatprep.subr.mxu0 0.0
    %900 = vmatpush1.msra.mxu0 0.0
    %901 = vmatprep.subr.mxu0 0.0
    %902 = vmatpush1.msra.mxu0 0.0
    %903 = vmatprep.subr.mxu0 0.0
    %904 = vmatpush1.msra.mxu0 0.0
    %905 = vmatprep.subr.mxu0 0.0
    %906 = vmatpush1.msra.mxu0 0.0
    %907 = vmatprep.subr.mxu0 0.0
    %908 = vmatpush1.msra.mxu0 0.0
    %909 = vmatprep.subr.mxu0 0.0
    %910 = vmatpush1.msra.mxu0 0.0
    %911 = vmatprep.subr.mxu0 0.0
    %912 = vmatpush1.msra.mxu0 0.0
    %913 = vmatprep.subr.mxu0 0.0
    %914 = vmatpush1.msra.mxu0 0.0
    %915 = vmatprep.subr.mxu0 0.0
    %916 = vmatpush1.msra.mxu0 0.0
    %917 = vmatprep.subr.mxu0 0.0
    %918 = vmatpush1.msra.mxu0 0.0
    %919 = vmatprep.subr.mxu0 0.0
    %920 = vmatpush1.msra.mxu0 0.0
    %921 = vmatprep.subr.mxu0 0.0
    %922 = vmatpush1.msra.mxu0 0.0
    %923 = vmatprep.subr.mxu0 0.0
    %924 = vmatpush1.msra.mxu0 0.0
    %925 = vmatprep.subr.mxu0 0.0
    %926 = vmatpush1.msra.mxu0 0.0
    %927 = vmatprep.subr.mxu0 0.0
    %928 = vmatpush1.msra.mxu0 0.0
    %929 = vmatprep.subr.mxu0 0.0
    %930 = vmatpush1.msra.mxu0 0.0
    %931 = vmatprep.subr.mxu0 0.0
    %932 = vmatpush1.msra.mxu0 0.0
    %933 = vmatprep.subr.mxu0 0.0
    %934 = vmatpush1.msra.mxu0 0.0
    %935 = vmatprep.subr.mxu0 0.0
    %936 = vmatpush1.msra.mxu0 0.0
    %937 = vmatprep.mubr.f32.mxu0 0.0
    %938 = vmatmul.mubr.f32.gmra.mrb[0].mxu0 %v871
    %v939 = vpop.f32.mrb[0].mxu0
    %v940 = vadd.f32 %v348, %v939
    %v941 = vpop.f32.mrb[0].mxu0
    %942 = vdwg.mxu0
    %v943 = vtanh.pop %v940
    %v944 = vxor.u32 %v940, 2147483648
    %v945 = vmul.f32 %v944, 1.442695
    %v946 = vpow.pop %v945
    %v947 = vadd.f32 %v946, 1.0
    %v948 = vrcp.pop %v947
    %v949 = vmul.f32 1.0, %v948
    %v950 = vsel %vm353, %v943, %v949
    %v951 = vmul.f32 %v950, %v756
    %953 = vrot.lane.b32.xlu0 %v950, 64
    %v954 = vpop.permute.xlu0 %953
    %v956 = vmul.f32 %v950, %v954
    %958 = vrot.lane.b32.xlu0 %v956, 32
    %v959 = vpop.permute.xlu0 %958
    %v961 = vadd.f32 %v951, %v959
    %v962 = vtanh.pop %v961
    %964 = vrot.lane.b32.xlu0 %v962, 64
    %v965 = vpop.permute.xlu0 %964
    %v967 = vmul.f32 %v950, %v965
    %v968 = vsel %vm354, %v863, 0
    %970 = vmatprep.subr.mxu0 0.0
    %971 = vmatpush1.msra.mxu0 %v336
    %972 = vmatprep.subr.mxu0 0.0
    %973 = vmatpush1.msra.mxu0 %v337
    %974 = vmatprep.subr.mxu0 0.0
    %975 = vmatpush1.msra.mxu0 %v338
    %976 = vmatprep.subr.mxu0 0.0
    %977 = vmatpush1.msra.mxu0 %v339
    %978 = vmatprep.subr.mxu0 0.0
    %979 = vmatpush1.msra.mxu0 0.0
    %980 = vmatprep.subr.mxu0 0.0
    %981 = vmatpush1.msra.mxu0 0.0
    %982 = vmatprep.subr.mxu0 0.0
    %983 = vmatpush1.msra.mxu0 0.0
    %984 = vmatprep.subr.mxu0 0.0
    %985 = vmatpush1.msra.mxu0 0.0
    %986 = vmatprep.subr.mxu0 0.0
    %987 = vmatpush1.msra.mxu0 0.0
    %988 = vmatprep.subr.mxu0 0.0
    %989 = vmatpush1.msra.mxu0 0.0
    %990 = vmatprep.subr.mxu0 0.0
    %991 = vmatpush1.msra.mxu0 0.0
    %992 = vmatprep.subr.mxu0 0.0
    %993 = vmatpush1.msra.mxu0 0.0
    %994 = vmatprep.subr.mxu0 0.0
    %995 = vmatpush1.msra.mxu0 0.0
    %996 = vmatprep.subr.mxu0 0.0
    %997 = vmatpush1.msra.mxu0 0.0
    %998 = vmatprep.subr.mxu0 0.0
    %999 = vmatpush1.msra.mxu0 0.0
    %1000 = vmatprep.subr.mxu0 0.0
    %1001 = vmatpush1.msra.mxu0 0.0
    %1002 = vmatprep.subr.mxu0 0.0
    %1003 = vmatpush1.msra.mxu0 0.0
    %1004 = vmatprep.subr.mxu0 0.0
    %1005 = vmatpush1.msra.mxu0 0.0
    %1006 = vmatprep.subr.mxu0 0.0
    %1007 = vmatpush1.msra.mxu0 0.0
    %1008 = vmatprep.subr.mxu0 0.0
    %1009 = vmatpush1.msra.mxu0 0.0
    %1010 = vmatprep.subr.mxu0 0.0
    %1011 = vmatpush1.msra.mxu0 0.0
    %1012 = vmatprep.subr.mxu0 0.0
    %1013 = vmatpush1.msra.mxu0 0.0
    %1014 = vmatprep.subr.mxu0 0.0
    %1015 = vmatpush1.msra.mxu0 0.0
    %1016 = vmatprep.subr.mxu0 0.0
    %1017 = vmatpush1.msra.mxu0 0.0
    %1018 = vmatprep.subr.mxu0 0.0
    %1019 = vmatpush1.msra.mxu0 0.0
    %1020 = vmatprep.subr.mxu0 0.0
    %1021 = vmatpush1.msra.mxu0 0.0
    %1022 = vmatprep.subr.mxu0 0.0
    %1023 = vmatpush1.msra.mxu0 0.0
    %1024 = vmatprep.subr.mxu0 0.0
    %1025 = vmatpush1.msra.mxu0 0.0
    %1026 = vmatprep.subr.mxu0 0.0
    %1027 = vmatpush1.msra.mxu0 0.0
    %1028 = vmatprep.subr.mxu0 0.0
    %1029 = vmatpush1.msra.mxu0 0.0
    %1030 = vmatprep.subr.mxu0 0.0
    %1031 = vmatpush1.msra.mxu0 0.0
    %1032 = vmatprep.subr.mxu0 0.0
    %1033 = vmatpush1.msra.mxu0 0.0
    %1034 = vmatprep.mubr.f32.mxu0 0.0
    %1035 = vmatmul.mubr.f32.gmra.mrb[0].mxu0 %v968
    %v1036 = vpop.f32.mrb[0].mxu0
    %v1037 = vadd.f32 0.0, %v1036
    %v1038 = vpop.f32.mrb[0].mxu0
    %1039 = vdwg.mxu0
    %v1040 = vadd.f32 %v313, %v1037
    %v1041 = vtanh.pop %v1040
    %v1042 = vxor.u32 %v1040, 2147483648
    %v1043 = vmul.f32 %v1042, 1.442695
    %v1044 = vpow.pop %v1043
    %v1045 = vadd.f32 %v1044, 1.0
    %v1046 = vrcp.pop %v1045
    %v1047 = vmul.f32 1.0, %v1046
    %v1048 = vsel %vm353, %v1041, %v1047
    %v1049 = vmul.f32 %v1048, %v854
    %1051 = vrot.lane.b32.xlu0 %v1048, 64
    %v1052 = vpop.permute.xlu0 %1051
    %v1054 = vmul.f32 %v1048, %v1052
    %1056 = vrot.lane.b32.xlu0 %v1054, 32
    %v1057 = vpop.permute.xlu0 %1056
    %v1059 = vadd.f32 %v1049, %v1057
    %v1060 = vtanh.pop %v1059
    %1062 = vrot.lane.b32.xlu0 %v1060, 64
    %v1063 = vpop.permute.xlu0 %1062
    %v1065 = vmul.f32 %v1048, %v1063
    %1067 = vrot.lane.b32.xlu0 %v1065, 32
    %v1068 = vpop.permute.xlu0 %1067
    %1071 = vrot.lane.b32.xlu0 %v967, 64
    %v1072 = vpop.permute.xlu0 %1071
    %v1074 = vsel %vm354, %v1068, %v1072
    %v1076 = vsel %vm459, %v1074, 0
    %1078 = vmatprep.subr.mxu0 0.0
    %1079 = vmatpush1.msra.mxu0 %v340
    %1080 = vmatprep.subr.mxu0 0.0
    %1081 = vmatpush1.msra.mxu0 %v341
    %1082 = vmatprep.subr.mxu0 0.0
    %1083 = vmatpush1.msra.mxu0 %v342
    %1084 = vmatprep.subr.mxu0 0.0
    %1085 = vmatpush1.msra.mxu0 %v343
    %1086 = vmatprep.subr.mxu0 0.0
    %1087 = vmatpush1.msra.mxu0 %v344
    %1088 = vmatprep.subr.mxu0 0.0
    %1089 = vmatpush1.msra.mxu0 %v345
    %1090 = vmatprep.subr.mxu0 0.0
    %1091 = vmatpush1.msra.mxu0 %v346
    %1092 = vmatprep.subr.mxu0 0.0
    %1093 = vmatpush1.msra.mxu0 %v347
    %1094 = vmatprep.subr.mxu0 0.0
    %1095 = vmatpush1.msra.mxu0 0.0
    %1096 = vmatprep.subr.mxu0 0.0
    %1097 = vmatpush1.msra.mxu0 0.0
    %1098 = vmatprep.subr.mxu0 0.0
    %1099 = vmatpush1.msra.mxu0 0.0
    %1100 = vmatprep.subr.mxu0 0.0
    %1101 = vmatpush1.msra.mxu0 0.0
    %1102 = vmatprep.subr.mxu0 0.0
    %1103 = vmatpush1.msra.mxu0 0.0
    %1104 = vmatprep.subr.mxu0 0.0
    %1105 = vmatpush1.msra.mxu0 0.0
    %1106 = vmatprep.subr.mxu0 0.0
    %1107 = vmatpush1.msra.mxu0 0.0
    %1108 = vmatprep.subr.mxu0 0.0
    %1109 = vmatpush1.msra.mxu0 0.0
    %1110 = vmatprep.subr.mxu0 0.0
    %1111 = vmatpush1.msra.mxu0 0.0
    %1112 = vmatprep.subr.mxu0 0.0
    %1113 = vmatpush1.msra.mxu0 0.0
    %1114 = vmatprep.subr.mxu0 0.0
    %1115 = vmatpush1.msra.mxu0 0.0
    %1116 = vmatprep.subr.mxu0 0.0
    %1117 = vmatpush1.msra.mxu0 0.0
    %1118 = vmatprep.subr.mxu0 0.0
    %1119 = vmatpush1.msra.mxu0 0.0
    %1120 = vmatprep.subr.mxu0 0.0
    %1121 = vmatpush1.msra.mxu0 0.0
    %1122 = vmatprep.subr.mxu0 0.0
    %1123 = vmatpush1.msra.mxu0 0.0
    %1124 = vmatprep.subr.mxu0 0.0
    %1125 = vmatpush1.msra.mxu0 0.0
    %1126 = vmatprep.subr.mxu0 0.0
    %1127 = vmatpush1.msra.mxu0 0.0
    %1128 = vmatprep.subr.mxu0 0.0
    %1129 = vmatpush1.msra.mxu0 0.0
    %1130 = vmatprep.subr.mxu0 0.0
    %1131 = vmatpush1.msra.mxu0 0.0
    %1132 = vmatprep.subr.mxu0 0.0
    %1133 = vmatpush1.msra.mxu0 0.0
    %1134 = vmatprep.subr.mxu0 0.0
    %1135 = vmatpush1.msra.mxu0 0.0
    %1136 = vmatprep.subr.mxu0 0.0
    %1137 = vmatpush1.msra.mxu0 0.0
    %1138 = vmatprep.subr.mxu0 0.0
    %1139 = vmatpush1.msra.mxu0 0.0
    %1140 = vmatprep.subr.mxu0 0.0
    %1141 = vmatpush1.msra.mxu0 0.0
    %1142 = vmatprep.mubr.f32.mxu0 0.0
    %1143 = vmatmul.mubr.f32.gmra.mrb[0].mxu0 %v1076
    %v1144 = vpop.f32.mrb[0].mxu0
    %v1145 = vadd.f32 %v348, %v1144
    %v1146 = vpop.f32.mrb[0].mxu0
    %1147 = vdwg.mxu0
    %v1148 = vtanh.pop %v1145
    %v1149 = vxor.u32 %v1145, 2147483648
    %v1150 = vmul.f32 %v1149, 1.442695
    %v1151 = vpow.pop %v1150
    %v1152 = vadd.f32 %v1151, 1.0
    %v1153 = vrcp.pop %v1152
    %v1154 = vmul.f32 1.0, %v1153
    %v1155 = vsel %vm353, %v1148, %v1154
    %v1156 = vmul.f32 %v1155, %v961
    %1158 = vrot.lane.b32.xlu0 %v1155, 64
    %v1159 = vpop.permute.xlu0 %1158
    %v1161 = vmul.f32 %v1155, %v1159
    %1163 = vrot.lane.b32.xlu0 %v1161, 32
    %v1164 = vpop.permute.xlu0 %1163
    %v1166 = vadd.f32 %v1156, %v1164
    %v1167 = vtanh.pop %v1166
    %1169 = vrot.lane.b32.xlu0 %v1167, 64
    %v1170 = vpop.permute.xlu0 %1169
    %v1172 = vmul.f32 %v1155, %v1170
    %v1173 = vsel %vm354, %v1068, 0
    %1175 = vmatprep.subr.mxu0 0.0
    %1176 = vmatpush1.msra.mxu0 %v336
    %1177 = vmatprep.subr.mxu0 0.0
    %1178 = vmatpush1.msra.mxu0 %v337
    %1179 = vmatprep.subr.mxu0 0.0
    %1180 = vmatpush1.msra.mxu0 %v338
    %1181 = vmatprep.subr.mxu0 0.0
    %1182 = vmatpush1.msra.mxu0 %v339
    %1183 = vmatprep.subr.mxu0 0.0
    %1184 = vmatpush1.msra.mxu0 0.0
    %1185 = vmatprep.subr.mxu0 0.0
    %1186 = vmatpush1.msra.mxu0 0.0
    %1187 = vmatprep.subr.mxu0 0.0
    %1188 = vmatpush1.msra.mxu0 0.0
    %1189 = vmatprep.subr.mxu0 0.0
    %1190 = vmatpush1.msra.mxu0 0.0
    %1191 = vmatprep.subr.mxu0 0.0
    %1192 = vmatpush1.msra.mxu0 0.0
    %1193 = vmatprep.subr.mxu0 0.0
    %1194 = vmatpush1.msra.mxu0 0.0
    %1195 = vmatprep.subr.mxu0 0.0
    %1196 = vmatpush1.msra.mxu0 0.0
    %1197 = vmatprep.subr.mxu0 0.0
    %1198 = vmatpush1.msra.mxu0 0.0
    %1199 = vmatprep.subr.mxu0 0.0
    %1200 = vmatpush1.msra.mxu0 0.0
    %1201 = vmatprep.subr.mxu0 0.0
    %1202 = vmatpush1.msra.mxu0 0.0
    %1203 = vmatprep.subr.mxu0 0.0
    %1204 = vmatpush1.msra.mxu0 0.0
    %1205 = vmatprep.subr.mxu0 0.0
    %1206 = vmatpush1.msra.mxu0 0.0
    %1207 = vmatprep.subr.mxu0 0.0
    %1208 = vmatpush1.msra.mxu0 0.0
    %1209 = vmatprep.subr.mxu0 0.0
    %1210 = vmatpush1.msra.mxu0 0.0
    %1211 = vmatprep.subr.mxu0 0.0
    %1212 = vmatpush1.msra.mxu0 0.0
    %1213 = vmatprep.subr.mxu0 0.0
    %1214 = vmatpush1.msra.mxu0 0.0
    %1215 = vmatprep.subr.mxu0 0.0
    %1216 = vmatpush1.msra.mxu0 0.0
    %1217 = vmatprep.subr.mxu0 0.0
    %1218 = vmatpush1.msra.mxu0 0.0
    %1219 = vmatprep.subr.mxu0 0.0
    %1220 = vmatpush1.msra.mxu0 0.0
    %1221 = vmatprep.subr.mxu0 0.0
    %1222 = vmatpush1.msra.mxu0 0.0
    %1223 = vmatprep.subr.mxu0 0.0
    %1224 = vmatpush1.msra.mxu0 0.0
    %1225 = vmatprep.subr.mxu0 0.0
    %1226 = vmatpush1.msra.mxu0 0.0
    %1227 = vmatprep.subr.mxu0 0.0
    %1228 = vmatpush1.msra.mxu0 0.0
    %1229 = vmatprep.subr.mxu0 0.0
    %1230 = vmatpush1.msra.mxu0 0.0
    %1231 = vmatprep.subr.mxu0 0.0
    %1232 = vmatpush1.msra.mxu0 0.0
    %1233 = vmatprep.subr.mxu0 0.0
    %1234 = vmatpush1.msra.mxu0 0.0
    %1235 = vmatprep.subr.mxu0 0.0
    %1236 = vmatpush1.msra.mxu0 0.0
    %1237 = vmatprep.subr.mxu0 0.0
    %1238 = vmatpush1.msra.mxu0 0.0
    %1239 = vmatprep.mubr.f32.mxu0 0.0
    %1240 = vmatmul.mubr.f32.gmra.mrb[0].mxu0 %v1173
    %v1241 = vpop.f32.mrb[0].mxu0
    %v1242 = vadd.f32 0.0, %v1241
    %v1243 = vpop.f32.mrb[0].mxu0
    %1244 = vdwg.mxu0
    %v1245 = vadd.f32 %v318, %v1242
    %v1246 = vtanh.pop %v1245
    %v1247 = vxor.u32 %v1245, 2147483648
    %v1248 = vmul.f32 %v1247, 1.442695
    %v1249 = vpow.pop %v1248
    %v1250 = vadd.f32 %v1249, 1.0
    %v1251 = vrcp.pop %v1250
    %v1252 = vmul.f32 1.0, %v1251
    %v1253 = vsel %vm353, %v1246, %v1252
    %v1254 = vmul.f32 %v1253, %v1059
    %1256 = vrot.lane.b32.xlu0 %v1253, 64
    %v1257 = vpop.permute.xlu0 %1256
    %v1259 = vmul.f32 %v1253, %v1257
    %1261 = vrot.lane.b32.xlu0 %v1259, 32
    %v1262 = vpop.permute.xlu0 %1261
    %v1264 = vadd.f32 %v1254, %v1262
    %v1265 = vtanh.pop %v1264
    %1267 = vrot.lane.b32.xlu0 %v1265, 64
    %v1268 = vpop.permute.xlu0 %1267
    %v1270 = vmul.f32 %v1253, %v1268
    %1272 = vrot.lane.b32.xlu0 %v1270, 32
    %v1273 = vpop.permute.xlu0 %1272
    %1276 = vrot.lane.b32.xlu0 %v1172, 64
    %v1277 = vpop.permute.xlu0 %1276
    %v1279 = vsel %vm354, %v1273, %v1277
    %v1281 = vsel %vm459, %v1279, 0
    %1283 = vmatprep.subr.mxu0 0.0
    %1284 = vmatpush1.msra.mxu0 %v340
    %1285 = vmatprep.subr.mxu0 0.0
    %1286 = vmatpush1.msra.mxu0 %v341
    %1287 = vmatprep.subr.mxu0 0.0
    %1288 = vmatpush1.msra.mxu0 %v342
    %1289 = vmatprep.subr.mxu0 0.0
    %1290 = vmatpush1.msra.mxu0 %v343
    %1291 = vmatprep.subr.mxu0 0.0
    %1292 = vmatpush1.msra.mxu0 %v344
    %1293 = vmatprep.subr.mxu0 0.0
    %1294 = vmatpush1.msra.mxu0 %v345
    %1295 = vmatprep.subr.mxu0 0.0
    %1296 = vmatpush1.msra.mxu0 %v346
    %1297 = vmatprep.subr.mxu0 0.0
    %1298 = vmatpush1.msra.mxu0 %v347
    %1299 = vmatprep.subr.mxu0 0.0
    %1300 = vmatpush1.msra.mxu0 0.0
    %1301 = vmatprep.subr.mxu0 0.0
    %1302 = vmatpush1.msra.mxu0 0.0
    %1303 = vmatprep.subr.mxu0 0.0
    %1304 = vmatpush1.msra.mxu0 0.0
    %1305 = vmatprep.subr.mxu0 0.0
    %1306 = vmatpush1.msra.mxu0 0.0
    %1307 = vmatprep.subr.mxu0 0.0
    %1308 = vmatpush1.msra.mxu0 0.0
    %1309 = vmatprep.subr.mxu0 0.0
    %1310 = vmatpush1.msra.mxu0 0.0
    %1311 = vmatprep.subr.mxu0 0.0
    %1312 = vmatpush1.msra.mxu0 0.0
    %1313 = vmatprep.subr.mxu0 0.0
    %1314 = vmatpush1.msra.mxu0 0.0
    %1315 = vmatprep.subr.mxu0 0.0
    %1316 = vmatpush1.msra.mxu0 0.0
    %1317 = vmatprep.subr.mxu0 0.0
    %1318 = vmatpush1.msra.mxu0 0.0
    %1319 = vmatprep.subr.mxu0 0.0
    %1320 = vmatpush1.msra.mxu0 0.0
    %1321 = vmatprep.subr.mxu0 0.0
    %1322 = vmatpush1.msra.mxu0 0.0
    %1323 = vmatprep.subr.mxu0 0.0
    %1324 = vmatpush1.msra.mxu0 0.0
    %1325 = vmatprep.subr.mxu0 0.0
    %1326 = vmatpush1.msra.mxu0 0.0
    %1327 = vmatprep.subr.mxu0 0.0
    %1328 = vmatpush1.msra.mxu0 0.0
    %1329 = vmatprep.subr.mxu0 0.0
    %1330 = vmatpush1.msra.mxu0 0.0
    %1331 = vmatprep.subr.mxu0 0.0
    %1332 = vmatpush1.msra.mxu0 0.0
    %1333 = vmatprep.subr.mxu0 0.0
    %1334 = vmatpush1.msra.mxu0 0.0
    %1335 = vmatprep.subr.mxu0 0.0
    %1336 = vmatpush1.msra.mxu0 0.0
    %1337 = vmatprep.subr.mxu0 0.0
    %1338 = vmatpush1.msra.mxu0 0.0
    %1339 = vmatprep.subr.mxu0 0.0
    %1340 = vmatpush1.msra.mxu0 0.0
    %1341 = vmatprep.subr.mxu0 0.0
    %1342 = vmatpush1.msra.mxu0 0.0
    %1343 = vmatprep.subr.mxu0 0.0
    %1344 = vmatpush1.msra.mxu0 0.0
    %1345 = vmatprep.subr.mxu0 0.0
    %1346 = vmatpush1.msra.mxu0 0.0
    %1347 = vmatprep.mubr.f32.mxu0 0.0
    %1348 = vmatmul.mubr.f32.gmra.mrb[0].mxu0 %v1281
    %v1349 = vpop.f32.mrb[0].mxu0
    %v1350 = vadd.f32 %v348, %v1349
    %v1351 = vpop.f32.mrb[0].mxu0
    %1352 = vdwg.mxu0
    %v1353 = vtanh.pop %v1350
    %v1354 = vxor.u32 %v1350, 2147483648
    %v1355 = vmul.f32 %v1354, 1.442695
    %v1356 = vpow.pop %v1355
    %v1357 = vadd.f32 %v1356, 1.0
    %v1358 = vrcp.pop %v1357
    %v1359 = vmul.f32 1.0, %v1358
    %v1360 = vsel %vm353, %v1353, %v1359
    %v1361 = vmul.f32 %v1360, %v1166
    %1363 = vrot.lane.b32.xlu0 %v1360, 64
    %v1364 = vpop.permute.xlu0 %1363
    %v1366 = vmul.f32 %v1360, %v1364
    %1368 = vrot.lane.b32.xlu0 %v1366, 32
    %v1369 = vpop.permute.xlu0 %1368
    %v1371 = vadd.f32 %v1361, %v1369
    %v1372 = vtanh.pop %v1371
    %1374 = vrot.lane.b32.xlu0 %v1372, 64
    %v1375 = vpop.permute.xlu0 %1374
    %v1377 = vmul.f32 %v1360, %v1375
    %v1378 = vsel %vm354, %v1273, 0
    %1380 = vmatprep.subr.mxu0 0.0
    %1381 = vmatpush1.msra.mxu0 %v336
    %1382 = vmatprep.subr.mxu0 0.0
    %1383 = vmatpush1.msra.mxu0 %v337
    %1384 = vmatprep.subr.mxu0 0.0
    %1385 = vmatpush1.msra.mxu0 %v338
    %1386 = vmatprep.subr.mxu0 0.0
    %1387 = vmatpush1.msra.mxu0 %v339
    %1388 = vmatprep.subr.mxu0 0.0
    %1389 = vmatpush1.msra.mxu0 0.0
    %1390 = vmatprep.subr.mxu0 0.0
    %1391 = vmatpush1.msra.mxu0 0.0
    %1392 = vmatprep.subr.mxu0 0.0
    %1393 = vmatpush1.msra.mxu0 0.0
    %1394 = vmatprep.subr.mxu0 0.0
    %1395 = vmatpush1.msra.mxu0 0.0
    %1396 = vmatprep.subr.mxu0 0.0
    %1397 = vmatpush1.msra.mxu0 0.0
    %1398 = vmatprep.subr.mxu0 0.0
    %1399 = vmatpush1.msra.mxu0 0.0
    %1400 = vmatprep.subr.mxu0 0.0
    %1401 = vmatpush1.msra.mxu0 0.0
    %1402 = vmatprep.subr.mxu0 0.0
    %1403 = vmatpush1.msra.mxu0 0.0
    %1404 = vmatprep.subr.mxu0 0.0
    %1405 = vmatpush1.msra.mxu0 0.0
    %1406 = vmatprep.subr.mxu0 0.0
    %1407 = vmatpush1.msra.mxu0 0.0
    %1408 = vmatprep.subr.mxu0 0.0
    %1409 = vmatpush1.msra.mxu0 0.0
    %1410 = vmatprep.subr.mxu0 0.0
    %1411 = vmatpush1.msra.mxu0 0.0
    %1412 = vmatprep.subr.mxu0 0.0
    %1413 = vmatpush1.msra.mxu0 0.0
    %1414 = vmatprep.subr.mxu0 0.0
    %1415 = vmatpush1.msra.mxu0 0.0
    %1416 = vmatprep.subr.mxu0 0.0
    %1417 = vmatpush1.msra.mxu0 0.0
    %1418 = vmatprep.subr.mxu0 0.0
    %1419 = vmatpush1.msra.mxu0 0.0
    %1420 = vmatprep.subr.mxu0 0.0
    %1421 = vmatpush1.msra.mxu0 0.0
    %1422 = vmatprep.subr.mxu0 0.0
    %1423 = vmatpush1.msra.mxu0 0.0
    %1424 = vmatprep.subr.mxu0 0.0
    %1425 = vmatpush1.msra.mxu0 0.0
    %1426 = vmatprep.subr.mxu0 0.0
    %1427 = vmatpush1.msra.mxu0 0.0
    %1428 = vmatprep.subr.mxu0 0.0
    %1429 = vmatpush1.msra.mxu0 0.0
    %1430 = vmatprep.subr.mxu0 0.0
    %1431 = vmatpush1.msra.mxu0 0.0
    %1432 = vmatprep.subr.mxu0 0.0
    %1433 = vmatpush1.msra.mxu0 0.0
    %1434 = vmatprep.subr.mxu0 0.0
    %1435 = vmatpush1.msra.mxu0 0.0
    %1436 = vmatprep.subr.mxu0 0.0
    %1437 = vmatpush1.msra.mxu0 0.0
    %1438 = vmatprep.subr.mxu0 0.0
    %1439 = vmatpush1.msra.mxu0 0.0
    %1440 = vmatprep.subr.mxu0 0.0
    %1441 = vmatpush1.msra.mxu0 0.0
    %1442 = vmatprep.subr.mxu0 0.0
    %1443 = vmatpush1.msra.mxu0 0.0
    %1444 = vmatprep.mubr.f32.mxu0 0.0
    %1445 = vmatmul.mubr.f32.gmra.mrb[0].mxu0 %v1378
    %v1446 = vpop.f32.mrb[0].mxu0
    %v1447 = vadd.f32 0.0, %v1446
    %v1448 = vpop.f32.mrb[0].mxu0
    %1449 = vdwg.mxu0
    %v1450 = vadd.f32 %v323, %v1447
    %v1451 = vtanh.pop %v1450
    %v1452 = vxor.u32 %v1450, 2147483648
    %v1453 = vmul.f32 %v1452, 1.442695
    %v1454 = vpow.pop %v1453
    %v1455 = vadd.f32 %v1454, 1.0
    %v1456 = vrcp.pop %v1455
    %v1457 = vmul.f32 1.0, %v1456
    %v1458 = vsel %vm353, %v1451, %v1457
    %v1459 = vmul.f32 %v1458, %v1264
    %1461 = vrot.lane.b32.xlu0 %v1458, 64
    %v1462 = vpop.permute.xlu0 %1461
    %v1464 = vmul.f32 %v1458, %v1462
    %1466 = vrot.lane.b32.xlu0 %v1464, 32
    %v1467 = vpop.permute.xlu0 %1466
    %v1469 = vadd.f32 %v1459, %v1467
    %v1470 = vtanh.pop %v1469
    %1472 = vrot.lane.b32.xlu0 %v1470, 64
    %v1473 = vpop.permute.xlu0 %1472
    %v1475 = vmul.f32 %v1458, %v1473
    %1477 = vrot.lane.b32.xlu0 %v1475, 32
    %v1478 = vpop.permute.xlu0 %1477
    %1481 = vrot.lane.b32.xlu0 %v1377, 64
    %v1482 = vpop.permute.xlu0 %1481
    %v1484 = vsel %vm354, %v1478, %v1482
    %v1486 = vsel %vm459, %v1484, 0
    %1488 = vmatprep.subr.mxu0 0.0
    %1489 = vmatpush1.msra.mxu0 %v340
    %1490 = vmatprep.subr.mxu0 0.0
    %1491 = vmatpush1.msra.mxu0 %v341
    %1492 = vmatprep.subr.mxu0 0.0
    %1493 = vmatpush1.msra.mxu0 %v342
    %1494 = vmatprep.subr.mxu0 0.0
    %1495 = vmatpush1.msra.mxu0 %v343
    %1496 = vmatprep.subr.mxu0 0.0
    %1497 = vmatpush1.msra.mxu0 %v344
    %1498 = vmatprep.subr.mxu0 0.0
    %1499 = vmatpush1.msra.mxu0 %v345
    %1500 = vmatprep.subr.mxu0 0.0
    %1501 = vmatpush1.msra.mxu0 %v346
    %1502 = vmatprep.subr.mxu0 0.0
    %1503 = vmatpush1.msra.mxu0 %v347
    %1504 = vmatprep.subr.mxu0 0.0
    %1505 = vmatpush1.msra.mxu0 0.0
    %1506 = vmatprep.subr.mxu0 0.0
    %1507 = vmatpush1.msra.mxu0 0.0
    %1508 = vmatprep.subr.mxu0 0.0
    %1509 = vmatpush1.msra.mxu0 0.0
    %1510 = vmatprep.subr.mxu0 0.0
    %1511 = vmatpush1.msra.mxu0 0.0
    %1512 = vmatprep.subr.mxu0 0.0
    %1513 = vmatpush1.msra.mxu0 0.0
    %1514 = vmatprep.subr.mxu0 0.0
    %1515 = vmatpush1.msra.mxu0 0.0
    %1516 = vmatprep.subr.mxu0 0.0
    %1517 = vmatpush1.msra.mxu0 0.0
    %1518 = vmatprep.subr.mxu0 0.0
    %1519 = vmatpush1.msra.mxu0 0.0
    %1520 = vmatprep.subr.mxu0 0.0
    %1521 = vmatpush1.msra.mxu0 0.0
    %1522 = vmatprep.subr.mxu0 0.0
    %1523 = vmatpush1.msra.mxu0 0.0
    %1524 = vmatprep.subr.mxu0 0.0
    %1525 = vmatpush1.msra.mxu0 0.0
    %1526 = vmatprep.subr.mxu0 0.0
    %1527 = vmatpush1.msra.mxu0 0.0
    %1528 = vmatprep.subr.mxu0 0.0
    %1529 = vmatpush1.msra.mxu0 0.0
    %1530 = vmatprep.subr.mxu0 0.0
    %1531 = vmatpush1.msra.mxu0 0.0
    %1532 = vmatprep.subr.mxu0 0.0
    %1533 = vmatpush1.msra.mxu0 0.0
    %1534 = vmatprep.subr.mxu0 0.0
    %1535 = vmatpush1.msra.mxu0 0.0
    %1536 = vmatprep.subr.mxu0 0.0
    %1537 = vmatpush1.msra.mxu0 0.0
    %1538 = vmatprep.subr.mxu0 0.0
    %1539 = vmatpush1.msra.mxu0 0.0
    %1540 = vmatprep.subr.mxu0 0.0
    %1541 = vmatpush1.msra.mxu0 0.0
    %1542 = vmatprep.subr.mxu0 0.0
    %1543 = vmatpush1.msra.mxu0 0.0
    %1544 = vmatprep.subr.mxu0 0.0
    %1545 = vmatpush1.msra.mxu0 0.0
    %1546 = vmatprep.subr.mxu0 0.0
    %1547 = vmatpush1.msra.mxu0 0.0
    %1548 = vmatprep.subr.mxu0 0.0
    %1549 = vmatpush1.msra.mxu0 0.0
    %1550 = vmatprep.subr.mxu0 0.0
    %1551 = vmatpush1.msra.mxu0 0.0
    %1552 = vmatprep.mubr.f32.mxu0 0.0
    %1553 = vmatmul.mubr.f32.gmra.mrb[0].mxu0 %v1486
    %v1554 = vpop.f32.mrb[0].mxu0
    %v1555 = vadd.f32 %v348, %v1554
    %v1556 = vpop.f32.mrb[0].mxu0
    %1557 = vdwg.mxu0
    %v1558 = vtanh.pop %v1555
    %v1559 = vxor.u32 %v1555, 2147483648
    %v1560 = vmul.f32 %v1559, 1.442695
    %v1561 = vpow.pop %v1560
    %v1562 = vadd.f32 %v1561, 1.0
    %v1563 = vrcp.pop %v1562
    %v1564 = vmul.f32 1.0, %v1563
    %v1565 = vsel %vm353, %v1558, %v1564
    %v1566 = vmul.f32 %v1565, %v1371
    %1568 = vrot.lane.b32.xlu0 %v1565, 64
    %v1569 = vpop.permute.xlu0 %1568
    %v1571 = vmul.f32 %v1565, %v1569
    %1573 = vrot.lane.b32.xlu0 %v1571, 32
    %v1574 = vpop.permute.xlu0 %1573
    %v1576 = vadd.f32 %v1566, %v1574
    %v1577 = vtanh.pop %v1576
    %1579 = vrot.lane.b32.xlu0 %v1577, 64
    %v1580 = vpop.permute.xlu0 %1579
    %v1582 = vmul.f32 %v1565, %v1580
    %v1583 = vsel %vm354, %v1478, 0
    %1585 = vmatprep.subr.mxu0 0.0
    %1586 = vmatpush1.msra.mxu0 %v336
    %1587 = vmatprep.subr.mxu0 0.0
    %1588 = vmatpush1.msra.mxu0 %v337
    %1589 = vmatprep.subr.mxu0 0.0
    %1590 = vmatpush1.msra.mxu0 %v338
    %1591 = vmatprep.subr.mxu0 0.0
    %1592 = vmatpush1.msra.mxu0 %v339
    %1593 = vmatprep.subr.mxu0 0.0
    %1594 = vmatpush1.msra.mxu0 0.0
    %1595 = vmatprep.subr.mxu0 0.0
    %1596 = vmatpush1.msra.mxu0 0.0
    %1597 = vmatprep.subr.mxu0 0.0
    %1598 = vmatpush1.msra.mxu0 0.0
    %1599 = vmatprep.subr.mxu0 0.0
    %1600 = vmatpush1.msra.mxu0 0.0
    %1601 = vmatprep.subr.mxu0 0.0
    %1602 = vmatpush1.msra.mxu0 0.0
    %1603 = vmatprep.subr.mxu0 0.0
    %1604 = vmatpush1.msra.mxu0 0.0
    %1605 = vmatprep.subr.mxu0 0.0
    %1606 = vmatpush1.msra.mxu0 0.0
    %1607 = vmatprep.subr.mxu0 0.0
    %1608 = vmatpush1.msra.mxu0 0.0
    %1609 = vmatprep.subr.mxu0 0.0
    %1610 = vmatpush1.msra.mxu0 0.0
    %1611 = vmatprep.subr.mxu0 0.0
    %1612 = vmatpush1.msra.mxu0 0.0
    %1613 = vmatprep.subr.mxu0 0.0
    %1614 = vmatpush1.msra.mxu0 0.0
    %1615 = vmatprep.subr.mxu0 0.0
    %1616 = vmatpush1.msra.mxu0 0.0
    %1617 = vmatprep.subr.mxu0 0.0
    %1618 = vmatpush1.msra.mxu0 0.0
    %1619 = vmatprep.subr.mxu0 0.0
    %1620 = vmatpush1.msra.mxu0 0.0
    %1621 = vmatprep.subr.mxu0 0.0
    %1622 = vmatpush1.msra.mxu0 0.0
    %1623 = vmatprep.subr.mxu0 0.0
    %1624 = vmatpush1.msra.mxu0 0.0
    %1625 = vmatprep.subr.mxu0 0.0
    %1626 = vmatpush1.msra.mxu0 0.0
    %1627 = vmatprep.subr.mxu0 0.0
    %1628 = vmatpush1.msra.mxu0 0.0
    %1629 = vmatprep.subr.mxu0 0.0
    %1630 = vmatpush1.msra.mxu0 0.0
    %1631 = vmatprep.subr.mxu0 0.0
    %1632 = vmatpush1.msra.mxu0 0.0
    %1633 = vmatprep.subr.mxu0 0.0
    %1634 = vmatpush1.msra.mxu0 0.0
    %1635 = vmatprep.subr.mxu0 0.0
    %1636 = vmatpush1.msra.mxu0 0.0
    %1637 = vmatprep.subr.mxu0 0.0
    %1638 = vmatpush1.msra.mxu0 0.0
    %1639 = vmatprep.subr.mxu0 0.0
    %1640 = vmatpush1.msra.mxu0 0.0
    %1641 = vmatprep.subr.mxu0 0.0
    %1642 = vmatpush1.msra.mxu0 0.0
    %1643 = vmatprep.subr.mxu0 0.0
    %1644 = vmatpush1.msra.mxu0 0.0
    %1645 = vmatprep.subr.mxu0 0.0
    %1646 = vmatpush1.msra.mxu0 0.0
    %1647 = vmatprep.subr.mxu0 0.0
    %1648 = vmatpush1.msra.mxu0 0.0
    %1649 = vmatprep.mubr.f32.mxu0 0.0
    %1650 = vmatmul.mubr.f32.gmra.mrb[0].mxu0 %v1583
    %v1651 = vpop.f32.mrb[0].mxu0
    %v1652 = vadd.f32 0.0, %v1651
    %v1653 = vpop.f32.mrb[0].mxu0
    %1654 = vdwg.mxu0
    %v1655 = vadd.f32 %v328, %v1652
    %v1656 = vtanh.pop %v1655
    %v1657 = vxor.u32 %v1655, 2147483648
    %v1658 = vmul.f32 %v1657, 1.442695
    %v1659 = vpow.pop %v1658
    %v1660 = vadd.f32 %v1659, 1.0
    %v1661 = vrcp.pop %v1660
    %v1662 = vmul.f32 1.0, %v1661
    %v1663 = vsel %vm353, %v1656, %v1662
    %v1664 = vmul.f32 %v1663, %v1469
    %1666 = vrot.lane.b32.xlu0 %v1663, 64
    %v1667 = vpop.permute.xlu0 %1666
    %v1669 = vmul.f32 %v1663, %v1667
    %1671 = vrot.lane.b32.xlu0 %v1669, 32
    %v1672 = vpop.permute.xlu0 %1671
    %v1674 = vadd.f32 %v1664, %v1672
    %v1675 = vtanh.pop %v1674
    %1677 = vrot.lane.b32.xlu0 %v1675, 64
    %v1678 = vpop.permute.xlu0 %1677
    %v1680 = vmul.f32 %v1663, %v1678
    %1682 = vrot.lane.b32.xlu0 %v1680, 32
    %v1683 = vpop.permute.xlu0 %1682
    %1686 = vrot.lane.b32.xlu0 %v1582, 64
    %v1687 = vpop.permute.xlu0 %1686
    %v1689 = vsel %vm354, %v1683, %v1687
    %v1691 = vsel %vm459, %v1689, 0
    %1693 = vmatprep.subr.mxu0 0.0
    %1694 = vmatpush1.msra.mxu0 %v340
    %1695 = vmatprep.subr.mxu0 0.0
    %1696 = vmatpush1.msra.mxu0 %v341
    %1697 = vmatprep.subr.mxu0 0.0
    %1698 = vmatpush1.msra.mxu0 %v342
    %1699 = vmatprep.subr.mxu0 0.0
    %1700 = vmatpush1.msra.mxu0 %v343
    %1701 = vmatprep.subr.mxu0 0.0
    %1702 = vmatpush1.msra.mxu0 %v344
    %1703 = vmatprep.subr.mxu0 0.0
    %1704 = vmatpush1.msra.mxu0 %v345
    %1705 = vmatprep.subr.mxu0 0.0
    %1706 = vmatpush1.msra.mxu0 %v346
    %1707 = vmatprep.subr.mxu0 0.0
    %1708 = vmatpush1.msra.mxu0 %v347
    %1709 = vmatprep.subr.mxu0 0.0
    %1710 = vmatpush1.msra.mxu0 0.0
    %1711 = vmatprep.subr.mxu0 0.0
    %1712 = vmatpush1.msra.mxu0 0.0
    %1713 = vmatprep.subr.mxu0 0.0
    %1714 = vmatpush1.msra.mxu0 0.0
    %1715 = vmatprep.subr.mxu0 0.0
    %1716 = vmatpush1.msra.mxu0 0.0
    %1717 = vmatprep.subr.mxu0 0.0
    %1718 = vmatpush1.msra.mxu0 0.0
    %1719 = vmatprep.subr.mxu0 0.0
    %1720 = vmatpush1.msra.mxu0 0.0
    %1721 = vmatprep.subr.mxu0 0.0
    %1722 = vmatpush1.msra.mxu0 0.0
    %1723 = vmatprep.subr.mxu0 0.0
    %1724 = vmatpush1.msra.mxu0 0.0
    %1725 = vmatprep.subr.mxu0 0.0
    %1726 = vmatpush1.msra.mxu0 0.0
    %1727 = vmatprep.subr.mxu0 0.0
    %1728 = vmatpush1.msra.mxu0 0.0
    %1729 = vmatprep.subr.mxu0 0.0
    %1730 = vmatpush1.msra.mxu0 0.0
    %1731 = vmatprep.subr.mxu0 0.0
    %1732 = vmatpush1.msra.mxu0 0.0
    %1733 = vmatprep.subr.mxu0 0.0
    %1734 = vmatpush1.msra.mxu0 0.0
    %1735 = vmatprep.subr.mxu0 0.0
    %1736 = vmatpush1.msra.mxu0 0.0
    %1737 = vmatprep.subr.mxu0 0.0
    %1738 = vmatpush1.msra.mxu0 0.0
    %1739 = vmatprep.subr.mxu0 0.0
    %1740 = vmatpush1.msra.mxu0 0.0
    %1741 = vmatprep.subr.mxu0 0.0
    %1742 = vmatpush1.msra.mxu0 0.0
    %1743 = vmatprep.subr.mxu0 0.0
    %1744 = vmatpush1.msra.mxu0 0.0
    %1745 = vmatprep.subr.mxu0 0.0
    %1746 = vmatpush1.msra.mxu0 0.0
    %1747 = vmatprep.subr.mxu0 0.0
    %1748 = vmatpush1.msra.mxu0 0.0
    %1749 = vmatprep.subr.mxu0 0.0
    %1750 = vmatpush1.msra.mxu0 0.0
    %1751 = vmatprep.subr.mxu0 0.0
    %1752 = vmatpush1.msra.mxu0 0.0
    %1753 = vmatprep.subr.mxu0 0.0
    %1754 = vmatpush1.msra.mxu0 0.0
    %1755 = vmatprep.subr.mxu0 0.0
    %1756 = vmatpush1.msra.mxu0 0.0
    %1757 = vmatprep.mubr.f32.mxu0 0.0
    %1758 = vmatmul.mubr.f32.gmra.mrb[0].mxu0 %v1691
    %v1759 = vpop.f32.mrb[0].mxu0
    %v1760 = vadd.f32 %v348, %v1759
    %v1761 = vpop.f32.mrb[0].mxu0
    %1762 = vdwg.mxu0
    %v1763 = vtanh.pop %v1760
    %v1764 = vxor.u32 %v1760, 2147483648
    %v1765 = vmul.f32 %v1764, 1.442695
    %v1766 = vpow.pop %v1765
    %v1767 = vadd.f32 %v1766, 1.0
    %v1768 = vrcp.pop %v1767
    %v1769 = vmul.f32 1.0, %v1768
    %v1770 = vsel %vm353, %v1763, %v1769
    %v1771 = vmul.f32 %v1770, %v1576
    %1773 = vrot.lane.b32.xlu0 %v1770, 64
    %v1774 = vpop.permute.xlu0 %1773
    %v1776 = vmul.f32 %v1770, %v1774
    %1778 = vrot.lane.b32.xlu0 %v1776, 32
    %v1779 = vpop.permute.xlu0 %1778
    %v1781 = vadd.f32 %v1771, %v1779
    %v1782 = vtanh.pop %v1781
    %1784 = vrot.lane.b32.xlu0 %v1782, 64
    %v1785 = vpop.permute.xlu0 %1784
    %v1787 = vmul.f32 %v1770, %v1785
    %v1788 = vsel %vm354, %v1683, 0
    %1790 = vmatprep.subr.mxu0 0.0
    %1791 = vmatpush1.msra.mxu0 %v336
    %1792 = vmatprep.subr.mxu0 0.0
    %1793 = vmatpush1.msra.mxu0 %v337
    %1794 = vmatprep.subr.mxu0 0.0
    %1795 = vmatpush1.msra.mxu0 %v338
    %1796 = vmatprep.subr.mxu0 0.0
    %1797 = vmatpush1.msra.mxu0 %v339
    %1798 = vmatprep.subr.mxu0 0.0
    %1799 = vmatpush1.msra.mxu0 0.0
    %1800 = vmatprep.subr.mxu0 0.0
    %1801 = vmatpush1.msra.mxu0 0.0
    %1802 = vmatprep.subr.mxu0 0.0
    %1803 = vmatpush1.msra.mxu0 0.0
    %1804 = vmatprep.subr.mxu0 0.0
    %1805 = vmatpush1.msra.mxu0 0.0
    %1806 = vmatprep.subr.mxu0 0.0
    %1807 = vmatpush1.msra.mxu0 0.0
    %1808 = vmatprep.subr.mxu0 0.0
    %1809 = vmatpush1.msra.mxu0 0.0
    %1810 = vmatprep.subr.mxu0 0.0
    %1811 = vmatpush1.msra.mxu0 0.0
    %1812 = vmatprep.subr.mxu0 0.0
    %1813 = vmatpush1.msra.mxu0 0.0
    %1814 = vmatprep.subr.mxu0 0.0
    %1815 = vmatpush1.msra.mxu0 0.0
    %1816 = vmatprep.subr.mxu0 0.0
    %1817 = vmatpush1.msra.mxu0 0.0
    %1818 = vmatprep.subr.mxu0 0.0
    %1819 = vmatpush1.msra.mxu0 0.0
    %1820 = vmatprep.subr.mxu0 0.0
    %1821 = vmatpush1.msra.mxu0 0.0
    %1822 = vmatprep.subr.mxu0 0.0
    %1823 = vmatpush1.msra.mxu0 0.0
    %1824 = vmatprep.subr.mxu0 0.0
    %1825 = vmatpush1.msra.mxu0 0.0
    %1826 = vmatprep.subr.mxu0 0.0
    %1827 = vmatpush1.msra.mxu0 0.0
    %1828 = vmatprep.subr.mxu0 0.0
    %1829 = vmatpush1.msra.mxu0 0.0
    %1830 = vmatprep.subr.mxu0 0.0
    %1831 = vmatpush1.msra.mxu0 0.0
    %1832 = vmatprep.subr.mxu0 0.0
    %1833 = vmatpush1.msra.mxu0 0.0
    %1834 = vmatprep.subr.mxu0 0.0
    %1835 = vmatpush1.msra.mxu0 0.0
    %1836 = vmatprep.subr.mxu0 0.0
    %1837 = vmatpush1.msra.mxu0 0.0
    %1838 = vmatprep.subr.mxu0 0.0
    %1839 = vmatpush1.msra.mxu0 0.0
    %1840 = vmatprep.subr.mxu0 0.0
    %1841 = vmatpush1.msra.mxu0 0.0
    %1842 = vmatprep.subr.mxu0 0.0
    %1843 = vmatpush1.msra.mxu0 0.0
    %1844 = vmatprep.subr.mxu0 0.0
    %1845 = vmatpush1.msra.mxu0 0.0
    %1846 = vmatprep.subr.mxu0 0.0
    %1847 = vmatpush1.msra.mxu0 0.0
    %1848 = vmatprep.subr.mxu0 0.0
    %1849 = vmatpush1.msra.mxu0 0.0
    %1850 = vmatprep.subr.mxu0 0.0
    %1851 = vmatpush1.msra.mxu0 0.0
    %1852 = vmatprep.subr.mxu0 0.0
    %1853 = vmatpush1.msra.mxu0 0.0
    %1854 = vmatprep.mubr.f32.mxu0 0.0
    %1855 = vmatmul.mubr.f32.gmra.mrb[0].mxu0 %v1788
    %v1856 = vpop.f32.mrb[0].mxu0
    %v1857 = vadd.f32 0.0, %v1856
    %v1858 = vpop.f32.mrb[0].mxu0
    %1859 = vdwg.mxu0
    %v1860 = vadd.f32 %v333, %v1857
    %v1861 = vtanh.pop %v1860
    %v1862 = vxor.u32 %v1860, 2147483648
    %v1863 = vmul.f32 %v1862, 1.442695
    %v1864 = vpow.pop %v1863
    %v1865 = vadd.f32 %v1864, 1.0
    %v1866 = vrcp.pop %v1865
    %v1867 = vmul.f32 1.0, %v1866
    %v1868 = vsel %vm353, %v1861, %v1867
    %v1869 = vmul.f32 %v1868, %v1674
    %1871 = vrot.lane.b32.xlu0 %v1868, 64
    %v1872 = vpop.permute.xlu0 %1871
    %v1874 = vmul.f32 %v1868, %v1872
    %1876 = vrot.lane.b32.xlu0 %v1874, 32
    %v1877 = vpop.permute.xlu0 %1876
    %v1879 = vadd.f32 %v1869, %v1877
    %v1880 = vtanh.pop %v1879
    %1882 = vrot.lane.b32.xlu0 %v1880, 64
    %v1883 = vpop.permute.xlu0 %1882
    %v1885 = vmul.f32 %v1868, %v1883
    %1887 = vrot.lane.b32.xlu0 %v1885, 32
    %v1888 = vpop.permute.xlu0 %1887
    %1891 = vrot.lane.b32.xlu0 %v1787, 64
    %v1892 = vpop.permute.xlu0 %1891
    %v1894 = vsel %vm354, %v1888, %v1892
    %v1896 = vsel %vm459, %v1894, 0
    %1898 = vmatprep.subr.mxu0 0.0
    %1899 = vmatpush1.msra.mxu0 %v340
    %1900 = vmatprep.subr.mxu0 0.0
    %1901 = vmatpush1.msra.mxu0 %v341
    %1902 = vmatprep.subr.mxu0 0.0
    %1903 = vmatpush1.msra.mxu0 %v342
    %1904 = vmatprep.subr.mxu0 0.0
    %1905 = vmatpush1.msra.mxu0 %v343
    %1906 = vmatprep.subr.mxu0 0.0
    %1907 = vmatpush1.msra.mxu0 %v344
    %1908 = vmatprep.subr.mxu0 0.0
    %1909 = vmatpush1.msra.mxu0 %v345
    %1910 = vmatprep.subr.mxu0 0.0
    %1911 = vmatpush1.msra.mxu0 %v346
    %1912 = vmatprep.subr.mxu0 0.0
    %1913 = vmatpush1.msra.mxu0 %v347
    %1914 = vmatprep.subr.mxu0 0.0
    %1915 = vmatpush1.msra.mxu0 0.0
    %1916 = vmatprep.subr.mxu0 0.0
    %1917 = vmatpush1.msra.mxu0 0.0
    %1918 = vmatprep.subr.mxu0 0.0
    %1919 = vmatpush1.msra.mxu0 0.0
    %1920 = vmatprep.subr.mxu0 0.0
    %1921 = vmatpush1.msra.mxu0 0.0
    %1922 = vmatprep.subr.mxu0 0.0
    %1923 = vmatpush1.msra.mxu0 0.0
    %1924 = vmatprep.subr.mxu0 0.0
    %1925 = vmatpush1.msra.mxu0 0.0
    %1926 = vmatprep.subr.mxu0 0.0
    %1927 = vmatpush1.msra.mxu0 0.0
    %1928 = vmatprep.subr.mxu0 0.0
    %1929 = vmatpush1.msra.mxu0 0.0
    %1930 = vmatprep.subr.mxu0 0.0
    %1931 = vmatpush1.msra.mxu0 0.0
    %1932 = vmatprep.subr.mxu0 0.0
    %1933 = vmatpush1.msra.mxu0 0.0
    %1934 = vmatprep.subr.mxu0 0.0
    %1935 = vmatpush1.msra.mxu0 0.0
    %1936 = vmatprep.subr.mxu0 0.0
    %1937 = vmatpush1.msra.mxu0 0.0
    %1938 = vmatprep.subr.mxu0 0.0
    %1939 = vmatpush1.msra.mxu0 0.0
    %1940 = vmatprep.subr.mxu0 0.0
    %1941 = vmatpush1.msra.mxu0 0.0
    %1942 = vmatprep.subr.mxu0 0.0
    %1943 = vmatpush1.msra.mxu0 0.0
    %1944 = vmatprep.subr.mxu0 0.0
    %1945 = vmatpush1.msra.mxu0 0.0
    %1946 = vmatprep.subr.mxu0 0.0
    %1947 = vmatpush1.msra.mxu0 0.0
    %1948 = vmatprep.subr.mxu0 0.0
    %1949 = vmatpush1.msra.mxu0 0.0
    %1950 = vmatprep.subr.mxu0 0.0
    %1951 = vmatpush1.msra.mxu0 0.0
    %1952 = vmatprep.subr.mxu0 0.0
    %1953 = vmatpush1.msra.mxu0 0.0
    %1954 = vmatprep.subr.mxu0 0.0
    %1955 = vmatpush1.msra.mxu0 0.0
    %1956 = vmatprep.subr.mxu0 0.0
    %1957 = vmatpush1.msra.mxu0 0.0
    %1958 = vmatprep.subr.mxu0 0.0
    %1959 = vmatpush1.msra.mxu0 0.0
    %1960 = vmatprep.subr.mxu0 0.0
    %1961 = vmatpush1.msra.mxu0 0.0
    %1962 = vmatprep.mubr.f32.mxu0 0.0
    %1963 = vmatmul.mubr.f32.gmra.mrb[0].mxu0 %v1896
    %v1964 = vpop.f32.mrb[0].mxu0
    %v1965 = vadd.f32 %v348, %v1964
    %v1966 = vpop.f32.mrb[0].mxu0
    %1967 = vdwg.mxu0
    %v1968 = vtanh.pop %v1965
    %v1969 = vxor.u32 %v1965, 2147483648
    %v1970 = vmul.f32 %v1969, 1.442695
    %v1971 = vpow.pop %v1970
    %v1972 = vadd.f32 %v1971, 1.0
    %v1973 = vrcp.pop %v1972
    %v1974 = vmul.f32 1.0, %v1973
    %v1975 = vsel %vm353, %v1968, %v1974
    %v1976 = vmul.f32 %v1975, %v1781
    %1978 = vrot.lane.b32.xlu0 %v1975, 64
    %v1979 = vpop.permute.xlu0 %1978
    %v1981 = vmul.f32 %v1975, %v1979
    %1983 = vrot.lane.b32.xlu0 %v1981, 32
    %v1984 = vpop.permute.xlu0 %1983
    %v1986 = vadd.f32 %v1976, %v1984
    %v1987 = vtanh.pop %v1986
    %1989 = vrot.lane.b32.xlu0 %v1987, 64
    %v1990 = vpop.permute.xlu0 %1989
    %v1992 = vmul.f32 %v1975, %v1990
    %s1993 = smul.u32 8, 4
    %s1994 = smul.u32 %s1993, 3
    %s1995 = sshll.u32 %s1994, 4
    %1996 = dma.done [#allocation5], %s1995
    %v1997 = vld [vmem:[#allocation2] sm:$0xff]
    %v1998 = vld [vmem:[#allocation2 + $0x8] sm:$0xff]
    %v1999 = vld [vmem:[#allocation2 + $0x10] sm:$0xff]
    %v2000 = vld [vmem:[#allocation2 + $0x18] sm:$0xff]
    %v2001 = vld [vmem:[#allocation2 + $0x20] sm:$0xff]
    %v2002 = vld [vmem:[#allocation2 + $0x28] sm:$0xff]
    %v2003 = vld [vmem:[#allocation2 + $0x30] sm:$0xff]
    %v2004 = vld [vmem:[#allocation2 + $0x38] sm:$0xff]
    %v2005 = vld [vmem:[#allocation2 + $0x40] sm:$0xff]
    %v2006 = vld [vmem:[#allocation2 + $0x48] sm:$0xff]
    %v2007 = vld [vmem:[#allocation2 + $0x50] sm:$0xff]
    %v2008 = vld [vmem:[#allocation2 + $0x58] sm:$0xff]
    %v2009 = vld [vmem:[#allocation12] sm:$0x7]
    %v2011 = vlaneseq
    %v2012 = vshrl.u32 %v2011, 7
    %v2013 = vsub.s32 0, %v2012
    %v2014 = vrot.slane %v2009, %v2013
    %v2015 = vlaneseq
    %v2016 = vshrl.u32 %v2015, 7
    %v2017 = vsub.s32 1, %v2016
    %v2018 = vrot.slane %v2009, %v2017
    %v2019 = vlaneseq
    %v2020 = vshrl.u32 %v2019, 7
    %v2021 = vsub.s32 2, %v2020
    %v2022 = vrot.slane %v2009, %v2021
    %2027 = vrot.lane.b32.xlu0 %v1992, 32
    %v2028 = vpop.permute.xlu0 %2027
    %v2029 = vsel %vm354, %v2028, 0
    %2031 = vmatprep.subr.mxu0 %v1998
    %2032 = vmatpush1.msra.mxu0 %v1997
    %2033 = vmatprep.subr.mxu0 %v2001
    %2034 = vmatpush1.msra.mxu0 %v2000
    %2035 = vmatprep.subr.mxu0 %v2004
    %2036 = vmatpush1.msra.mxu0 %v2003
    %2037 = vmatprep.subr.mxu0 %v2007
    %2038 = vmatpush1.msra.mxu0 %v2006
    %2039 = vmatprep.subr.mxu0 0.0
    %2040 = vmatpush1.msra.mxu0 0.0
    %2041 = vmatprep.subr.mxu0 0.0
    %2042 = vmatpush1.msra.mxu0 0.0
    %2043 = vmatprep.subr.mxu0 0.0
    %2044 = vmatpush1.msra.mxu0 0.0
    %2045 = vmatprep.subr.mxu0 0.0
    %2046 = vmatpush1.msra.mxu0 0.0
    %2047 = vmatprep.subr.mxu0 0.0
    %2048 = vmatpush1.msra.mxu0 0.0
    %2049 = vmatprep.subr.mxu0 0.0
    %2050 = vmatpush1.msra.mxu0 0.0
    %2051 = vmatprep.subr.mxu0 0.0
    %2052 = vmatpush1.msra.mxu0 0.0
    %2053 = vmatprep.subr.mxu0 0.0
    %2054 = vmatpush1.msra.mxu0 0.0
    %2055 = vmatprep.subr.mxu0 0.0
    %2056 = vmatpush1.msra.mxu0 0.0
    %2057 = vmatprep.subr.mxu0 0.0
    %2058 = vmatpush1.msra.mxu0 0.0
    %2059 = vmatprep.subr.mxu0 0.0
    %2060 = vmatpush1.msra.mxu0 0.0
    %2061 = vmatprep.subr.mxu0 0.0
    %2062 = vmatpush1.msra.mxu0 0.0
    %2063 = vmatprep.subr.mxu0 0.0
    %2064 = vmatpush1.msra.mxu0 0.0
    %2065 = vmatprep.subr.mxu0 0.0
    %2066 = vmatpush1.msra.mxu0 0.0
    %2067 = vmatprep.subr.mxu0 0.0
    %2068 = vmatpush1.msra.mxu0 0.0
    %2069 = vmatprep.subr.mxu0 0.0
    %2070 = vmatpush1.msra.mxu0 0.0
    %2071 = vmatprep.subr.mxu0 0.0
    %2072 = vmatpush1.msra.mxu0 0.0
    %2073 = vmatprep.subr.mxu0 0.0
    %2074 = vmatpush1.msra.mxu0 0.0
    %2075 = vmatprep.subr.mxu0 0.0
    %2076 = vmatpush1.msra.mxu0 0.0
    %2077 = vmatprep.subr.mxu0 0.0
    %2078 = vmatpush1.msra.mxu0 0.0
    %2079 = vmatprep.subr.mxu0 0.0
    %2080 = vmatpush1.msra.mxu0 0.0
    %2081 = vmatprep.subr.mxu0 0.0
    %2082 = vmatpush1.msra.mxu0 0.0
    %2083 = vmatprep.subr.mxu0 0.0
    %2084 = vmatpush1.msra.mxu0 0.0
    %2085 = vmatprep.subr.mxu0 0.0
    %2086 = vmatpush1.msra.mxu0 0.0
    %2087 = vmatprep.subr.mxu0 0.0
    %2088 = vmatpush1.msra.mxu0 0.0
    %2089 = vmatprep.subr.mxu0 0.0
    %2090 = vmatpush1.msra.mxu0 0.0
    %2091 = vmatprep.subr.mxu0 0.0
    %2092 = vmatpush1.msra.mxu0 0.0
    %2093 = vmatprep.subr.mxu0 0.0
    %2094 = vmatpush1.msra.mxu0 0.0
    %2095 = vmatprep.mubr.f32.mxu0 0.0
    %2096 = vmatmul.mubr.f32.gmra.mrb[0].mxu0 %v2029
    %v2097 = vpop.f32.mrb[0].mxu0
    %v2098 = vadd.f32 %v2014, %v2097
    %v2099 = vpop.f32.mrb[0].mxu0
    %v2100 = vadd.f32 %v2018, %v2099
    %2101 = vdwg.mxu0
    %2102 = vmatprep.subr.mxu0 0.0
    %2103 = vmatpush1.msra.mxu0 %v1999
    %2104 = vmatprep.subr.mxu0 0.0
    %2105 = vmatpush1.msra.mxu0 %v2002
    %2106 = vmatprep.subr.mxu0 0.0
    %2107 = vmatpush1.msra.mxu0 %v2005
    %2108 = vmatprep.subr.mxu0 0.0
    %2109 = vmatpush1.msra.mxu0 %v2008
    %2110 = vmatprep.subr.mxu0 0.0
    %2111 = vmatpush1.msra.mxu0 0.0
    %2112 = vmatprep.subr.mxu0 0.0
    %2113 = vmatpush1.msra.mxu0 0.0
    %2114 = vmatprep.subr.mxu0 0.0
    %2115 = vmatpush1.msra.mxu0 0.0
    %2116 = vmatprep.subr.mxu0 0.0
    %2117 = vmatpush1.msra.mxu0 0.0
    %2118 = vmatprep.subr.mxu0 0.0
    %2119 = vmatpush1.msra.mxu0 0.0
    %2120 = vmatprep.subr.mxu0 0.0
    %2121 = vmatpush1.msra.mxu0 0.0
    %2122 = vmatprep.subr.mxu0 0.0
    %2123 = vmatpush1.msra.mxu0 0.0
    %2124 = vmatprep.subr.mxu0 0.0
    %2125 = vmatpush1.msra.mxu0 0.0
    %2126 = vmatprep.subr.mxu0 0.0
    %2127 = vmatpush1.msra.mxu0 0.0
    %2128 = vmatprep.subr.mxu0 0.0
    %2129 = vmatpush1.msra.mxu0 0.0
    %2130 = vmatprep.subr.mxu0 0.0
    %2131 = vmatpush1.msra.mxu0 0.0
    %2132 = vmatprep.subr.mxu0 0.0
    %2133 = vmatpush1.msra.mxu0 0.0
    %2134 = vmatprep.subr.mxu0 0.0
    %2135 = vmatpush1.msra.mxu0 0.0
    %2136 = vmatprep.subr.mxu0 0.0
    %2137 = vmatpush1.msra.mxu0 0.0
    %2138 = vmatprep.subr.mxu0 0.0
    %2139 = vmatpush1.msra.mxu0 0.0
    %2140 = vmatprep.subr.mxu0 0.0
    %2141 = vmatpush1.msra.mxu0 0.0
    %2142 = vmatprep.subr.mxu0 0.0
    %2143 = vmatpush1.msra.mxu0 0.0
    %2144 = vmatprep.subr.mxu0 0.0
    %2145 = vmatpush1.msra.mxu0 0.0
    %2146 = vmatprep.subr.mxu0 0.0
    %2147 = vmatpush1.msra.mxu0 0.0
    %2148 = vmatprep.subr.mxu0 0.0
    %2149 = vmatpush1.msra.mxu0 0.0
    %2150 = vmatprep.subr.mxu0 0.0
    %2151 = vmatpush1.msra.mxu0 0.0
    %2152 = vmatprep.subr.mxu0 0.0
    %2153 = vmatpush1.msra.mxu0 0.0
    %2154 = vmatprep.subr.mxu0 0.0
    %2155 = vmatpush1.msra.mxu0 0.0
    %2156 = vmatprep.subr.mxu0 0.0
    %2157 = vmatpush1.msra.mxu0 0.0
    %2158 = vmatprep.subr.mxu0 0.0
    %2159 = vmatpush1.msra.mxu0 0.0
    %2160 = vmatprep.subr.mxu0 0.0
    %2161 = vmatpush1.msra.mxu0 0.0
    %2162 = vmatprep.subr.mxu0 0.0
    %2163 = vmatpush1.msra.mxu0 0.0
    %2164 = vmatprep.subr.mxu0 0.0
    %2165 = vmatpush1.msra.mxu0 0.0
    %2166 = vmatprep.mubr.f32.mxu0 0.0
    %2167 = vmatmul.mubr.f32.gmra.mrb[0].mxu0 %v2029
    %v2168 = vpop.f32.mrb[0].mxu0
    %v2169 = vadd.f32 %v2022, %v2168
    %v2170 = vpop.f32.mrb[0].mxu0
    %2171 = vdwg.mxu0
    %v2172 = vmax.f32 %v2098, 0.0
    %v2173 = vmax.f32 %v2100, 0.0
    %v2174 = vmax.f32 %v2169, 0.0
    %s2175 = smul.u32 8, 48
    %s2176 = smul.u32 %s2175, 4
    %s2177 = sshll.u32 %s2176, 4
    %2178 = dma.done %s162, %s2177
    %v2179 = vld [vmem:[#allocation3] sm:$0xff]
    %v2180 = vld [vmem:[#allocation3 + $0x8] sm:$0xff]
    %v2181 = vld [vmem:[#allocation3 + $0x10] sm:$0xff]
    %v2182 = vld [vmem:[#allocation3 + $0x18] sm:$0xff]
    %v2183 = vld [vmem:[#allocation3 + $0x20] sm:$0xff]
    %v2184 = vld [vmem:[#allocation3 + $0x28] sm:$0xff]
    %v2185 = vld [vmem:[#allocation3 + $0x30] sm:$0xff]
    %v2186 = vld [vmem:[#allocation3 + $0x38] sm:$0xff]
    %v2187 = vld [vmem:[#allocation3 + $0x40] sm:$0xff]
    %v2188 = vld [vmem:[#allocation3 + $0x48] sm:$0xff]
    %v2189 = vld [vmem:[#allocation3 + $0x50] sm:$0xff]
    %v2190 = vld [vmem:[#allocation3 + $0x58] sm:$0xff]
    %v2191 = vld [vmem:[#allocation3 + $0x60] sm:$0xff]
    %v2192 = vld [vmem:[#allocation3 + $0x68] sm:$0xff]
    %v2193 = vld [vmem:[#allocation3 + $0x70] sm:$0xff]
    %v2194 = vld [vmem:[#allocation3 + $0x78] sm:$0xff]
    %v2195 = vld [vmem:[#allocation3 + $0x80] sm:$0xff]
    %v2196 = vld [vmem:[#allocation3 + $0x88] sm:$0xff]
    %v2197 = vld [vmem:[#allocation3 + $0x90] sm:$0xff]
    %v2198 = vld [vmem:[#allocation3 + $0x98] sm:$0xff]
    %v2199 = vld [vmem:[#allocation3 + $0xa0] sm:$0xff]
    %v2200 = vld [vmem:[#allocation3 + $0xa8] sm:$0xff]
    %v2201 = vld [vmem:[#allocation3 + $0xb0] sm:$0xff]
    %v2202 = vld [vmem:[#allocation3 + $0xb8] sm:$0xff]
    %v2203 = vld [vmem:[#allocation3 + $0xc0] sm:$0xff]
    %v2204 = vld [vmem:[#allocation3 + $0xc8] sm:$0xff]
    %v2205 = vld [vmem:[#allocation3 + $0xd0] sm:$0xff]
    %v2206 = vld [vmem:[#allocation3 + $0xd8] sm:$0xff]
    %v2207 = vld [vmem:[#allocation3 + $0xe0] sm:$0xff]
    %v2208 = vld [vmem:[#allocation3 + $0xe8] sm:$0xff]
    %v2209 = vld [vmem:[#allocation3 + $0xf0] sm:$0xff]
    %v2210 = vld [vmem:[#allocation3 + $0xf8] sm:$0xff]
    %v2211 = vld [vmem:[#allocation3 + $0x100] sm:$0xff]
    %v2212 = vld [vmem:[#allocation3 + $0x108] sm:$0xff]
    %v2213 = vld [vmem:[#allocation3 + $0x110] sm:$0xff]
    %v2214 = vld [vmem:[#allocation3 + $0x118] sm:$0xff]
    %v2215 = vld [vmem:[#allocation3 + $0x120] sm:$0xff]
    %v2216 = vld [vmem:[#allocation3 + $0x128] sm:$0xff]
    %v2217 = vld [vmem:[#allocation3 + $0x130] sm:$0xff]
    %v2218 = vld [vmem:[#allocation3 + $0x138] sm:$0xff]
    %v2219 = vld [vmem:[#allocation3 + $0x140] sm:$0xff]
    %v2220 = vld [vmem:[#allocation3 + $0x148] sm:$0xff]
    %v2221 = vld [vmem:[#allocation3 + $0x150] sm:$0xff]
    %v2222 = vld [vmem:[#allocation3 + $0x158] sm:$0xff]
    %v2223 = vld [vmem:[#allocation3 + $0x160] sm:$0xff]
    %v2224 = vld [vmem:[#allocation3 + $0x168] sm:$0xff]
    %v2225 = vld [vmem:[#allocation3 + $0x170] sm:$0xff]
    %v2226 = vld [vmem:[#allocation3 + $0x178] sm:$0xff]
    %v2227 = vld [vmem:[#allocation3 + $0x180] sm:$0xff]
    %v2228 = vld [vmem:[#allocation3 + $0x188] sm:$0xff]
    %v2229 = vld [vmem:[#allocation3 + $0x190] sm:$0xff]
    %v2230 = vld [vmem:[#allocation3 + $0x198] sm:$0xff]
    %v2231 = vld [vmem:[#allocation3 + $0x1a0] sm:$0xff]
    %v2232 = vld [vmem:[#allocation3 + $0x1a8] sm:$0xff]
    %v2233 = vld [vmem:[#allocation3 + $0x1b0] sm:$0xff]
    %v2234 = vld [vmem:[#allocation3 + $0x1b8] sm:$0xff]
    %v2235 = vld [vmem:[#allocation3 + $0x1c0] sm:$0xff]
    %v2236 = vld [vmem:[#allocation3 + $0x1c8] sm:$0xff]
    %v2237 = vld [vmem:[#allocation3 + $0x1d0] sm:$0xff]
    %v2238 = vld [vmem:[#allocation3 + $0x1d8] sm:$0xff]
    %v2239 = vld [vmem:[#allocation3 + $0x1e0] sm:$0xff]
    %v2240 = vld [vmem:[#allocation3 + $0x1e8] sm:$0xff]
    %v2241 = vld [vmem:[#allocation3 + $0x1f0] sm:$0xff]
    %v2242 = vld [vmem:[#allocation3 + $0x1f8] sm:$0xff]
    %v2243 = vld [vmem:[#allocation3 + $0x200] sm:$0xff]
    %v2244 = vld [vmem:[#allocation3 + $0x208] sm:$0xff]
    %v2245 = vld [vmem:[#allocation3 + $0x210] sm:$0xff]
    %v2246 = vld [vmem:[#allocation3 + $0x218] sm:$0xff]
    %v2247 = vld [vmem:[#allocation3 + $0x220] sm:$0xff]
    %v2248 = vld [vmem:[#allocation3 + $0x228] sm:$0xff]
    %v2249 = vld [vmem:[#allocation3 + $0x230] sm:$0xff]
    %v2250 = vld [vmem:[#allocation3 + $0x238] sm:$0xff]
    %v2251 = vld [vmem:[#allocation3 + $0x240] sm:$0xff]
    %v2252 = vld [vmem:[#allocation3 + $0x248] sm:$0xff]
    %v2253 = vld [vmem:[#allocation3 + $0x250] sm:$0xff]
    %v2254 = vld [vmem:[#allocation3 + $0x258] sm:$0xff]
    %v2255 = vld [vmem:[#allocation3 + $0x260] sm:$0xff]
    %v2256 = vld [vmem:[#allocation3 + $0x268] sm:$0xff]
    %v2257 = vld [vmem:[#allocation3 + $0x270] sm:$0xff]
    %v2258 = vld [vmem:[#allocation3 + $0x278] sm:$0xff]
    %v2259 = vld [vmem:[#allocation3 + $0x280] sm:$0xff]
    %v2260 = vld [vmem:[#allocation3 + $0x288] sm:$0xff]
    %v2261 = vld [vmem:[#allocation3 + $0x290] sm:$0xff]
    %v2262 = vld [vmem:[#allocation3 + $0x298] sm:$0xff]
    %v2263 = vld [vmem:[#allocation3 + $0x2a0] sm:$0xff]
    %v2264 = vld [vmem:[#allocation3 + $0x2a8] sm:$0xff]
    %v2265 = vld [vmem:[#allocation3 + $0x2b0] sm:$0xff]
    %v2266 = vld [vmem:[#allocation3 + $0x2b8] sm:$0xff]
    %v2267 = vld [vmem:[#allocation3 + $0x2c0] sm:$0xff]
    %v2268 = vld [vmem:[#allocation3 + $0x2c8] sm:$0xff]
    %v2269 = vld [vmem:[#allocation3 + $0x2d0] sm:$0xff]
    %v2270 = vld [vmem:[#allocation3 + $0x2d8] sm:$0xff]
    %v2271 = vld [vmem:[#allocation3 + $0x2e0] sm:$0xff]
    %v2272 = vld [vmem:[#allocation3 + $0x2e8] sm:$0xff]
    %v2273 = vld [vmem:[#allocation3 + $0x2f0] sm:$0xff]
    %v2274 = vld [vmem:[#allocation3 + $0x2f8] sm:$0xff]
    %v2275 = vld [vmem:[#allocation3 + $0x300] sm:$0xff]
    %v2276 = vld [vmem:[#allocation3 + $0x308] sm:$0xff]
    %v2277 = vld [vmem:[#allocation3 + $0x310] sm:$0xff]
    %v2278 = vld [vmem:[#allocation3 + $0x318] sm:$0xff]
    %v2279 = vld [vmem:[#allocation3 + $0x320] sm:$0xff]
    %v2280 = vld [vmem:[#allocation3 + $0x328] sm:$0xff]
    %v2281 = vld [vmem:[#allocation3 + $0x330] sm:$0xff]
    %v2282 = vld [vmem:[#allocation3 + $0x338] sm:$0xff]
    %v2283 = vld [vmem:[#allocation3 + $0x340] sm:$0xff]
    %v2284 = vld [vmem:[#allocation3 + $0x348] sm:$0xff]
    %v2285 = vld [vmem:[#allocation3 + $0x350] sm:$0xff]
    %v2286 = vld [vmem:[#allocation3 + $0x358] sm:$0xff]
    %v2287 = vld [vmem:[#allocation3 + $0x360] sm:$0xff]
    %v2288 = vld [vmem:[#allocation3 + $0x368] sm:$0xff]
    %v2289 = vld [vmem:[#allocation3 + $0x370] sm:$0xff]
    %v2290 = vld [vmem:[#allocation3 + $0x378] sm:$0xff]
    %v2291 = vld [vmem:[#allocation3 + $0x380] sm:$0xff]
    %v2292 = vld [vmem:[#allocation3 + $0x388] sm:$0xff]
    %v2293 = vld [vmem:[#allocation3 + $0x390] sm:$0xff]
    %v2294 = vld [vmem:[#allocation3 + $0x398] sm:$0xff]
    %v2295 = vld [vmem:[#allocation3 + $0x3a0] sm:$0xff]
    %v2296 = vld [vmem:[#allocation3 + $0x3a8] sm:$0xff]
    %v2297 = vld [vmem:[#allocation3 + $0x3b0] sm:$0xff]
    %v2298 = vld [vmem:[#allocation3 + $0x3b8] sm:$0xff]
    %v2299 = vld [vmem:[#allocation3 + $0x3c0] sm:$0xff]
    %v2300 = vld [vmem:[#allocation3 + $0x3c8] sm:$0xff]
    %v2301 = vld [vmem:[#allocation3 + $0x3d0] sm:$0xff]
    %v2302 = vld [vmem:[#allocation3 + $0x3d8] sm:$0xff]
    %v2303 = vld [vmem:[#allocation3 + $0x3e0] sm:$0xff]
    %v2304 = vld [vmem:[#allocation3 + $0x3e8] sm:$0xff]
    %v2305 = vld [vmem:[#allocation3 + $0x3f0] sm:$0xff]
    %v2306 = vld [vmem:[#allocation3 + $0x3f8] sm:$0xff]
    %v2307 = vld [vmem:[#allocation3 + $0x400] sm:$0xff]
    %v2308 = vld [vmem:[#allocation3 + $0x408] sm:$0xff]
    %v2309 = vld [vmem:[#allocation3 + $0x410] sm:$0xff]
    %v2310 = vld [vmem:[#allocation3 + $0x418] sm:$0xff]
    %v2311 = vld [vmem:[#allocation3 + $0x420] sm:$0xff]
    %v2312 = vld [vmem:[#allocation3 + $0x428] sm:$0xff]
    %v2313 = vld [vmem:[#allocation3 + $0x430] sm:$0xff]
    %v2314 = vld [vmem:[#allocation3 + $0x438] sm:$0xff]
    %v2315 = vld [vmem:[#allocation3 + $0x440] sm:$0xff]
    %v2316 = vld [vmem:[#allocation3 + $0x448] sm:$0xff]
    %v2317 = vld [vmem:[#allocation3 + $0x450] sm:$0xff]
    %v2318 = vld [vmem:[#allocation3 + $0x458] sm:$0xff]
    %v2319 = vld [vmem:[#allocation3 + $0x460] sm:$0xff]
    %v2320 = vld [vmem:[#allocation3 + $0x468] sm:$0xff]
    %v2321 = vld [vmem:[#allocation3 + $0x470] sm:$0xff]
    %v2322 = vld [vmem:[#allocation3 + $0x478] sm:$0xff]
    %v2323 = vld [vmem:[#allocation3 + $0x480] sm:$0xff]
    %v2324 = vld [vmem:[#allocation3 + $0x488] sm:$0xff]
    %v2325 = vld [vmem:[#allocation3 + $0x490] sm:$0xff]
    %v2326 = vld [vmem:[#allocation3 + $0x498] sm:$0xff]
    %v2327 = vld [vmem:[#allocation3 + $0x4a0] sm:$0xff]
    %v2328 = vld [vmem:[#allocation3 + $0x4a8] sm:$0xff]
    %v2329 = vld [vmem:[#allocation3 + $0x4b0] sm:$0xff]
    %v2330 = vld [vmem:[#allocation3 + $0x4b8] sm:$0xff]
    %v2331 = vld [vmem:[#allocation3 + $0x4c0] sm:$0xff]
    %v2332 = vld [vmem:[#allocation3 + $0x4c8] sm:$0xff]
    %v2333 = vld [vmem:[#allocation3 + $0x4d0] sm:$0xff]
    %v2334 = vld [vmem:[#allocation3 + $0x4d8] sm:$0xff]
    %v2335 = vld [vmem:[#allocation3 + $0x4e0] sm:$0xff]
    %v2336 = vld [vmem:[#allocation3 + $0x4e8] sm:$0xff]
    %v2337 = vld [vmem:[#allocation3 + $0x4f0] sm:$0xff]
    %v2338 = vld [vmem:[#allocation3 + $0x4f8] sm:$0xff]
    %v2339 = vld [vmem:[#allocation3 + $0x500] sm:$0xff]
    %v2340 = vld [vmem:[#allocation3 + $0x508] sm:$0xff]
    %v2341 = vld [vmem:[#allocation3 + $0x510] sm:$0xff]
    %v2342 = vld [vmem:[#allocation3 + $0x518] sm:$0xff]
    %v2343 = vld [vmem:[#allocation3 + $0x520] sm:$0xff]
    %v2344 = vld [vmem:[#allocation3 + $0x528] sm:$0xff]
    %v2345 = vld [vmem:[#allocation3 + $0x530] sm:$0xff]
    %v2346 = vld [vmem:[#allocation3 + $0x538] sm:$0xff]
    %v2347 = vld [vmem:[#allocation3 + $0x540] sm:$0xff]
    %v2348 = vld [vmem:[#allocation3 + $0x548] sm:$0xff]
    %v2349 = vld [vmem:[#allocation3 + $0x550] sm:$0xff]
    %v2350 = vld [vmem:[#allocation3 + $0x558] sm:$0xff]
    %v2351 = vld [vmem:[#allocation3 + $0x560] sm:$0xff]
    %v2352 = vld [vmem:[#allocation3 + $0x568] sm:$0xff]
    %v2353 = vld [vmem:[#allocation3 + $0x570] sm:$0xff]
    %v2354 = vld [vmem:[#allocation3 + $0x578] sm:$0xff]
    %v2355 = vld [vmem:[#allocation3 + $0x580] sm:$0xff]
    %v2356 = vld [vmem:[#allocation3 + $0x588] sm:$0xff]
    %v2357 = vld [vmem:[#allocation3 + $0x590] sm:$0xff]
    %v2358 = vld [vmem:[#allocation3 + $0x598] sm:$0xff]
    %v2359 = vld [vmem:[#allocation3 + $0x5a0] sm:$0xff]
    %v2360 = vld [vmem:[#allocation3 + $0x5a8] sm:$0xff]
    %v2361 = vld [vmem:[#allocation3 + $0x5b0] sm:$0xff]
    %v2362 = vld [vmem:[#allocation3 + $0x5b8] sm:$0xff]
    %v2363 = vld [vmem:[#allocation3 + $0x5c0] sm:$0xff]
    %v2364 = vld [vmem:[#allocation3 + $0x5c8] sm:$0xff]
    %v2365 = vld [vmem:[#allocation3 + $0x5d0] sm:$0xff]
    %v2366 = vld [vmem:[#allocation3 + $0x5d8] sm:$0xff]
    %v2367 = vld [vmem:[#allocation3 + $0x5e0] sm:$0xff]
    %v2368 = vld [vmem:[#allocation3 + $0x5e8] sm:$0xff]
    %v2369 = vld [vmem:[#allocation3 + $0x5f0] sm:$0xff]
    %v2370 = vld [vmem:[#allocation3 + $0x5f8] sm:$0xff]
    %v2371 = vld [vmem:[#allocation14] sm:$0xf]
    %v2373 = vlaneseq
    %v2374 = vshrl.u32 %v2373, 7
    %v2375 = vsub.s32 0, %v2374
    %v2376 = vrot.slane %v2371, %v2375
    %v2377 = vlaneseq
    %v2378 = vshrl.u32 %v2377, 7
    %v2379 = vsub.s32 1, %v2378
    %v2380 = vrot.slane %v2371, %v2379
    %v2381 = vlaneseq
    %v2382 = vshrl.u32 %v2381, 7
    %v2383 = vsub.s32 2, %v2382
    %v2384 = vrot.slane %v2371, %v2383
    %v2385 = vlaneseq
    %v2386 = vshrl.u32 %v2385, 7
    %v2387 = vsub.s32 3, %v2386
    %v2388 = vrot.slane %v2371, %v2387
    %2393 = vmatprep.subr.mxu0 %v2180
    %2394 = vmatpush1.msra.mxu0 %v2179
    %2395 = vmatprep.subr.mxu0 %v2184
    %2396 = vmatpush1.msra.mxu0 %v2183
    %2397 = vmatprep.subr.mxu0 %v2188
    %2398 = vmatpush1.msra.mxu0 %v2187
    %2399 = vmatprep.subr.mxu0 %v2192
    %2400 = vmatpush1.msra.mxu0 %v2191
    %2401 = vmatprep.subr.mxu0 %v2196
    %2402 = vmatpush1.msra.mxu0 %v2195
    %2403 = vmatprep.subr.mxu0 %v2200
    %2404 = vmatpush1.msra.mxu0 %v2199
    %2405 = vmatprep.subr.mxu0 %v2204
    %2406 = vmatpush1.msra.mxu0 %v2203
    %2407 = vmatprep.subr.mxu0 %v2208
    %2408 = vmatpush1.msra.mxu0 %v2207
    %2409 = vmatprep.subr.mxu0 %v2212
    %2410 = vmatpush1.msra.mxu0 %v2211
    %2411 = vmatprep.subr.mxu0 %v2216
    %2412 = vmatpush1.msra.mxu0 %v2215
    %2413 = vmatprep.subr.mxu0 %v2220
    %2414 = vmatpush1.msra.mxu0 %v2219
    %2415 = vmatprep.subr.mxu0 %v2224
    %2416 = vmatpush1.msra.mxu0 %v2223
    %2417 = vmatprep.subr.mxu0 %v2228
    %2418 = vmatpush1.msra.mxu0 %v2227
    %2419 = vmatprep.subr.mxu0 %v2232
    %2420 = vmatpush1.msra.mxu0 %v2231
    %2421 = vmatprep.subr.mxu0 %v2236
    %2422 = vmatpush1.msra.mxu0 %v2235
    %2423 = vmatprep.subr.mxu0 %v2240
    %2424 = vmatpush1.msra.mxu0 %v2239
    %2425 = vmatprep.subr.mxu0 %v2244
    %2426 = vmatpush1.msra.mxu0 %v2243
    %2427 = vmatprep.subr.mxu0 %v2248
    %2428 = vmatpush1.msra.mxu0 %v2247
    %2429 = vmatprep.subr.mxu0 %v2252
    %2430 = vmatpush1.msra.mxu0 %v2251
    %2431 = vmatprep.subr.mxu0 %v2256
    %2432 = vmatpush1.msra.mxu0 %v2255
    %2433 = vmatprep.subr.mxu0 %v2260
    %2434 = vmatpush1.msra.mxu0 %v2259
    %2435 = vmatprep.subr.mxu0 %v2264
    %2436 = vmatpush1.msra.mxu0 %v2263
    %2437 = vmatprep.subr.mxu0 %v2268
    %2438 = vmatpush1.msra.mxu0 %v2267
    %2439 = vmatprep.subr.mxu0 %v2272
    %2440 = vmatpush1.msra.mxu0 %v2271
    %2441 = vmatprep.subr.mxu0 %v2276
    %2442 = vmatpush1.msra.mxu0 %v2275
    %2443 = vmatprep.subr.mxu0 %v2280
    %2444 = vmatpush1.msra.mxu0 %v2279
    %2445 = vmatprep.subr.mxu0 %v2284
    %2446 = vmatpush1.msra.mxu0 %v2283
    %2447 = vmatprep.subr.mxu0 %v2288
    %2448 = vmatpush1.msra.mxu0 %v2287
    %2449 = vmatprep.subr.mxu0 %v2292
    %2450 = vmatpush1.msra.mxu0 %v2291
    %2451 = vmatprep.subr.mxu0 %v2296
    %2452 = vmatpush1.msra.mxu0 %v2295
    %2453 = vmatprep.subr.mxu0 %v2300
    %2454 = vmatpush1.msra.mxu0 %v2299
    %2455 = vmatprep.subr.mxu0 %v2304
    %2456 = vmatpush1.msra.mxu0 %v2303
    %2457 = vmatprep.mubr.f32.mxu0 %v2173
    %2458 = vmatmul.mubr.f32.gmra.mrb[0].mxu0 %v2172
    %v2459 = vpop.f32.mrb[0].mxu0
    %v2460 = vadd.f32 %v2376, %v2459
    %v2461 = vpop.f32.mrb[0].mxu0
    %v2462 = vadd.f32 %v2380, %v2461
    %2463 = vdwg.mxu0
    %2464 = vmatprep.subr.mxu0 %v2308
    %2465 = vmatpush1.msra.mxu0 %v2307
    %2466 = vmatprep.subr.mxu0 %v2312
    %2467 = vmatpush1.msra.mxu0 %v2311
    %2468 = vmatprep.subr.mxu0 %v2316
    %2469 = vmatpush1.msra.mxu0 %v2315
    %2470 = vmatprep.subr.mxu0 %v2320
    %2471 = vmatpush1.msra.mxu0 %v2319
    %2472 = vmatprep.subr.mxu0 %v2324
    %2473 = vmatpush1.msra.mxu0 %v2323
    %2474 = vmatprep.subr.mxu0 %v2328
    %2475 = vmatpush1.msra.mxu0 %v2327
    %2476 = vmatprep.subr.mxu0 %v2332
    %2477 = vmatpush1.msra.mxu0 %v2331
    %2478 = vmatprep.subr.mxu0 %v2336
    %2479 = vmatpush1.msra.mxu0 %v2335
    %2480 = vmatprep.subr.mxu0 %v2340
    %2481 = vmatpush1.msra.mxu0 %v2339
    %2482 = vmatprep.subr.mxu0 %v2344
    %2483 = vmatpush1.msra.mxu0 %v2343
    %2484 = vmatprep.subr.mxu0 %v2348
    %2485 = vmatpush1.msra.mxu0 %v2347
    %2486 = vmatprep.subr.mxu0 %v2352
    %2487 = vmatpush1.msra.mxu0 %v2351
    %2488 = vmatprep.subr.mxu0 %v2356
    %2489 = vmatpush1.msra.mxu0 %v2355
    %2490 = vmatprep.subr.mxu0 %v2360
    %2491 = vmatpush1.msra.mxu0 %v2359
    %2492 = vmatprep.subr.mxu0 %v2364
    %2493 = vmatpush1.msra.mxu0 %v2363
    %2494 = vmatprep.subr.mxu0 %v2368
    %2495 = vmatpush1.msra.mxu0 %v2367
    %2496 = vmatprep.subr.mxu0 0.0
    %2497 = vmatpush1.msra.mxu0 0.0
    %2498 = vmatprep.subr.mxu0 0.0
    %2499 = vmatpush1.msra.mxu0 0.0
    %2500 = vmatprep.subr.mxu0 0.0
    %2501 = vmatpush1.msra.mxu0 0.0
    %2502 = vmatprep.subr.mxu0 0.0
    %2503 = vmatpush1.msra.mxu0 0.0
    %2504 = vmatprep.subr.mxu0 0.0
    %2505 = vmatpush1.msra.mxu0 0.0
    %2506 = vmatprep.subr.mxu0 0.0
    %2507 = vmatpush1.msra.mxu0 0.0
    %2508 = vmatprep.subr.mxu0 0.0
    %2509 = vmatpush1.msra.mxu0 0.0
    %2510 = vmatprep.subr.mxu0 0.0
    %2511 = vmatpush1.msra.mxu0 0.0
    %2512 = vmatprep.subr.mxu0 0.0
    %2513 = vmatpush1.msra.mxu0 0.0
    %2514 = vmatprep.subr.mxu0 0.0
    %2515 = vmatpush1.msra.mxu0 0.0
    %2516 = vmatprep.subr.mxu0 0.0
    %2517 = vmatpush1.msra.mxu0 0.0
    %2518 = vmatprep.subr.mxu0 0.0
    %2519 = vmatpush1.msra.mxu0 0.0
    %2520 = vmatprep.subr.mxu0 0.0
    %2521 = vmatpush1.msra.mxu0 0.0
    %2522 = vmatprep.subr.mxu0 0.0
    %2523 = vmatpush1.msra.mxu0 0.0
    %2524 = vmatprep.subr.mxu0 0.0
    %2525 = vmatpush1.msra.mxu0 0.0
    %2526 = vmatprep.subr.mxu0 0.0
    %2527 = vmatpush1.msra.mxu0 0.0
    %2528 = vmatprep.mubr.f32.mxu0 0.0
    %2529 = vmatmul.mubr.f32.gmra.mrb[0].mxu0 %v2174
    %v2530 = vpop.f32.mrb[0].mxu0
    %v2531 = vadd.f32 %v2460, %v2530
    %v2532 = vpop.f32.mrb[0].mxu0
    %v2533 = vadd.f32 %v2462, %v2532
    %2534 = vdwg.mxu0
    %2535 = vmatprep.subr.mxu0 %v2182
    %2536 = vmatpush1.msra.mxu0 %v2181
    %2537 = vmatprep.subr.mxu0 %v2186
    %2538 = vmatpush1.msra.mxu0 %v2185
    %2539 = vmatprep.subr.mxu0 %v2190
    %2540 = vmatpush1.msra.mxu0 %v2189
    %2541 = vmatprep.subr.mxu0 %v2194
    %2542 = vmatpush1.msra.mxu0 %v2193
    %2543 = vmatprep.subr.mxu0 %v2198
    %2544 = vmatpush1.msra.mxu0 %v2197
    %2545 = vmatprep.subr.mxu0 %v2202
    %2546 = vmatpush1.msra.mxu0 %v2201
    %2547 = vmatprep.subr.mxu0 %v2206
    %2548 = vmatpush1.msra.mxu0 %v2205
    %2549 = vmatprep.subr.mxu0 %v2210
    %2550 = vmatpush1.msra.mxu0 %v2209
    %2551 = vmatprep.subr.mxu0 %v2214
    %2552 = vmatpush1.msra.mxu0 %v2213
    %2553 = vmatprep.subr.mxu0 %v2218
    %2554 = vmatpush1.msra.mxu0 %v2217
    %2555 = vmatprep.subr.mxu0 %v2222
    %2556 = vmatpush1.msra.mxu0 %v2221
    %2557 = vmatprep.subr.mxu0 %v2226
    %2558 = vmatpush1.msra.mxu0 %v2225
    %2559 = vmatprep.subr.mxu0 %v2230
    %2560 = vmatpush1.msra.mxu0 %v2229
    %2561 = vmatprep.subr.mxu0 %v2234
    %2562 = vmatpush1.msra.mxu0 %v2233
    %2563 = vmatprep.subr.mxu0 %v2238
    %2564 = vmatpush1.msra.mxu0 %v2237
    %2565 = vmatprep.subr.mxu0 %v2242
    %2566 = vmatpush1.msra.mxu0 %v2241
    %2567 = vmatprep.subr.mxu0 %v2246
    %2568 = vmatpush1.msra.mxu0 %v2245
    %2569 = vmatprep.subr.mxu0 %v2250
    %2570 = vmatpush1.msra.mxu0 %v2249
    %2571 = vmatprep.subr.mxu0 %v2254
    %2572 = vmatpush1.msra.mxu0 %v2253
    %2573 = vmatprep.subr.mxu0 %v2258
    %2574 = vmatpush1.msra.mxu0 %v2257
    %2575 = vmatprep.subr.mxu0 %v2262
    %2576 = vmatpush1.msra.mxu0 %v2261
    %2577 = vmatprep.subr.mxu0 %v2266
    %2578 = vmatpush1.msra.mxu0 %v2265
    %2579 = vmatprep.subr.mxu0 %v2270
    %2580 = vmatpush1.msra.mxu0 %v2269
    %2581 = vmatprep.subr.mxu0 %v2274
    %2582 = vmatpush1.msra.mxu0 %v2273
    %2583 = vmatprep.subr.mxu0 %v2278
    %2584 = vmatpush1.msra.mxu0 %v2277
    %2585 = vmatprep.subr.mxu0 %v2282
    %2586 = vmatpush1.msra.mxu0 %v2281
    %2587 = vmatprep.subr.mxu0 %v2286
    %2588 = vmatpush1.msra.mxu0 %v2285
    %2589 = vmatprep.subr.mxu0 %v2290
    %2590 = vmatpush1.msra.mxu0 %v2289
    %2591 = vmatprep.subr.mxu0 %v2294
    %2592 = vmatpush1.msra.mxu0 %v2293
    %2593 = vmatprep.subr.mxu0 %v2298
    %2594 = vmatpush1.msra.mxu0 %v2297
    %2595 = vmatprep.subr.mxu0 %v2302
    %2596 = vmatpush1.msra.mxu0 %v2301
    %2597 = vmatprep.subr.mxu0 %v2306
    %2598 = vmatpush1.msra.mxu0 %v2305
    %2599 = vmatprep.mubr.f32.mxu0 %v2173
    %2600 = vmatmul.mubr.f32.gmra.mrb[0].mxu0 %v2172
    %v2601 = vpop.f32.mrb[0].mxu0
    %v2602 = vadd.f32 %v2384, %v2601
    %v2603 = vpop.f32.mrb[0].mxu0
    %v2604 = vadd.f32 %v2388, %v2603
    %2605 = vdwg.mxu0
    %2606 = vmatprep.subr.mxu0 %v2310
    %2607 = vmatpush1.msra.mxu0 %v2309
    %2608 = vmatprep.subr.mxu0 %v2314
    %2609 = vmatpush1.msra.mxu0 %v2313
    %2610 = vmatprep.subr.mxu0 %v2318
    %2611 = vmatpush1.msra.mxu0 %v2317
    %2612 = vmatprep.subr.mxu0 %v2322
    %2613 = vmatpush1.msra.mxu0 %v2321
    %2614 = vmatprep.subr.mxu0 %v2326
    %2615 = vmatpush1.msra.mxu0 %v2325
    %2616 = vmatprep.subr.mxu0 %v2330
    %2617 = vmatpush1.msra.mxu0 %v2329
    %2618 = vmatprep.subr.mxu0 %v2334
    %2619 = vmatpush1.msra.mxu0 %v2333
    %2620 = vmatprep.subr.mxu0 %v2338
    %2621 = vmatpush1.msra.mxu0 %v2337
    %2622 = vmatprep.subr.mxu0 %v2342
    %2623 = vmatpush1.msra.mxu0 %v2341
    %2624 = vmatprep.subr.mxu0 %v2346
    %2625 = vmatpush1.msra.mxu0 %v2345
    %2626 = vmatprep.subr.mxu0 %v2350
    %2627 = vmatpush1.msra.mxu0 %v2349
    %2628 = vmatprep.subr.mxu0 %v2354
    %2629 = vmatpush1.msra.mxu0 %v2353
    %2630 = vmatprep.subr.mxu0 %v2358
    %2631 = vmatpush1.msra.mxu0 %v2357
    %2632 = vmatprep.subr.mxu0 %v2362
    %2633 = vmatpush1.msra.mxu0 %v2361
    %2634 = vmatprep.subr.mxu0 %v2366
    %2635 = vmatpush1.msra.mxu0 %v2365
    %2636 = vmatprep.subr.mxu0 %v2370
    %2637 = vmatpush1.msra.mxu0 %v2369
    %2638 = vmatprep.subr.mxu0 0.0
    %2639 = vmatpush1.msra.mxu0 0.0
    %2640 = vmatprep.subr.mxu0 0.0
    %2641 = vmatpush1.msra.mxu0 0.0
    %2642 = vmatprep.subr.mxu0 0.0
    %2643 = vmatpush1.msra.mxu0 0.0
    %2644 = vmatprep.subr.mxu0 0.0
    %2645 = vmatpush1.msra.mxu0 0.0
    %2646 = vmatprep.subr.mxu0 0.0
    %2647 = vmatpush1.msra.mxu0 0.0
    %2648 = vmatprep.subr.mxu0 0.0
    %2649 = vmatpush1.msra.mxu0 0.0
    %2650 = vmatprep.subr.mxu0 0.0
    %2651 = vmatpush1.msra.mxu0 0.0
    %2652 = vmatprep.subr.mxu0 0.0
    %2653 = vmatpush1.msra.mxu0 0.0
    %2654 = vmatprep.subr.mxu0 0.0
    %2655 = vmatpush1.msra.mxu0 0.0
    %2656 = vmatprep.subr.mxu0 0.0
    %2657 = vmatpush1.msra.mxu0 0.0
    %2658 = vmatprep.subr.mxu0 0.0
    %2659 = vmatpush1.msra.mxu0 0.0
    %2660 = vmatprep.subr.mxu0 0.0
    %2661 = vmatpush1.msra.mxu0 0.0
    %2662 = vmatprep.subr.mxu0 0.0
    %2663 = vmatpush1.msra.mxu0 0.0
    %2664 = vmatprep.subr.mxu0 0.0
    %2665 = vmatpush1.msra.mxu0 0.0
    %2666 = vmatprep.subr.mxu0 0.0
    %2667 = vmatpush1.msra.mxu0 0.0
    %2668 = vmatprep.subr.mxu0 0.0
    %2669 = vmatpush1.msra.mxu0 0.0
    %2670 = vmatprep.mubr.f32.mxu0 0.0
    %2671 = vmatmul.mubr.f32.gmra.mrb[0].mxu0 %v2174
    %v2672 = vpop.f32.mrb[0].mxu0
    %v2673 = vadd.f32 %v2602, %v2672
    %v2674 = vpop.f32.mrb[0].mxu0
    %v2675 = vadd.f32 %v2604, %v2674
    %2676 = vdwg.mxu0
    %v2677 = vmax.f32 %v2531, 0.0
    %v2678 = vmax.f32 %v2533, 0.0
    %v2679 = vmax.f32 %v2673, 0.0
    %v2680 = vmax.f32 %v2675, 0.0
    %s2681 = smul.u32 512, 1
    %s2682 = sshll.u32 %s2681, 4
    %2683 = dma.done %s174, %s2682
    %v2684 = vld [vmem:[#allocation4] sm:$0xff]
    %v2685 = vld [vmem:[#allocation4 + $0x8] sm:$0xff]
    %v2686 = vld [vmem:[#allocation4 + $0x10] sm:$0xff]
    %v2687 = vld [vmem:[#allocation4 + $0x18] sm:$0xff]
    %v2688 = vld [vmem:[#allocation4 + $0x20] sm:$0xff]
    %v2689 = vld [vmem:[#allocation4 + $0x28] sm:$0xff]
    %v2690 = vld [vmem:[#allocation4 + $0x30] sm:$0xff]
    %v2691 = vld [vmem:[#allocation4 + $0x38] sm:$0xff]
    %v2692 = vld [vmem:[#allocation4 + $0x40] sm:$0xff]
    %v2693 = vld [vmem:[#allocation4 + $0x48] sm:$0xff]
    %v2694 = vld [vmem:[#allocation4 + $0x50] sm:$0xff]
    %v2695 = vld [vmem:[#allocation4 + $0x58] sm:$0xff]
    %v2696 = vld [vmem:[#allocation4 + $0x60] sm:$0xff]
    %v2697 = vld [vmem:[#allocation4 + $0x68] sm:$0xff]
    %v2698 = vld [vmem:[#allocation4 + $0x70] sm:$0xff]
    %v2699 = vld [vmem:[#allocation4 + $0x78] sm:$0xff]
    %v2700 = vld [vmem:[#allocation4 + $0x80] sm:$0xff]
    %v2701 = vld [vmem:[#allocation4 + $0x88] sm:$0xff]
    %v2702 = vld [vmem:[#allocation4 + $0x90] sm:$0xff]
    %v2703 = vld [vmem:[#allocation4 + $0x98] sm:$0xff]
    %v2704 = vld [vmem:[#allocation4 + $0xa0] sm:$0xff]
    %v2705 = vld [vmem:[#allocation4 + $0xa8] sm:$0xff]
    %v2706 = vld [vmem:[#allocation4 + $0xb0] sm:$0xff]
    %v2707 = vld [vmem:[#allocation4 + $0xb8] sm:$0xff]
    %v2708 = vld [vmem:[#allocation4 + $0xc0] sm:$0xff]
    %v2709 = vld [vmem:[#allocation4 + $0xc8] sm:$0xff]
    %v2710 = vld [vmem:[#allocation4 + $0xd0] sm:$0xff]
    %v2711 = vld [vmem:[#allocation4 + $0xd8] sm:$0xff]
    %v2712 = vld [vmem:[#allocation4 + $0xe0] sm:$0xff]
    %v2713 = vld [vmem:[#allocation4 + $0xe8] sm:$0xff]
    %v2714 = vld [vmem:[#allocation4 + $0xf0] sm:$0xff]
    %v2715 = vld [vmem:[#allocation4 + $0xf8] sm:$0xff]
    %v2716 = vld [vmem:[#allocation4 + $0x100] sm:$0xff]
    %v2717 = vld [vmem:[#allocation4 + $0x108] sm:$0xff]
    %v2718 = vld [vmem:[#allocation4 + $0x110] sm:$0xff]
    %v2719 = vld [vmem:[#allocation4 + $0x118] sm:$0xff]
    %v2720 = vld [vmem:[#allocation4 + $0x120] sm:$0xff]
    %v2721 = vld [vmem:[#allocation4 + $0x128] sm:$0xff]
    %v2722 = vld [vmem:[#allocation4 + $0x130] sm:$0xff]
    %v2723 = vld [vmem:[#allocation4 + $0x138] sm:$0xff]
    %v2724 = vld [vmem:[#allocation4 + $0x140] sm:$0xff]
    %v2725 = vld [vmem:[#allocation4 + $0x148] sm:$0xff]
    %v2726 = vld [vmem:[#allocation4 + $0x150] sm:$0xff]
    %v2727 = vld [vmem:[#allocation4 + $0x158] sm:$0xff]
    %v2728 = vld [vmem:[#allocation4 + $0x160] sm:$0xff]
    %v2729 = vld [vmem:[#allocation4 + $0x168] sm:$0xff]
    %v2730 = vld [vmem:[#allocation4 + $0x170] sm:$0xff]
    %v2731 = vld [vmem:[#allocation4 + $0x178] sm:$0xff]
    %v2732 = vld [vmem:[#allocation4 + $0x180] sm:$0xff]
    %v2733 = vld [vmem:[#allocation4 + $0x188] sm:$0xff]
    %v2734 = vld [vmem:[#allocation4 + $0x190] sm:$0xff]
    %v2735 = vld [vmem:[#allocation4 + $0x198] sm:$0xff]
    %v2736 = vld [vmem:[#allocation4 + $0x1a0] sm:$0xff]
    %v2737 = vld [vmem:[#allocation4 + $0x1a8] sm:$0xff]
    %v2738 = vld [vmem:[#allocation4 + $0x1b0] sm:$0xff]
    %v2739 = vld [vmem:[#allocation4 + $0x1b8] sm:$0xff]
    %v2740 = vld [vmem:[#allocation4 + $0x1c0] sm:$0xff]
    %v2741 = vld [vmem:[#allocation4 + $0x1c8] sm:$0xff]
    %v2742 = vld [vmem:[#allocation4 + $0x1d0] sm:$0xff]
    %v2743 = vld [vmem:[#allocation4 + $0x1d8] sm:$0xff]
    %v2744 = vld [vmem:[#allocation4 + $0x1e0] sm:$0xff]
    %v2745 = vld [vmem:[#allocation4 + $0x1e8] sm:$0xff]
    %v2746 = vld [vmem:[#allocation4 + $0x1f0] sm:$0xff]
    %v2747 = vld [vmem:[#allocation4 + $0x1f8] sm:$0xff]
    %v2748 = vld [vmem:[%s8] sm:$0x1]
    %v2750 = vlaneseq
    %v2751 = vshrl.u32 %v2750, 7
    %v2752 = vsub.s32 0, %v2751
    %v2753 = vrot.slane %v2748, %v2752
    %2755 = vmatprep.subr.mxu0 0.0
    %2756 = vmatpush1.msra.mxu0 %v2684
    %2757 = vmatprep.subr.mxu0 0.0
    %2758 = vmatpush1.msra.mxu0 %v2685
    %2759 = vmatprep.subr.mxu0 0.0
    %2760 = vmatpush1.msra.mxu0 %v2686
    %2761 = vmatprep.subr.mxu0 0.0
    %2762 = vmatpush1.msra.mxu0 %v2687
    %2763 = vmatprep.subr.mxu0 0.0
    %2764 = vmatpush1.msra.mxu0 %v2688
    %2765 = vmatprep.subr.mxu0 0.0
    %2766 = vmatpush1.msra.mxu0 %v2689
    %2767 = vmatprep.subr.mxu0 0.0
    %2768 = vmatpush1.msra.mxu0 %v2690
    %2769 = vmatprep.subr.mxu0 0.0
    %2770 = vmatpush1.msra.mxu0 %v2691
    %2771 = vmatprep.subr.mxu0 0.0
    %2772 = vmatpush1.msra.mxu0 %v2692
    %2773 = vmatprep.subr.mxu0 0.0
    %2774 = vmatpush1.msra.mxu0 %v2693
    %2775 = vmatprep.subr.mxu0 0.0
    %2776 = vmatpush1.msra.mxu0 %v2694
    %2777 = vmatprep.subr.mxu0 0.0
    %2778 = vmatpush1.msra.mxu0 %v2695
    %2779 = vmatprep.subr.mxu0 0.0
    %2780 = vmatpush1.msra.mxu0 %v2696
    %2781 = vmatprep.subr.mxu0 0.0
    %2782 = vmatpush1.msra.mxu0 %v2697
    %2783 = vmatprep.subr.mxu0 0.0
    %2784 = vmatpush1.msra.mxu0 %v2698
    %2785 = vmatprep.subr.mxu0 0.0
    %2786 = vmatpush1.msra.mxu0 %v2699
    %2787 = vmatprep.subr.mxu0 0.0
    %2788 = vmatpush1.msra.mxu0 %v2700
    %2789 = vmatprep.subr.mxu0 0.0
    %2790 = vmatpush1.msra.mxu0 %v2701
    %2791 = vmatprep.subr.mxu0 0.0
    %2792 = vmatpush1.msra.mxu0 %v2702
    %2793 = vmatprep.subr.mxu0 0.0
    %2794 = vmatpush1.msra.mxu0 %v2703
    %2795 = vmatprep.subr.mxu0 0.0
    %2796 = vmatpush1.msra.mxu0 %v2704
    %2797 = vmatprep.subr.mxu0 0.0
    %2798 = vmatpush1.msra.mxu0 %v2705
    %2799 = vmatprep.subr.mxu0 0.0
    %2800 = vmatpush1.msra.mxu0 %v2706
    %2801 = vmatprep.subr.mxu0 0.0
    %2802 = vmatpush1.msra.mxu0 %v2707
    %2803 = vmatprep.subr.mxu0 0.0
    %2804 = vmatpush1.msra.mxu0 %v2708
    %2805 = vmatprep.subr.mxu0 0.0
    %2806 = vmatpush1.msra.mxu0 %v2709
    %2807 = vmatprep.subr.mxu0 0.0
    %2808 = vmatpush1.msra.mxu0 %v2710
    %2809 = vmatprep.subr.mxu0 0.0
    %2810 = vmatpush1.msra.mxu0 %v2711
    %2811 = vmatprep.subr.mxu0 0.0
    %2812 = vmatpush1.msra.mxu0 %v2712
    %2813 = vmatprep.subr.mxu0 0.0
    %2814 = vmatpush1.msra.mxu0 %v2713
    %2815 = vmatprep.subr.mxu0 0.0
    %2816 = vmatpush1.msra.mxu0 %v2714
    %2817 = vmatprep.subr.mxu0 0.0
    %2818 = vmatpush1.msra.mxu0 %v2715
    %2819 = vmatprep.mubr.f32.mxu0 %v2678
    %2820 = vmatmul.mubr.f32.gmra.mrb[0].mxu0 %v2677
    %v2821 = vpop.f32.mrb[0].mxu0
    %v2822 = vadd.f32 %v2753, %v2821
    %v2823 = vpop.f32.mrb[0].mxu0
    %2824 = vdwg.mxu0
    %2825 = vmatprep.subr.mxu0 0.0
    %2826 = vmatpush1.msra.mxu0 %v2716
    %2827 = vmatprep.subr.mxu0 0.0
    %2828 = vmatpush1.msra.mxu0 %v2717
    %2829 = vmatprep.subr.mxu0 0.0
    %2830 = vmatpush1.msra.mxu0 %v2718
    %2831 = vmatprep.subr.mxu0 0.0
    %2832 = vmatpush1.msra.mxu0 %v2719
    %2833 = vmatprep.subr.mxu0 0.0
    %2834 = vmatpush1.msra.mxu0 %v2720
    %2835 = vmatprep.subr.mxu0 0.0
    %2836 = vmatpush1.msra.mxu0 %v2721
    %2837 = vmatprep.subr.mxu0 0.0
    %2838 = vmatpush1.msra.mxu0 %v2722
    %2839 = vmatprep.subr.mxu0 0.0
    %2840 = vmatpush1.msra.mxu0 %v2723
    %2841 = vmatprep.subr.mxu0 0.0
    %2842 = vmatpush1.msra.mxu0 %v2724
    %2843 = vmatprep.subr.mxu0 0.0
    %2844 = vmatpush1.msra.mxu0 %v2725
    %2845 = vmatprep.subr.mxu0 0.0
    %2846 = vmatpush1.msra.mxu0 %v2726
    %2847 = vmatprep.subr.mxu0 0.0
    %2848 = vmatpush1.msra.mxu0 %v2727
    %2849 = vmatprep.subr.mxu0 0.0
    %2850 = vmatpush1.msra.mxu0 %v2728
    %2851 = vmatprep.subr.mxu0 0.0
    %2852 = vmatpush1.msra.mxu0 %v2729
    %2853 = vmatprep.subr.mxu0 0.0
    %2854 = vmatpush1.msra.mxu0 %v2730
    %2855 = vmatprep.subr.mxu0 0.0
    %2856 = vmatpush1.msra.mxu0 %v2731
    %2857 = vmatprep.subr.mxu0 0.0
    %2858 = vmatpush1.msra.mxu0 %v2732
    %2859 = vmatprep.subr.mxu0 0.0
    %2860 = vmatpush1.msra.mxu0 %v2733
    %2861 = vmatprep.subr.mxu0 0.0
    %2862 = vmatpush1.msra.mxu0 %v2734
    %2863 = vmatprep.subr.mxu0 0.0
    %2864 = vmatpush1.msra.mxu0 %v2735
    %2865 = vmatprep.subr.mxu0 0.0
    %2866 = vmatpush1.msra.mxu0 %v2736
    %2867 = vmatprep.subr.mxu0 0.0
    %2868 = vmatpush1.msra.mxu0 %v2737
    %2869 = vmatprep.subr.mxu0 0.0
    %2870 = vmatpush1.msra.mxu0 %v2738
    %2871 = vmatprep.subr.mxu0 0.0
    %2872 = vmatpush1.msra.mxu0 %v2739
    %2873 = vmatprep.subr.mxu0 0.0
    %2874 = vmatpush1.msra.mxu0 %v2740
    %2875 = vmatprep.subr.mxu0 0.0
    %2876 = vmatpush1.msra.mxu0 %v2741
    %2877 = vmatprep.subr.mxu0 0.0
    %2878 = vmatpush1.msra.mxu0 %v2742
    %2879 = vmatprep.subr.mxu0 0.0
    %2880 = vmatpush1.msra.mxu0 %v2743
    %2881 = vmatprep.subr.mxu0 0.0
    %2882 = vmatpush1.msra.mxu0 %v2744
    %2883 = vmatprep.subr.mxu0 0.0
    %2884 = vmatpush1.msra.mxu0 %v2745
    %2885 = vmatprep.subr.mxu0 0.0
    %2886 = vmatpush1.msra.mxu0 %v2746
    %2887 = vmatprep.subr.mxu0 0.0
    %2888 = vmatpush1.msra.mxu0 %v2747
    %2889 = vmatprep.mubr.f32.mxu0 %v2680
    %2890 = vmatmul.mubr.f32.gmra.mrb[0].mxu0 %v2679
    %v2891 = vpop.f32.mrb[0].mxu0
    %v2892 = vadd.f32 %v2822, %v2891
    %v2893 = vpop.f32.mrb[0].mxu0
    %2894 = vdwg.mxu0
    %2895 = vst [vmem:[#allocation15] sm:$0xff] %v2892
    // Predicated region
    $region100: #{tpu_custom_call.1} parent=1 // pred_check
      _
    $region101: #{tpu_custom_call.1} parent=1 // pred_check_branch
      %2897 = sbr.rel (0) target = $region103
    $region102: #{tpu_custom_call.1} parent=1 // pred_region
      %s2899 = ssub.s32 128, 128
      %2900 = vsyncadd [#allocation8], %s2899
      %s2902 = sshll.u32 [#allocation15], 4
      %s2903 = int_to_ptr.vmem [resolvable:$true] %s2902
      %2905 = dma.vmem_to_hbm [thread:$0]  %s2903, 128, %s12, [#allocation8]
    $region103: #{tpu_custom_call.1} parent=1 // pred_fallthru
      _
    // Predicated region
    $region104: #{tpu_custom_call.1} parent=1 // pred_check
      _
    $region105: #{tpu_custom_call.1} parent=1 // pred_check_branch
      %2907 = sbr.rel (0) target = $region107
    $region106: #{tpu_custom_call.1} parent=1 // pred_region
      %2908 = dma.done [#allocation8], 128
    $region107: #{tpu_custom_call.1} parent=1 // pred_fallthru
      _
    %2909 = vsyncpa [#allocation7], 1
    %2910 = vsyncpa [#allocation10], 1
    %2911 = vsyncpa [#allocation13], 1
    %2912 = vsyncpa [#allocation8], 1
  %2913 = vsyncmov [#allocation5]
  %s2914 = vpop.sfrf %2913
  %p2915 = scmp.eq.s32.totalorder %s2914, 0
  %p2916 = pneg %p2915
  %2918 = shalt.err (%p2916)
  %s2919 = scalar_lea.sflag [#allocation5], 1
  %2920 = vsyncmov %s2919
  %s2921 = vpop.sfrf %2920
  %p2922 = scmp.eq.s32.totalorder %s2921, 0
  %p2923 = pneg %p2922
  %2925 = shalt.err (%p2923)
  %s2926 = scalar_lea.sflag [#allocation5], 2
  %2927 = vsyncmov %s2926
  %s2928 = vpop.sfrf %2927
  %p2929 = scmp.eq.s32.totalorder %s2928, 0
  %p2930 = pneg %p2929
  %2932 = shalt.err (%p2930)

</llo_original>
